<compile_context>
chip_gen: v7x
topology: tpu7x:2x2x1
jax: 0.10.0
libtpu: 0.0.40
codegen_flags: <defaults>
</compile_context>

<pallas_src>
import functools

import jax
import jax.numpy as jnp
from jax.experimental import pallas as pl
from jax.experimental.pallas import tpu as pltpu


def _convlstm_kernel(x_ref, h_ref, c_ref, w_ref, h_out_ref, c_out_ref,
                     pad_scr, col_scr,
                     *, H, W, KH, KW, Cx, Ch):
    """One grid step == one batch element.

    x_ref : (1, H, W, Cx)               input frame (NHWC)
    h_ref : (1, H, W, Ch)               h_cur (NHWC)
    c_ref : (1, H, W, Ch)               c_cur (NHWC)
    w_ref : (KH*KW*(Cx+Ch), 4*Ch)       im2col conv weight, bf16
    h_out_ref, c_out_ref : (1, H, W, Ch)
    pad_scr : VMEM (H+KH-1, W+KW-1, Cx+Ch) f32   zero-padded concat([x, h])
    col_scr : VMEM (H*W, KH*KW*(Cx+Ch)) f32      im2col patch matrix
    """
    HW = H * W
    C_in = Cx + Ch
    ph, pw = KH // 2, KW // 2

    # ---- concat + zero-pad inside VMEM (replaces XLA concat/pad passes) ----
    # Zero every step: scratch is per-TensorCore and uninitialised, and with a
    # parallel batch grid a core may never see program_id == 0, so a
    # "zero-once" pl.when would leave garbage halos on that core.
    pad_scr[...] = jnp.zeros_like(pad_scr)
    pad_scr[ph:ph + H, pw:pw + W, 0:Cx] = x_ref[0].astype(pad_scr.dtype)
    pad_scr[ph:ph + H, pw:pw + W, Cx:C_in] = h_ref[0].astype(pad_scr.dtype)

    # ---- im2col: build the (HW, KH*KW*C_in) patch matrix once ---------------
    # (W is a multiple of 8 in the demo, so the (H,W,C)->(HW,C) merge of the
    #  leading dims is layout-preserving.)
    for kh in range(KH):
        for kw in range(KW):
            t = kh * KW + kw
            col_scr[:, t * C_in:(t + 1) * C_in] = (
                pad_scr[kh:kh + H, kw:kw + W, :].reshape(HW, C_in))

    # ---- single deep-K matmul on the MXU (bf16 operands, f32 accumulate) ---
    acc = jnp.dot(col_scr[...].astype(jnp.bfloat16), w_ref[...],
                  preferred_element_type=jnp.float32)          # (HW, 4*Ch)

    # ---- gates / state update (f32 elementwise; EUP handles sigmoid/tanh) --
    # One N = 4*hidden matmul keeps MXU output-lane utilisation maximal; the
    # per-gate lane slices below are static selects within one lane tile.
    i = jax.nn.sigmoid(acc[:, 0 * Ch:1 * Ch])
    f = jax.nn.sigmoid(acc[:, 1 * Ch:2 * Ch])
    o = jax.nn.sigmoid(acc[:, 2 * Ch:3 * Ch])
    g = jnp.tanh(acc[:, 3 * Ch:4 * Ch])

    c_cur = c_ref[0].reshape(HW, Ch).astype(jnp.float32)
    c_next = f * c_cur + i * g
    h_next = o * jnp.tanh(c_next)

    c_out_ref[0] = c_next.reshape(H, W, Ch).astype(c_out_ref.dtype)
    h_out_ref[0] = h_next.reshape(H, W, Ch).astype(h_out_ref.dtype)


def prepare_conv_weight(weight_oihw, kernel_size):
    """OIHW (4*hidden, C_in, KH, KW) -> im2col (KH*KW*C_in, 4*hidden), bf16.

    Call ONCE outside a recurrent loop and reuse the result every timestep.
    Row ordering is [tap-major (kh, kw), channel-minor] to match the kernel's
    col_scr layout; channel order is [input channels, then hidden channels],
    matching torch.cat([inputs, h_cur], dim=1).
    """
    KH, KW = kernel_size
    four_h, c_in = weight_oihw.shape[0], weight_oihw.shape[1]
    w = jnp.transpose(weight_oihw, (2, 3, 1, 0))          # (KH, KW, C_in, 4h)
    w = w.reshape(KH * KW * c_in, four_h)
    return w.astype(jnp.bfloat16)


def conv_lstm_cell_nhwc(x_nhwc, h_nhwc, c_nhwc, w_col, kernel_size):
    """NHWC-native ConvLSTM cell (use this inside recurrent loops)."""
    KH, KW = kernel_size
    assert KH % 2 == 1 and KW % 2 == 1, (
        "padding = kernel_size // 2 only matches the PyTorch module for odd "
        "kernel sizes")
    B, H, W, Cx = x_nhwc.shape
    Ch = h_nhwc.shape[-1]
    C_in = Cx + Ch
    HW = H * W
    Hp, Wp = H + KH - 1, W + KW - 1
    dtype = h_nhwc.dtype

    kernel = functools.partial(_convlstm_kernel, H=H, W=W, KH=KH, KW=KW,
                               Cx=Cx, Ch=Ch)

    h_next, c_next = pl.pallas_call(
        kernel,
        out_shape=(jax.ShapeDtypeStruct((B, H, W, Ch), dtype),
                   jax.ShapeDtypeStruct((B, H, W, Ch), dtype)),
        grid_spec=pltpu.PrefetchScalarGridSpec(
            num_scalar_prefetch=0,
            grid=(B,),
            in_specs=[
                pl.BlockSpec((1, H, W, Cx), lambda b: (b, 0, 0, 0)),
                pl.BlockSpec((1, H, W, Ch), lambda b: (b, 0, 0, 0)),
                pl.BlockSpec((1, H, W, Ch), lambda b: (b, 0, 0, 0)),
                pl.BlockSpec((KH * KW * C_in, 4 * Ch), lambda b: (0, 0)),
            ],
            out_specs=[
                pl.BlockSpec((1, H, W, Ch), lambda b: (b, 0, 0, 0)),
                pl.BlockSpec((1, H, W, Ch), lambda b: (b, 0, 0, 0)),
            ],
            scratch_shapes=[
                pltpu.VMEM((Hp, Wp, C_in), jnp.float32),
                pltpu.VMEM((HW, KH * KW * C_in), jnp.float32),
            ],
        ),
        # Batch axis is parallel -> sharded across TensorCores on v7x megacore.
        compiler_params=pltpu.CompilerParams(
            dimension_semantics=("parallel",)),
    )(x_nhwc, h_nhwc, c_nhwc, w_col)
    return h_next, c_next


@functools.partial(jax.jit, static_argnums=(4,))
def conv_lstm_cell_pallas(inputs_nchw, h_cur_nchw, c_cur_nchw, weight_oihw,
                          kernel_size):
    """PyTorch-parity wrapper: NCHW in / NCHW out (matches ConvLSTMCell).

    For recurrent use, prefer: prepare_conv_weight(...) once +
    conv_lstm_cell_nhwc(...) per step (no per-step transposes / weight prep).
    """
    x = jnp.transpose(inputs_nchw, (0, 2, 3, 1))
    h = jnp.transpose(h_cur_nchw, (0, 2, 3, 1))
    c = jnp.transpose(c_cur_nchw, (0, 2, 3, 1))
    w_col = prepare_conv_weight(weight_oihw, kernel_size)
    h_n, c_n = conv_lstm_cell_nhwc(x, h, c, w_col, kernel_size)
    return (jnp.transpose(h_n, (0, 3, 1, 2)),
            jnp.transpose(c_n, (0, 3, 1, 2)))


def _reference_jax(inputs, h_cur, c_cur, weight_oihw, kernel_size):
    """Pure-JAX f32 reference (lax.conv) for the correctness check."""
    KH, KW = kernel_size
    pad = ((KH // 2, KH // 2), (KW // 2, KW // 2))
    combined = jnp.concatenate([inputs, h_cur], axis=1)          # NCHW
    conv = jax.lax.conv_general_dilated(
        combined, weight_oihw, window_strides=(1, 1), padding=pad,
        dimension_numbers=("NCHW", "OIHW", "NCHW"))
    cc_i, cc_f, cc_o, cc_g = jnp.split(conv, 4, axis=1)
    i = jax.nn.sigmoid(cc_i)
    f = jax.nn.sigmoid(cc_f)
    o = jax.nn.sigmoid(cc_o)
    g = jnp.tanh(cc_g)
    c_next = f * c_cur + i * g
    h_next = o * jnp.tanh(c_next)
    return h_next, c_next


if __name__ == "__main__":
    # Small deterministic example consistent with the module.
    B, input_dim, hidden_dim = 2, 4, 32
    H = W = 16
    kernel_size = (3, 3)

    key = jax.random.PRNGKey(0)
    k_x, k_h, k_c, k_w = jax.random.split(key, 4)

    inputs = jax.random.normal(k_x, (B, input_dim, H, W), dtype=jnp.float32)
    h_cur = jax.random.normal(k_h, (B, hidden_dim, H, W), dtype=jnp.float32)
    c_cur = jax.random.normal(k_c, (B, hidden_dim, H, W), dtype=jnp.float32)

    # Deterministic conv weight (bias=False in the module):
    # PyTorch shape: (4*hidden_dim, input_dim+hidden_dim, KH, KW)
    C_in = input_dim + hidden_dim
    fan_in = C_in * kernel_size[0] * kernel_size[1]
    bound = 1.0 / (fan_in ** 0.5)
    weight = jax.random.uniform(
        k_w, (4 * hidden_dim, C_in, kernel_size[0], kernel_size[1]),
        minval=-bound, maxval=bound, dtype=jnp.float32)

    h_next, c_next = conv_lstm_cell_pallas(inputs, h_cur, c_cur, weight,
                                           kernel_size)
    jax.block_until_ready((h_next, c_next))

    # Sanity check vs pure-JAX f32 reference. Tolerance is loosened slightly
    # because the kernel feeds bf16 operands to the MXU (f32 accumulation).
    h_ref, c_ref = _reference_jax(inputs, h_cur, c_cur, weight, kernel_size)
    assert h_next.shape == h_ref.shape and c_next.shape == c_ref.shape
    assert jnp.allclose(h_next, h_ref, atol=2e-2, rtol=2e-2), (
        float(jnp.max(jnp.abs(h_next - h_ref))))
    assert jnp.allclose(c_next, c_ref, atol=2e-2, rtol=2e-2), (
        float(jnp.max(jnp.abs(c_next - c_ref))))

    print("KERNEL_OK")
</pallas_src>

<mosaic_0001>
module attributes {stable_mosaic.version = 11 : i64} {
  func.func @_convlstm_kernel(%arg0: i32, %arg1: memref<1x16x16x4xf32, #tpu.memory_space<vmem>>, %arg2: memref<1x16x16x32xf32, #tpu.memory_space<vmem>>, %arg3: memref<1x16x16x32xf32, #tpu.memory_space<vmem>>, %arg4: memref<324x128xbf16, #tpu.memory_space<vmem>>, %arg5: memref<1x16x16x32xf32, #tpu.memory_space<vmem>>, %arg6: memref<1x16x16x32xf32, #tpu.memory_space<vmem>>, %arg7: memref<18x18x36xf32, #tpu.memory_space<vmem>>, %arg8: memref<256x324xf32, #tpu.memory_space<vmem>>) attributes {dimension_semantics = [#tpu.dimension_semantics<parallel>], iteration_bounds = array<i64: 2>, scalar_prefetch = 0 : i64, scratch_operands = 2 : i64, tpu.core_type = #tpu.core_type<tc>, window_params = [{transform_indices = @transform_0, window_bounds = array<i64: 1, 16, 16, 4>}, {transform_indices = @transform_1, window_bounds = array<i64: 1, 16, 16, 32>}, {transform_indices = @transform_2, window_bounds = array<i64: 1, 16, 16, 32>}, {pipeline_mode = #tpu.pipeline_mode<synchronous>, transform_indices = @transform_3, window_bounds = array<i64: 324, 128>}, {transform_indices = @transform_4, window_bounds = array<i64: 1, 16, 16, 32>}, {transform_indices = @transform_5, window_bounds = array<i64: 1, 16, 16, 32>}]} {
    %cst = arith.constant 0.000000e+00 : f32
    %0 = vector.broadcast %cst : f32 to vector<18x18x36xf32>
    %c0 = arith.constant 0 : index
    %c0_0 = arith.constant 0 : index
    %c0_1 = arith.constant 0 : index
    %1 = vector.load %arg7[%c0, %c0_0, %c0_1] : memref<18x18x36xf32, #tpu.memory_space<vmem>>, vector<18x18x36xf32>
    tpu.vector_store %arg7[%c0, %c0_0, %c0_1], %0 {strides = array<i32>} : memref<18x18x36xf32, #tpu.memory_space<vmem>>, vector<18x18x36xf32>,
    %c0_2 = arith.constant 0 : index
    %c0_3 = arith.constant 0 : index
    %c0_4 = arith.constant 0 : index
    %c0_5 = arith.constant 0 : index
    %2 = vector.load %arg1[%c0_2, %c0_3, %c0_4, %c0_5] : memref<1x16x16x4xf32, #tpu.memory_space<vmem>>, vector<1x16x16x4xf32>
    %3 = vector.shape_cast %2 : vector<1x16x16x4xf32> to vector<16x16x4xf32>
    %c1 = arith.constant 1 : index
    %c1_6 = arith.constant 1 : index
    %c0_7 = arith.constant 0 : index
    %4 = vector.load %arg7[%c1, %c1_6, %c0_7] : memref<18x18x36xf32, #tpu.memory_space<vmem>>, vector<16x16x4xf32>
    tpu.vector_store %arg7[%c1, %c1_6, %c0_7], %3 {strides = array<i32>} : memref<18x18x36xf32, #tpu.memory_space<vmem>>, vector<16x16x4xf32>,
    %c0_8 = arith.constant 0 : index
    %c0_9 = arith.constant 0 : index
    %c0_10 = arith.constant 0 : index
    %c0_11 = arith.constant 0 : index
    %5 = vector.load %arg2[%c0_8, %c0_9, %c0_10, %c0_11] : memref<1x16x16x32xf32, #tpu.memory_space<vmem>>, vector<1x16x16x32xf32>
    %6 = vector.shape_cast %5 : vector<1x16x16x32xf32> to vector<16x16x32xf32>
    %c1_12 = arith.constant 1 : index
    %c1_13 = arith.constant 1 : index
    %c4 = arith.constant 4 : index
    %7 = vector.load %arg7[%c1_12, %c1_13, %c4] : memref<18x18x36xf32, #tpu.memory_space<vmem>>, vector<16x16x32xf32>
    tpu.vector_store %arg7[%c1_12, %c1_13, %c4], %6 {strides = array<i32>} : memref<18x18x36xf32, #tpu.memory_space<vmem>>, vector<16x16x32xf32>,
    %c0_14 = arith.constant 0 : index
    %c0_15 = arith.constant 0 : index
    %c0_16 = arith.constant 0 : index
    %8 = vector.load %arg7[%c0_14, %c0_15, %c0_16] : memref<18x18x36xf32, #tpu.memory_space<vmem>>, vector<16x16x36xf32>
    %9 = vector.shape_cast %8 : vector<16x16x36xf32> to vector<256x36xf32>
    %c0_17 = arith.constant 0 : index
    %c0_18 = arith.constant 0 : index
    %10 = vector.load %arg8[%c0_17, %c0_18] : memref<256x324xf32, #tpu.memory_space<vmem>>, vector<256x36xf32>
    tpu.vector_store %arg8[%c0_17, %c0_18], %9 {strides = array<i32>} : memref<256x324xf32, #tpu.memory_space<vmem>>, vector<256x36xf32>,
    %c0_19 = arith.constant 0 : index
    %c1_20 = arith.constant 1 : index
    %c0_21 = arith.constant 0 : index
    %11 = vector.load %arg7[%c0_19, %c1_20, %c0_21] : memref<18x18x36xf32, #tpu.memory_space<vmem>>, vector<16x16x36xf32>
    %12 = vector.shape_cast %11 : vector<16x16x36xf32> to vector<256x36xf32>
    %c0_22 = arith.constant 0 : index
    %c36 = arith.constant 36 : index
    %13 = vector.load %arg8[%c0_22, %c36] : memref<256x324xf32, #tpu.memory_space<vmem>>, vector<256x36xf32>
    tpu.vector_store %arg8[%c0_22, %c36], %12 {strides = array<i32>} : memref<256x324xf32, #tpu.memory_space<vmem>>, vector<256x36xf32>,
    %c0_23 = arith.constant 0 : index
    %c2 = arith.constant 2 : index
    %c0_24 = arith.constant 0 : index
    %14 = vector.load %arg7[%c0_23, %c2, %c0_24] : memref<18x18x36xf32, #tpu.memory_space<vmem>>, vector<16x16x36xf32>
    %15 = vector.shape_cast %14 : vector<16x16x36xf32> to vector<256x36xf32>
    %c0_25 = arith.constant 0 : index
    %c72 = arith.constant 72 : index
    %16 = vector.load %arg8[%c0_25, %c72] : memref<256x324xf32, #tpu.memory_space<vmem>>, vector<256x36xf32>
    tpu.vector_store %arg8[%c0_25, %c72], %15 {strides = array<i32>} : memref<256x324xf32, #tpu.memory_space<vmem>>, vector<256x36xf32>,
    %c1_26 = arith.constant 1 : index
    %c0_27 = arith.constant 0 : index
    %c0_28 = arith.constant 0 : index
    %17 = vector.load %arg7[%c1_26, %c0_27, %c0_28] : memref<18x18x36xf32, #tpu.memory_space<vmem>>, vector<16x16x36xf32>
    %18 = vector.shape_cast %17 : vector<16x16x36xf32> to vector<256x36xf32>
    %c0_29 = arith.constant 0 : index
    %c108 = arith.constant 108 : index
    %19 = vector.load %arg8[%c0_29, %c108] : memref<256x324xf32, #tpu.memory_space<vmem>>, vector<256x36xf32>
    tpu.vector_store %arg8[%c0_29, %c108], %18 {strides = array<i32>} : memref<256x324xf32, #tpu.memory_space<vmem>>, vector<256x36xf32>,
    %c1_30 = arith.constant 1 : index
    %c1_31 = arith.constant 1 : index
    %c0_32 = arith.constant 0 : index
    %20 = vector.load %arg7[%c1_30, %c1_31, %c0_32] : memref<18x18x36xf32, #tpu.memory_space<vmem>>, vector<16x16x36xf32>
    %21 = vector.shape_cast %20 : vector<16x16x36xf32> to vector<256x36xf32>
    %c0_33 = arith.constant 0 : index
    %c144 = arith.constant 144 : index
    %22 = vector.load %arg8[%c0_33, %c144] : memref<256x324xf32, #tpu.memory_space<vmem>>, vector<256x36xf32>
    tpu.vector_store %arg8[%c0_33, %c144], %21 {strides = array<i32>} : memref<256x324xf32, #tpu.memory_space<vmem>>, vector<256x36xf32>,
    %c1_34 = arith.constant 1 : index
    %c2_35 = arith.constant 2 : index
    %c0_36 = arith.constant 0 : index
    %23 = vector.load %arg7[%c1_34, %c2_35, %c0_36] : memref<18x18x36xf32, #tpu.memory_space<vmem>>, vector<16x16x36xf32>
    %24 = vector.shape_cast %23 : vector<16x16x36xf32> to vector<256x36xf32>
    %c0_37 = arith.constant 0 : index
    %c180 = arith.constant 180 : index
    %25 = vector.load %arg8[%c0_37, %c180] : memref<256x324xf32, #tpu.memory_space<vmem>>, vector<256x36xf32>
    tpu.vector_store %arg8[%c0_37, %c180], %24 {strides = array<i32>} : memref<256x324xf32, #tpu.memory_space<vmem>>, vector<256x36xf32>,
    %c2_38 = arith.constant 2 : index
    %c0_39 = arith.constant 0 : index
    %c0_40 = arith.constant 0 : index
    %26 = vector.load %arg7[%c2_38, %c0_39, %c0_40] : memref<18x18x36xf32, #tpu.memory_space<vmem>>, vector<16x16x36xf32>
    %27 = vector.shape_cast %26 : vector<16x16x36xf32> to vector<256x36xf32>
    %c0_41 = arith.constant 0 : index
    %c216 = arith.constant 216 : index
    %28 = vector.load %arg8[%c0_41, %c216] : memref<256x324xf32, #tpu.memory_space<vmem>>, vector<256x36xf32>
    tpu.vector_store %arg8[%c0_41, %c216], %27 {strides = array<i32>} : memref<256x324xf32, #tpu.memory_space<vmem>>, vector<256x36xf32>,
    %c2_42 = arith.constant 2 : index
    %c1_43 = arith.constant 1 : index
    %c0_44 = arith.constant 0 : index
    %29 = vector.load %arg7[%c2_42, %c1_43, %c0_44] : memref<18x18x36xf32, #tpu.memory_space<vmem>>, vector<16x16x36xf32>
    %30 = vector.shape_cast %29 : vector<16x16x36xf32> to vector<256x36xf32>
    %c0_45 = arith.constant 0 : index
    %c252 = arith.constant 252 : index
    %31 = vector.load %arg8[%c0_45, %c252] : memref<256x324xf32, #tpu.memory_space<vmem>>, vector<256x36xf32>
    tpu.vector_store %arg8[%c0_45, %c252], %30 {strides = array<i32>} : memref<256x324xf32, #tpu.memory_space<vmem>>, vector<256x36xf32>,
    %c2_46 = arith.constant 2 : index
    %c2_47 = arith.constant 2 : index
    %c0_48 = arith.constant 0 : index
    %32 = vector.load %arg7[%c2_46, %c2_47, %c0_48] : memref<18x18x36xf32, #tpu.memory_space<vmem>>, vector<16x16x36xf32>
    %33 = vector.shape_cast %32 : vector<16x16x36xf32> to vector<256x36xf32>
    %c0_49 = arith.constant 0 : index
    %c288 = arith.constant 288 : index
    %34 = vector.load %arg8[%c0_49, %c288] : memref<256x324xf32, #tpu.memory_space<vmem>>, vector<256x36xf32>
    tpu.vector_store %arg8[%c0_49, %c288], %33 {strides = array<i32>} : memref<256x324xf32, #tpu.memory_space<vmem>>, vector<256x36xf32>,
    %c0_50 = arith.constant 0 : index
    %c0_51 = arith.constant 0 : index
    %35 = vector.load %arg8[%c0_50, %c0_51] : memref<256x324xf32, #tpu.memory_space<vmem>>, vector<256x324xf32>
    %36 = arith.truncf %35 : vector<256x324xf32> to vector<256x324xbf16>
    %c0_52 = arith.constant 0 : index
    %c0_53 = arith.constant 0 : index
    %37 = vector.load %arg4[%c0_52, %c0_53] : memref<324x128xbf16, #tpu.memory_space<vmem>>, vector<324x128xbf16>
    %cst_54 = arith.constant dense<0.000000e+00> : vector<256x128xf32>
    %38 = tpu.matmul %36, %37, %cst_54 {dimension_numbers = #tpu.dot_dimension_numbers<[1], [0], [0], [1], [0, 0, 1, 1], [], []>} : vector<256x324xbf16>, vector<324x128xbf16>, vector<256x128xf32> -> vector<256x128xf32>
    %39 = vector.extract_strided_slice %38 {offsets = [0, 0], sizes = [256, 32], strides = [1, 1]} : vector<256x128xf32> to vector<256x32xf32>
    %40 = arith.negf %39 : vector<256x32xf32>
    %41 = math.exp %40 : vector<256x32xf32>
    %cst_55 = arith.constant 1.000000e+00 : f32
    %42 = vector.broadcast %cst_55 : f32 to vector<256x32xf32>
    %43 = arith.addf %42, %41 : vector<256x32xf32>
    %44 = arith.divf %42, %43 : vector<256x32xf32>
    %45 = vector.extract_strided_slice %38 {offsets = [0, 32], sizes = [256, 32], strides = [1, 1]} : vector<256x128xf32> to vector<256x32xf32>
    %46 = arith.negf %45 : vector<256x32xf32>
    %47 = math.exp %46 : vector<256x32xf32>
    %cst_56 = arith.constant 1.000000e+00 : f32
    %48 = vector.broadcast %cst_56 : f32 to vector<256x32xf32>
    %49 = arith.addf %48, %47 : vector<256x32xf32>
    %50 = arith.divf %48, %49 : vector<256x32xf32>
    %51 = vector.extract_strided_slice %38 {offsets = [0, 64], sizes = [256, 32], strides = [1, 1]} : vector<256x128xf32> to vector<256x32xf32>
    %52 = arith.negf %51 : vector<256x32xf32>
    %53 = math.exp %52 : vector<256x32xf32>
    %cst_57 = arith.constant 1.000000e+00 : f32
    %54 = vector.broadcast %cst_57 : f32 to vector<256x32xf32>
    %55 = arith.addf %54, %53 : vector<256x32xf32>
    %56 = arith.divf %54, %55 : vector<256x32xf32>
    %57 = vector.extract_strided_slice %38 {offsets = [0, 96], sizes = [256, 32], strides = [1, 1]} : vector<256x128xf32> to vector<256x32xf32>
    %58 = math.tanh %57 : vector<256x32xf32>
    %c0_58 = arith.constant 0 : index
    %c0_59 = arith.constant 0 : index
    %c0_60 = arith.constant 0 : index
    %c0_61 = arith.constant 0 : index
    %59 = vector.load %arg3[%c0_58, %c0_59, %c0_60, %c0_61] : memref<1x16x16x32xf32, #tpu.memory_space<vmem>>, vector<1x16x16x32xf32>
    %60 = vector.shape_cast %59 : vector<1x16x16x32xf32> to vector<16x16x32xf32>
    %61 = vector.shape_cast %60 : vector<16x16x32xf32> to vector<256x32xf32>
    %62 = arith.mulf %50, %61 : vector<256x32xf32>
    %63 = arith.mulf %44, %58 : vector<256x32xf32>
    %64 = arith.addf %62, %63 : vector<256x32xf32>
    %65 = math.tanh %64 : vector<256x32xf32>
    %66 = arith.mulf %56, %65 : vector<256x32xf32>
    %67 = vector.shape_cast %64 : vector<256x32xf32> to vector<16x16x32xf32>
    %c0_62 = arith.constant 0 : index
    %c0_63 = arith.constant 0 : index
    %c0_64 = arith.constant 0 : index
    %c0_65 = arith.constant 0 : index
    %68 = vector.load %arg6[%c0_62, %c0_63, %c0_64, %c0_65] : memref<1x16x16x32xf32, #tpu.memory_space<vmem>>, vector<1x16x16x32xf32>
    %69 = vector.shape_cast %68 : vector<1x16x16x32xf32> to vector<16x16x32xf32>
    %70 = vector.shape_cast %67 : vector<16x16x32xf32> to vector<1x16x16x32xf32>
    tpu.vector_store %arg6[%c0_62, %c0_63, %c0_64, %c0_65], %70 {strides = array<i32>} : memref<1x16x16x32xf32, #tpu.memory_space<vmem>>, vector<1x16x16x32xf32>,
    %71 = vector.shape_cast %66 : vector<256x32xf32> to vector<16x16x32xf32>
    %c0_66 = arith.constant 0 : index
    %c0_67 = arith.constant 0 : index
    %c0_68 = arith.constant 0 : index
    %c0_69 = arith.constant 0 : index
    %72 = vector.load %arg5[%c0_66, %c0_67, %c0_68, %c0_69] : memref<1x16x16x32xf32, #tpu.memory_space<vmem>>, vector<1x16x16x32xf32>
    %73 = vector.shape_cast %72 : vector<1x16x16x32xf32> to vector<16x16x32xf32>
    %74 = vector.shape_cast %71 : vector<16x16x32xf32> to vector<1x16x16x32xf32>
    tpu.vector_store %arg5[%c0_66, %c0_67, %c0_68, %c0_69], %74 {strides = array<i32>} : memref<1x16x16x32xf32, #tpu.memory_space<vmem>>, vector<1x16x16x32xf32>,
    return
  }
  func.func @transform_0(%arg0: i32) -> (i32, i32, i32, i32) {
    %c0_i32 = arith.constant 0 : i32
    %c0_i32_0 = arith.constant 0 : i32
    %c0_i32_1 = arith.constant 0 : i32
    %c0_i32_2 = arith.constant 0 : i32
    return %arg0, %c0_i32, %c0_i32_0, %c0_i32_1 : i32, i32, i32, i32
  }
  func.func @transform_1(%arg0: i32) -> (i32, i32, i32, i32) {
    %c0_i32 = arith.constant 0 : i32
    %c0_i32_0 = arith.constant 0 : i32
    %c0_i32_1 = arith.constant 0 : i32
    %c0_i32_2 = arith.constant 0 : i32
    return %arg0, %c0_i32, %c0_i32_0, %c0_i32_1 : i32, i32, i32, i32
  }
  func.func @transform_2(%arg0: i32) -> (i32, i32, i32, i32) {
    %c0_i32 = arith.constant 0 : i32
    %c0_i32_0 = arith.constant 0 : i32
    %c0_i32_1 = arith.constant 0 : i32
    %c0_i32_2 = arith.constant 0 : i32
    return %arg0, %c0_i32, %c0_i32_0, %c0_i32_1 : i32, i32, i32, i32
  }
  func.func @transform_3(%arg0: i32) -> (i32, i32) {
    %c0_i32 = arith.constant 0 : i32
    %c0_i32_0 = arith.constant 0 : i32
    %c0_i32_1 = arith.constant 0 : i32
    return %c0_i32, %c0_i32_0 : i32, i32
  }
  func.func @transform_4(%arg0: i32) -> (i32, i32, i32, i32) {
    %c0_i32 = arith.constant 0 : i32
    %c0_i32_0 = arith.constant 0 : i32
    %c0_i32_1 = arith.constant 0 : i32
    %c0_i32_2 = arith.constant 0 : i32
    return %arg0, %c0_i32, %c0_i32_0, %c0_i32_1 : i32, i32, i32, i32
  }
  func.func @transform_5(%arg0: i32) -> (i32, i32, i32, i32) {
    %c0_i32 = arith.constant 0 : i32
    %c0_i32_0 = arith.constant 0 : i32
    %c0_i32_1 = arith.constant 0 : i32
    %c0_i32_2 = arith.constant 0 : i32
    return %arg0, %c0_i32, %c0_i32_0, %c0_i32_1 : i32, i32, i32, i32
  }
}

</mosaic_0001>

<llo_original>
// kernel: conv_lstm_cell_pallas.1
$region0: #{conv_lstm_cell_pallas.1}
  #allocation0 [shape = 'u32[]', space=smem, size = 0x4, offset = 0x4, fixed_abs, tag = 'smem constant byte address 0x4 - core index']
  #allocation1 [shape = 'u32[144,128]{1,0:T(1,128)}', space=vmem, size = 0x12000, scoped, tag = 'internal scratch']
  #allocation2 [shape = 'f32[18,18,36]{2,1,0:T(8,128)}', space=vmem, size = 0x36000, scoped, tag = 'scratch operand']
  #allocation3 [shape = 'f32[256,324]{1,0:T(8,128)}', space=vmem, size = 0x60000, scoped, tag = 'scratch operand']
  %s0 = inlined_call_operand.vmem [shape: f32[2,16,16,4], index: 0, kind: input, shape index: {}]
  %s1 = inlined_call_operand.vmem [shape: f32[2,16,16,32], index: 1, kind: input, shape index: {}]
  %s2 = inlined_call_operand.vmem [shape: f32[2,16,16,32], index: 2, kind: input, shape index: {}]
  %s3 = inlined_call_operand.vmem [shape: bf16[324,128], index: 3, kind: input, shape index: {}]
  %s4 = inlined_call_operand.hbm [shape: f32[2,16,16,32], index: 4, kind: output, shape index: {0}]
  %s5 = inlined_call_operand.hbm [shape: f32[2,16,16,32], index: 5, kind: output, shape index: {1}]
  %6 = xla_tuple %s4, %s5
  %s7 = sld [smem:[#allocation0]]
  $region57: #{conv_lstm_cell_pallas.1} parent=0
    _
  %s9 = ssub.s32 1, %s7
  %s10 = scalar_select 0, %s9, %s7
  $region1: #{conv_lstm_cell_pallas.1} parent=0
    #allocation4 [shape = 'u8[262144]{0}', space=vmem, size = 0x40000, scoped, tag = 'output window, operand 0']
    #allocation5 [shape = 's32[2]{0}', space=sflag, size = 0x8, scoped, tag = 'scoped memory for conv_lstm_cell_pallas.1']
    #allocation6 [shape = 'u8[262144]{0}', space=vmem, size = 0x40000, scoped, tag = 'output window, operand 1']
    #allocation7 [shape = 's32[2]{0}', space=sflag, size = 0x8, scoped, tag = 'scoped memory for conv_lstm_cell_pallas.1']
    %11 = vsyncpa [#allocation5], 0
    %s12 = scalar_lea.sflag [#allocation5], 1
    %13 = vsyncpa %s12, 0
    %14 = vsyncpa [#allocation7], 0
    %s15 = scalar_lea.sflag [#allocation7], 1
    %16 = vsyncpa %s15, 0
    loop: start=0, step=1, limit=4
    $region2: #{conv_lstm_cell_pallas.1} parent=1 // loop_pre_header
      _
    $region3: #{conv_lstm_cell_pallas.1} parent=1 // loop_header
      %s18 = sphi 0, %s22
      %p19 = scmp.ge.s32.totalorder %s18, 4
      %s28 = sphi 0, %s30
      %s31 = sphi 0, %s28
      %s32 = sphi 0, %s31
      %s48 = sphi 0, %s32
      %s54 = sphi 0, %s56
      %s57 = sphi 0, %s54
      %s58 = sphi 0, %s57
      %s74 = sphi 0, %s58
      %s80 = sphi 0, %s82
      %s83 = sphi 0, %s80
      %s84 = sphi 0, %s83
      %s100 = sphi 0, %s84
      %s104 = sphi 0, %s104
      %s106 = sphi 0, %s104
      %s107 = sphi 0, %s106
      %s121 = sphi 0, %s107
      %s127 = sphi 0, %s129
      %s130 = sphi 0, %s127
      %s131 = sphi 0, %s130
      %s147 = sphi 0, %s131
      %s153 = sphi 0, %s155
      %s156 = sphi 0, %s153
      %s157 = sphi 0, %s156
      %s173 = sphi 0, %s157
    $region4: #{conv_lstm_cell_pallas.1} parent=1 // loop_header_branch
      %21 = sbr.rel (%p19) target = $region8
    $region5: #{conv_lstm_cell_pallas.1} parent=1 // loop_body
      %s23 = ssub.s32 %s18, 1
      %s24 = ssub.s32 %s18, 2
      %s25 = sadd.s32 %s18, 1
      %s26 = ssub.s32 %s18, %s25
      %p27 = scmp.eq.s32.totalorder %s26, 0
      %s29 = sadd.s32 %s28, 1
      %s30 = scalar_select %p27, %s28, %s29
      %p33 = pneg %p27
      %p34 = scmp.eq.s32.totalorder %s18, 1
      %p35 = por %p33, %p34
      %p36 = scmp.ne.s32.totalorder %s28, %s31
      %p37 = scmp.eq.s32.totalorder %s18, 0
      %p38 = por %p36, %p37
      %p39 = scmp.ne.s32.totalorder %s28, %s31
      %p40 = scmp.eq.s32.totalorder %s23, 1
      %p41 = por %p39, %p40
      %p42 = scmp.ne.s32.totalorder %s31, %s32
      %p43 = scmp.eq.s32.totalorder %s23, 0
      %p44 = por %p42, %p43
      %p45 = scmp.ne.s32.totalorder %s31, %s32
      %p46 = scmp.eq.s32.totalorder %s24, 1
      %p47 = por %p45, %p46
      %p49 = scmp.ne.s32.totalorder %s32, %s48
      %p50 = scmp.eq.s32.totalorder %s24, 0
      %p51 = por %p49, %p50
      %s52 = ssub.s32 %s18, %s25
      %p53 = scmp.eq.s32.totalorder %s52, 0
      %s55 = sadd.s32 %s54, 1
      %s56 = scalar_select %p53, %s54, %s55
      %p59 = pneg %p53
      %p60 = scmp.eq.s32.totalorder %s18, 1
      %p61 = por %p59, %p60
      %p62 = scmp.ne.s32.totalorder %s54, %s57
      %p63 = scmp.eq.s32.totalorder %s18, 0
      %p64 = por %p62, %p63
      %p65 = scmp.ne.s32.totalorder %s54, %s57
      %p66 = scmp.eq.s32.totalorder %s23, 1
      %p67 = por %p65, %p66
      %p68 = scmp.ne.s32.totalorder %s57, %s58
      %p69 = scmp.eq.s32.totalorder %s23, 0
      %p70 = por %p68, %p69
      %p71 = scmp.ne.s32.totalorder %s57, %s58
      %p72 = scmp.eq.s32.totalorder %s24, 1
      %p73 = por %p71, %p72
      %p75 = scmp.ne.s32.totalorder %s58, %s74
      %p76 = scmp.eq.s32.totalorder %s24, 0
      %p77 = por %p75, %p76
      %s78 = ssub.s32 %s18, %s25
      %p79 = scmp.eq.s32.totalorder %s78, 0
      %s81 = sadd.s32 %s80, 1
      %s82 = scalar_select %p79, %s80, %s81
      %p85 = pneg %p79
      %p86 = scmp.eq.s32.totalorder %s18, 1
      %p87 = por %p85, %p86
      %p88 = scmp.ne.s32.totalorder %s80, %s83
      %p89 = scmp.eq.s32.totalorder %s18, 0
      %p90 = por %p88, %p89
      %p91 = scmp.ne.s32.totalorder %s80, %s83
      %p92 = scmp.eq.s32.totalorder %s23, 1
      %p93 = por %p91, %p92
      %p94 = scmp.ne.s32.totalorder %s83, %s84
      %p95 = scmp.eq.s32.totalorder %s23, 0
      %p96 = por %p94, %p95
      %p97 = scmp.ne.s32.totalorder %s83, %s84
      %p98 = scmp.eq.s32.totalorder %s24, 1
      %p99 = por %p97, %p98
      %p101 = scmp.ne.s32.totalorder %s84, %s100
      %p102 = scmp.eq.s32.totalorder %s24, 0
      %p103 = por %p101, %p102
      %s105 = sadd.s32 %s104, 1
      %p108 = scmp.eq.s32.totalorder %s18, 1
      %p109 = scmp.ne.s32.totalorder %s104, %s106
      %p110 = scmp.eq.s32.totalorder %s18, 0
      %p111 = por %p109, %p110
      %p112 = scmp.ne.s32.totalorder %s104, %s106
      %p113 = scmp.eq.s32.totalorder %s23, 1
      %p114 = por %p112, %p113
      %p115 = scmp.ne.s32.totalorder %s106, %s107
      %p116 = scmp.eq.s32.totalorder %s23, 0
      %p117 = por %p115, %p116
      %p118 = scmp.ne.s32.totalorder %s106, %s107
      %p119 = scmp.eq.s32.totalorder %s24, 1
      %p120 = por %p118, %p119
      %p122 = scmp.ne.s32.totalorder %s107, %s121
      %p123 = scmp.eq.s32.totalorder %s24, 0
      %p124 = por %p122, %p123
      %s125 = ssub.s32 %s18, %s25
      %p126 = scmp.eq.s32.totalorder %s125, 0
      %s128 = sadd.s32 %s127, 1
      %s129 = scalar_select %p126, %s127, %s128
      %p132 = pneg %p126
      %p133 = scmp.eq.s32.totalorder %s18, 1
      %p134 = por %p132, %p133
      %p135 = scmp.ne.s32.totalorder %s127, %s130
      %p136 = scmp.eq.s32.totalorder %s18, 0
      %p137 = por %p135, %p136
      %p138 = scmp.ne.s32.totalorder %s127, %s130
      %p139 = scmp.eq.s32.totalorder %s23, 1
      %p140 = por %p138, %p139
      %p141 = scmp.ne.s32.totalorder %s130, %s131
      %p142 = scmp.eq.s32.totalorder %s23, 0
      %p143 = por %p141, %p142
      %p144 = scmp.ne.s32.totalorder %s130, %s131
      %p145 = scmp.eq.s32.totalorder %s24, 1
      %p146 = por %p144, %p145
      %p148 = scmp.ne.s32.totalorder %s131, %s147
      %p149 = scmp.eq.s32.totalorder %s24, 0
      %p150 = por %p148, %p149
      %s151 = ssub.s32 %s18, %s25
      %p152 = scmp.eq.s32.totalorder %s151, 0
      %s154 = sadd.s32 %s153, 1
      %s155 = scalar_select %p152, %s153, %s154
      %p158 = pneg %p152
      %p159 = scmp.eq.s32.totalorder %s18, 1
      %p160 = por %p158, %p159
      %p161 = scmp.ne.s32.totalorder %s153, %s156
      %p162 = scmp.eq.s32.totalorder %s18, 0
      %p163 = por %p161, %p162
      %p164 = scmp.ne.s32.totalorder %s153, %s156
      %p165 = scmp.eq.s32.totalorder %s23, 1
      %p166 = por %p164, %p165
      %p167 = scmp.ne.s32.totalorder %s156, %s157
      %p168 = scmp.eq.s32.totalorder %s23, 0
      %p169 = por %p167, %p168
      %p170 = scmp.ne.s32.totalorder %s156, %s157
      %p171 = scmp.eq.s32.totalorder %s24, 1
      %p172 = por %p170, %p171
      %p174 = scmp.ne.s32.totalorder %s157, %s173
      %p175 = scmp.eq.s32.totalorder %s24, 0
      %p176 = por %p174, %p175
      %p177 = scmp.le.s32.totalorder 1, %s18
      %p178 = scmp.lt.s32.totalorder %s18, 3
      %p179 = pnand %p177, %p178
      %p180 = pneg %p179
      // Predicated region
      $region9: #{conv_lstm_cell_pallas.1} parent=5 // pred_check
        _
      $region10: #{conv_lstm_cell_pallas.1} parent=5 // pred_check_branch
        %182 = sbr.rel (%p179) target = $region12
      $region11: #{conv_lstm_cell_pallas.1} parent=5 // pred_region
        %s183 = ssub.s32 %s18, 1
        // Predicated region
        $region13: #{conv_lstm_cell_pallas.1} parent=11 // pred_check
          %p184 = pneg %p117
        $region14: #{conv_lstm_cell_pallas.1} parent=11 // pred_check_branch
          %186 = sbr.rel (%p184) target = $region16
        $region15: #{conv_lstm_cell_pallas.1} parent=11 // pred_region
          _
        $region16: #{conv_lstm_cell_pallas.1} parent=11 // pred_fallthru
          _
      $region12: #{conv_lstm_cell_pallas.1} parent=5 // pred_fallthru
        _
      %p187 = scmp.lt.s32.totalorder %s18, 2
      // Predicated region
      $region17: #{conv_lstm_cell_pallas.1} parent=5 // pred_check
        %p188 = pneg %p187
      $region18: #{conv_lstm_cell_pallas.1} parent=5 // pred_check_branch
        %190 = sbr.rel (%p188) target = $region20
      $region19: #{conv_lstm_cell_pallas.1} parent=5 // pred_region
        // Predicated region
        $region21: #{conv_lstm_cell_pallas.1} parent=19 // pred_check
          %p191 = pneg %p38
        $region22: #{conv_lstm_cell_pallas.1} parent=19 // pred_check_branch
          %193 = sbr.rel (%p191) target = $region24
        $region23: #{conv_lstm_cell_pallas.1} parent=19 // pred_region
          %p194 = scmp.lt.s32.totalorder %s18, 1
          %s195 = scalar_select %p194, %s18, 1
          %s196 = smul.addr %s195, 32
          %s197 = smul.addr %s196, 8
          %s198 = scalar_lea.vmem %s0, %s197
        $region24: #{conv_lstm_cell_pallas.1} parent=19 // pred_fallthru
          _
        // Predicated region
        $region25: #{conv_lstm_cell_pallas.1} parent=19 // pred_check
          %p199 = pneg %p64
        $region26: #{conv_lstm_cell_pallas.1} parent=19 // pred_check_branch
          %201 = sbr.rel (%p199) target = $region28
        $region27: #{conv_lstm_cell_pallas.1} parent=19 // pred_region
          %p202 = scmp.lt.s32.totalorder %s18, 1
          %s203 = scalar_select %p202, %s18, 1
          %s204 = smul.addr %s203, 32
          %s205 = smul.addr %s204, 8
          %s206 = scalar_lea.vmem %s1, %s205
        $region28: #{conv_lstm_cell_pallas.1} parent=19 // pred_fallthru
          _
        // Predicated region
        $region29: #{conv_lstm_cell_pallas.1} parent=19 // pred_check
          %p207 = pneg %p90
        $region30: #{conv_lstm_cell_pallas.1} parent=19 // pred_check_branch
          %209 = sbr.rel (%p207) target = $region32
        $region31: #{conv_lstm_cell_pallas.1} parent=19 // pred_region
          %p210 = scmp.lt.s32.totalorder %s18, 1
          %s211 = scalar_select %p210, %s18, 1
          %s212 = smul.addr %s211, 32
          %s213 = smul.addr %s212, 8
          %s214 = scalar_lea.vmem %s2, %s213
        $region32: #{conv_lstm_cell_pallas.1} parent=19 // pred_fallthru
          _
      $region20: #{conv_lstm_cell_pallas.1} parent=5 // pred_fallthru
        _
      %p215 = scmp.le.s32.totalorder 1, %s18
      %p216 = scmp.lt.s32.totalorder %s18, 3
      %p217 = pnand %p215, %p216
      %p218 = pneg %p217
      // Predicated region
      $region33: #{conv_lstm_cell_pallas.1} parent=5 // pred_check
        _
      $region34: #{conv_lstm_cell_pallas.1} parent=5 // pred_check_branch
        %220 = sbr.rel (%p217) target = $region36
      $region35: #{conv_lstm_cell_pallas.1} parent=5 // pred_region
        %s221 = ssub.s32 %s18, 1
        %p222 = scmp.lt.s32.totalorder %s23, 1
        %s223 = scalar_select %p222, %s23, 1
        %s224 = smul.addr %s223, 32
        %s225 = smul.addr %s224, 8
        %s226 = scalar_lea.vmem %s0, %s225
        %p227 = pneg %p44
        %p228 = pneg %p41
        %p229 = scmp.lt.s32.totalorder %s23, 1
        %s230 = scalar_select %p229, %s23, 1
        %s231 = smul.addr %s230, 32
        %s232 = smul.addr %s231, 8
        %s233 = scalar_lea.vmem %s1, %s232
        %p234 = pneg %p70
        %p235 = pneg %p67
        %p236 = scmp.lt.s32.totalorder %s23, 1
        %s237 = scalar_select %p236, %s23, 1
        %s238 = smul.addr %s237, 32
        %s239 = smul.addr %s238, 8
        %s240 = scalar_lea.vmem %s2, %s239
        %p241 = pneg %p96
        %p242 = pneg %p93
        %p243 = pneg %p117
        %p244 = pneg %p114
        %p245 = pneg %p143
        %p246 = pneg %p140
        %s247 = sand.u32 %s130, 1
        %s248 = scalar_lea.sflag [#allocation5], %s247
        %s249 = sand.u32 %s130, 1
        %s250 = smul.addr %s249, 256
        %s251 = scalar_lea.vmem [#allocation4], %s250
        %p252 = pneg %p169
        %p253 = pneg %p166
        %s254 = sand.u32 %s156, 1
        %s255 = scalar_lea.sflag [#allocation7], %s254
        %s256 = sand.u32 %s156, 1
        %s257 = smul.addr %s256, 256
        %s258 = scalar_lea.vmem [#allocation6], %s257
        %p259 = scmp.lt.s32.totalorder %s23, 1
        %s260 = scalar_select %p259, %s23, 1
        %s261 = smul.addr %s260, 32
        %s262 = smul.addr %s261, 8
        %s263 = scalar_lea.vmem %s0, %s262
        %p264 = scmp.lt.s32.totalorder %s23, 1
        %s265 = scalar_select %p264, %s23, 1
        %s266 = smul.addr %s265, 32
        %s267 = smul.addr %s266, 8
        %s268 = scalar_lea.vmem %s1, %s267
        %p269 = scmp.lt.s32.totalorder %s23, 1
        %s270 = scalar_select %p269, %s23, 1
        %s271 = smul.addr %s270, 32
        %s272 = smul.addr %s271, 8
        %s273 = scalar_lea.vmem %s2, %s272
        %vm275 = vcmask 293888
        %276 = vst.msk [vmem:[#allocation2] sm:$0xff] %vm275, 0.0
        %277 = vst.msk [vmem:[#allocation2 + $0x8] sm:$0xff] %vm275, 0.0
        %vm278 = vcmask 287744
        %279 = vst.msk [vmem:[#allocation2 + $0x10] sm:$0x3] %vm278, 0.0
        %280 = vst.msk [vmem:[#allocation2 + $0x18] sm:$0xff] %vm275, 0.0
        %281 = vst.msk [vmem:[#allocation2 + $0x20] sm:$0xff] %vm275, 0.0
        %282 = vst.msk [vmem:[#allocation2 + $0x28] sm:$0x3] %vm278, 0.0
        %283 = vst.msk [vmem:[#allocation2 + $0x30] sm:$0xff] %vm275, 0.0
        %284 = vst.msk [vmem:[#allocation2 + $0x38] sm:$0xff] %vm275, 0.0
        %285 = vst.msk [vmem:[#allocation2 + $0x40] sm:$0x3] %vm278, 0.0
        %286 = vst.msk [vmem:[#allocation2 + $0x48] sm:$0xff] %vm275, 0.0
        %287 = vst.msk [vmem:[#allocation2 + $0x50] sm:$0xff] %vm275, 0.0
        %288 = vst.msk [vmem:[#allocation2 + $0x58] sm:$0x3] %vm278, 0.0
        %289 = vst.msk [vmem:[#allocation2 + $0x60] sm:$0xff] %vm275, 0.0
        %290 = vst.msk [vmem:[#allocation2 + $0x68] sm:$0xff] %vm275, 0.0
        %291 = vst.msk [vmem:[#allocation2 + $0x70] sm:$0x3] %vm278, 0.0
        %292 = vst.msk [vmem:[#allocation2 + $0x78] sm:$0xff] %vm275, 0.0
        %293 = vst.msk [vmem:[#allocation2 + $0x80] sm:$0xff] %vm275, 0.0
        %294 = vst.msk [vmem:[#allocation2 + $0x88] sm:$0x3] %vm278, 0.0
        %295 = vst.msk [vmem:[#allocation2 + $0x90] sm:$0xff] %vm275, 0.0
        %296 = vst.msk [vmem:[#allocation2 + $0x98] sm:$0xff] %vm275, 0.0
        %297 = vst.msk [vmem:[#allocation2 + $0xa0] sm:$0x3] %vm278, 0.0
        %298 = vst.msk [vmem:[#allocation2 + $0xa8] sm:$0xff] %vm275, 0.0
        %299 = vst.msk [vmem:[#allocation2 + $0xb0] sm:$0xff] %vm275, 0.0
        %300 = vst.msk [vmem:[#allocation2 + $0xb8] sm:$0x3] %vm278, 0.0
        %301 = vst.msk [vmem:[#allocation2 + $0xc0] sm:$0xff] %vm275, 0.0
        %302 = vst.msk [vmem:[#allocation2 + $0xc8] sm:$0xff] %vm275, 0.0
        %303 = vst.msk [vmem:[#allocation2 + $0xd0] sm:$0x3] %vm278, 0.0
        %304 = vst.msk [vmem:[#allocation2 + $0xd8] sm:$0xff] %vm275, 0.0
        %305 = vst.msk [vmem:[#allocation2 + $0xe0] sm:$0xff] %vm275, 0.0
        %306 = vst.msk [vmem:[#allocation2 + $0xe8] sm:$0x3] %vm278, 0.0
        %307 = vst.msk [vmem:[#allocation2 + $0xf0] sm:$0xff] %vm275, 0.0
        %308 = vst.msk [vmem:[#allocation2 + $0xf8] sm:$0xff] %vm275, 0.0
        %309 = vst.msk [vmem:[#allocation2 + $0x100] sm:$0x3] %vm278, 0.0
        %310 = vst.msk [vmem:[#allocation2 + $0x108] sm:$0xff] %vm275, 0.0
        %311 = vst.msk [vmem:[#allocation2 + $0x110] sm:$0xff] %vm275, 0.0
        %312 = vst.msk [vmem:[#allocation2 + $0x118] sm:$0x3] %vm278, 0.0
        %313 = vst.msk [vmem:[#allocation2 + $0x120] sm:$0xff] %vm275, 0.0
        %314 = vst.msk [vmem:[#allocation2 + $0x128] sm:$0xff] %vm275, 0.0
        %315 = vst.msk [vmem:[#allocation2 + $0x130] sm:$0x3] %vm278, 0.0
        %316 = vst.msk [vmem:[#allocation2 + $0x138] sm:$0xff] %vm275, 0.0
        %317 = vst.msk [vmem:[#allocation2 + $0x140] sm:$0xff] %vm275, 0.0
        %318 = vst.msk [vmem:[#allocation2 + $0x148] sm:$0x3] %vm278, 0.0
        %319 = vst.msk [vmem:[#allocation2 + $0x150] sm:$0xff] %vm275, 0.0
        %320 = vst.msk [vmem:[#allocation2 + $0x158] sm:$0xff] %vm275, 0.0
        %321 = vst.msk [vmem:[#allocation2 + $0x160] sm:$0x3] %vm278, 0.0
        %322 = vst.msk [vmem:[#allocation2 + $0x168] sm:$0xff] %vm275, 0.0
        %323 = vst.msk [vmem:[#allocation2 + $0x170] sm:$0xff] %vm275, 0.0
        %324 = vst.msk [vmem:[#allocation2 + $0x178] sm:$0x3] %vm278, 0.0
        %325 = vst.msk [vmem:[#allocation2 + $0x180] sm:$0xff] %vm275, 0.0
        %326 = vst.msk [vmem:[#allocation2 + $0x188] sm:$0xff] %vm275, 0.0
        %327 = vst.msk [vmem:[#allocation2 + $0x190] sm:$0x3] %vm278, 0.0
        %328 = vst.msk [vmem:[#allocation2 + $0x198] sm:$0xff] %vm275, 0.0
        %329 = vst.msk [vmem:[#allocation2 + $0x1a0] sm:$0xff] %vm275, 0.0
        %330 = vst.msk [vmem:[#allocation2 + $0x1a8] sm:$0x3] %vm278, 0.0
        %v331 = vld [vmem:[%s263] sm:$0xff]
        %v332 = vld [vmem:[%s263 + $0x8] sm:$0xff]
        %v333 = vld [vmem:[%s263 + $0x10] sm:$0xff]
        %v334 = vld [vmem:[%s263 + $0x18] sm:$0xff]
        %v335 = vld [vmem:[%s263 + $0x20] sm:$0xff]
        %v336 = vld [vmem:[%s263 + $0x28] sm:$0xff]
        %v337 = vld [vmem:[%s263 + $0x30] sm:$0xff]
        %v338 = vld [vmem:[%s263 + $0x38] sm:$0xff]
        %v339 = vld [vmem:[%s263 + $0x40] sm:$0xff]
        %v340 = vld [vmem:[%s263 + $0x48] sm:$0xff]
        %v341 = vld [vmem:[%s263 + $0x50] sm:$0xff]
        %v342 = vld [vmem:[%s263 + $0x58] sm:$0xff]
        %v343 = vld [vmem:[%s263 + $0x60] sm:$0xff]
        %v344 = vld [vmem:[%s263 + $0x68] sm:$0xff]
        %v345 = vld [vmem:[%s263 + $0x70] sm:$0xff]
        %v346 = vld [vmem:[%s263 + $0x78] sm:$0xff]
        %v347 = vld [vmem:[%s263 + $0x80] sm:$0xff]
        %v348 = vld [vmem:[%s263 + $0x88] sm:$0xff]
        %v349 = vld [vmem:[%s263 + $0x90] sm:$0xff]
        %v350 = vld [vmem:[%s263 + $0x98] sm:$0xff]
        %v351 = vld [vmem:[%s263 + $0xa0] sm:$0xff]
        %v352 = vld [vmem:[%s263 + $0xa8] sm:$0xff]
        %v353 = vld [vmem:[%s263 + $0xb0] sm:$0xff]
        %v354 = vld [vmem:[%s263 + $0xb8] sm:$0xff]
        %v355 = vld [vmem:[%s263 + $0xc0] sm:$0xff]
        %v356 = vld [vmem:[%s263 + $0xc8] sm:$0xff]
        %v357 = vld [vmem:[%s263 + $0xd0] sm:$0xff]
        %v358 = vld [vmem:[%s263 + $0xd8] sm:$0xff]
        %v359 = vld [vmem:[%s263 + $0xe0] sm:$0xff]
        %v360 = vld [vmem:[%s263 + $0xe8] sm:$0xff]
        %v361 = vld [vmem:[%s263 + $0xf0] sm:$0xff]
        %v362 = vld [vmem:[%s263 + $0xf8] sm:$0xff]
        %s363 = scalar_lea.vmem [#allocation2], 24
        %vm364 = vcmask 31744
        %365 = vst.msk [vmem:[%s363 + $0x1] sm:$0xff] %vm364, %v331
        %366 = vst.msk [vmem:[%s363 + $0x9] sm:$0xff] %vm364, %v332
        %367 = vst.msk [vmem:[%s363 + $0x19] sm:$0xff] %vm364, %v333
        %368 = vst.msk [vmem:[%s363 + $0x21] sm:$0xff] %vm364, %v334
        %369 = vst.msk [vmem:[%s363 + $0x31] sm:$0xff] %vm364, %v335
        %370 = vst.msk [vmem:[%s363 + $0x39] sm:$0xff] %vm364, %v336
        %371 = vst.msk [vmem:[%s363 + $0x49] sm:$0xff] %vm364, %v337
        %372 = vst.msk [vmem:[%s363 + $0x51] sm:$0xff] %vm364, %v338
        %373 = vst.msk [vmem:[%s363 + $0x61] sm:$0xff] %vm364, %v339
        %374 = vst.msk [vmem:[%s363 + $0x69] sm:$0xff] %vm364, %v340
        %375 = vst.msk [vmem:[%s363 + $0x79] sm:$0xff] %vm364, %v341
        %376 = vst.msk [vmem:[%s363 + $0x81] sm:$0xff] %vm364, %v342
        %377 = vst.msk [vmem:[%s363 + $0x91] sm:$0xff] %vm364, %v343
        %378 = vst.msk [vmem:[%s363 + $0x99] sm:$0xff] %vm364, %v344
        %379 = vst.msk [vmem:[%s363 + $0xa9] sm:$0xff] %vm364, %v345
        %380 = vst.msk [vmem:[%s363 + $0xb1] sm:$0xff] %vm364, %v346
        %381 = vst.msk [vmem:[%s363 + $0xc1] sm:$0xff] %vm364, %v347
        %382 = vst.msk [vmem:[%s363 + $0xc9] sm:$0xff] %vm364, %v348
        %383 = vst.msk [vmem:[%s363 + $0xd9] sm:$0xff] %vm364, %v349
        %384 = vst.msk [vmem:[%s363 + $0xe1] sm:$0xff] %vm364, %v350
        %385 = vst.msk [vmem:[%s363 + $0xf1] sm:$0xff] %vm364, %v351
        %386 = vst.msk [vmem:[%s363 + $0xf9] sm:$0xff] %vm364, %v352
        %387 = vst.msk [vmem:[%s363 + $0x109] sm:$0xff] %vm364, %v353
        %388 = vst.msk [vmem:[%s363 + $0x111] sm:$0xff] %vm364, %v354
        %389 = vst.msk [vmem:[%s363 + $0x121] sm:$0xff] %vm364, %v355
        %390 = vst.msk [vmem:[%s363 + $0x129] sm:$0xff] %vm364, %v356
        %391 = vst.msk [vmem:[%s363 + $0x139] sm:$0xff] %vm364, %v357
        %392 = vst.msk [vmem:[%s363 + $0x141] sm:$0xff] %vm364, %v358
        %393 = vst.msk [vmem:[%s363 + $0x151] sm:$0xff] %vm364, %v359
        %394 = vst.msk [vmem:[%s363 + $0x159] sm:$0xff] %vm364, %v360
        %395 = vst.msk [vmem:[%s363 + $0x169] sm:$0xff] %vm364, %v361
        %396 = vst.msk [vmem:[%s363 + $0x171] sm:$0xff] %vm364, %v362
        %v397 = vld [vmem:[%s268] sm:$0xff]
        %v398 = vld [vmem:[%s268 + $0x8] sm:$0xff]
        %v399 = vld [vmem:[%s268 + $0x10] sm:$0xff]
        %v400 = vld [vmem:[%s268 + $0x18] sm:$0xff]
        %v401 = vld [vmem:[%s268 + $0x20] sm:$0xff]
        %v402 = vld [vmem:[%s268 + $0x28] sm:$0xff]
        %v403 = vld [vmem:[%s268 + $0x30] sm:$0xff]
        %v404 = vld [vmem:[%s268 + $0x38] sm:$0xff]
        %v405 = vld [vmem:[%s268 + $0x40] sm:$0xff]
        %v406 = vld [vmem:[%s268 + $0x48] sm:$0xff]
        %v407 = vld [vmem:[%s268 + $0x50] sm:$0xff]
        %v408 = vld [vmem:[%s268 + $0x58] sm:$0xff]
        %v409 = vld [vmem:[%s268 + $0x60] sm:$0xff]
        %v410 = vld [vmem:[%s268 + $0x68] sm:$0xff]
        %v411 = vld [vmem:[%s268 + $0x70] sm:$0xff]
        %v412 = vld [vmem:[%s268 + $0x78] sm:$0xff]
        %v413 = vld [vmem:[%s268 + $0x80] sm:$0xff]
        %v414 = vld [vmem:[%s268 + $0x88] sm:$0xff]
        %v415 = vld [vmem:[%s268 + $0x90] sm:$0xff]
        %v416 = vld [vmem:[%s268 + $0x98] sm:$0xff]
        %v417 = vld [vmem:[%s268 + $0xa0] sm:$0xff]
        %v418 = vld [vmem:[%s268 + $0xa8] sm:$0xff]
        %v419 = vld [vmem:[%s268 + $0xb0] sm:$0xff]
        %v420 = vld [vmem:[%s268 + $0xb8] sm:$0xff]
        %v421 = vld [vmem:[%s268 + $0xc0] sm:$0xff]
        %v422 = vld [vmem:[%s268 + $0xc8] sm:$0xff]
        %v423 = vld [vmem:[%s268 + $0xd0] sm:$0xff]
        %v424 = vld [vmem:[%s268 + $0xd8] sm:$0xff]
        %v425 = vld [vmem:[%s268 + $0xe0] sm:$0xff]
        %v426 = vld [vmem:[%s268 + $0xe8] sm:$0xff]
        %v427 = vld [vmem:[%s268 + $0xf0] sm:$0xff]
        %v428 = vld [vmem:[%s268 + $0xf8] sm:$0xff]
        %461 = vrot.lane.b32.xlu0 %v397, 4
        %v462 = vpop.permute.xlu0 %461
        %463 = vrot.lane.b32.xlu0 %v398, 4
        %v464 = vpop.permute.xlu0 %463
        %465 = vrot.lane.b32.xlu0 %v399, 4
        %v466 = vpop.permute.xlu0 %465
        %467 = vrot.lane.b32.xlu0 %v400, 4
        %v468 = vpop.permute.xlu0 %467
        %469 = vrot.lane.b32.xlu0 %v401, 4
        %v470 = vpop.permute.xlu0 %469
        %471 = vrot.lane.b32.xlu0 %v402, 4
        %v472 = vpop.permute.xlu0 %471
        %473 = vrot.lane.b32.xlu0 %v403, 4
        %v474 = vpop.permute.xlu0 %473
        %475 = vrot.lane.b32.xlu0 %v404, 4
        %v476 = vpop.permute.xlu0 %475
        %477 = vrot.lane.b32.xlu0 %v405, 4
        %v478 = vpop.permute.xlu0 %477
        %479 = vrot.lane.b32.xlu0 %v406, 4
        %v480 = vpop.permute.xlu0 %479
        %481 = vrot.lane.b32.xlu0 %v407, 4
        %v482 = vpop.permute.xlu0 %481
        %483 = vrot.lane.b32.xlu0 %v408, 4
        %v484 = vpop.permute.xlu0 %483
        %485 = vrot.lane.b32.xlu0 %v409, 4
        %v486 = vpop.permute.xlu0 %485
        %487 = vrot.lane.b32.xlu0 %v410, 4
        %v488 = vpop.permute.xlu0 %487
        %489 = vrot.lane.b32.xlu0 %v411, 4
        %v490 = vpop.permute.xlu0 %489
        %491 = vrot.lane.b32.xlu0 %v412, 4
        %v492 = vpop.permute.xlu0 %491
        %493 = vrot.lane.b32.xlu0 %v413, 4
        %v494 = vpop.permute.xlu0 %493
        %495 = vrot.lane.b32.xlu0 %v414, 4
        %v496 = vpop.permute.xlu0 %495
        %497 = vrot.lane.b32.xlu0 %v415, 4
        %v498 = vpop.permute.xlu0 %497
        %499 = vrot.lane.b32.xlu0 %v416, 4
        %v500 = vpop.permute.xlu0 %499
        %501 = vrot.lane.b32.xlu0 %v417, 4
        %v502 = vpop.permute.xlu0 %501
        %503 = vrot.lane.b32.xlu0 %v418, 4
        %v504 = vpop.permute.xlu0 %503
        %505 = vrot.lane.b32.xlu0 %v419, 4
        %v506 = vpop.permute.xlu0 %505
        %507 = vrot.lane.b32.xlu0 %v420, 4
        %v508 = vpop.permute.xlu0 %507
        %509 = vrot.lane.b32.xlu0 %v421, 4
        %v510 = vpop.permute.xlu0 %509
        %511 = vrot.lane.b32.xlu0 %v422, 4
        %v512 = vpop.permute.xlu0 %511
        %513 = vrot.lane.b32.xlu0 %v423, 4
        %v514 = vpop.permute.xlu0 %513
        %515 = vrot.lane.b32.xlu0 %v424, 4
        %v516 = vpop.permute.xlu0 %515
        %517 = vrot.lane.b32.xlu0 %v425, 4
        %v518 = vpop.permute.xlu0 %517
        %519 = vrot.lane.b32.xlu0 %v426, 4
        %v520 = vpop.permute.xlu0 %519
        %521 = vrot.lane.b32.xlu0 %v427, 4
        %v522 = vpop.permute.xlu0 %521
        %523 = vrot.lane.b32.xlu0 %v428, 4
        %v524 = vpop.permute.xlu0 %523
        %vm557 = vcmask 293920
        %558 = vst.msk [vmem:[%s363 + $0x1] sm:$0xff] %vm557, %v462
        %559 = vst.msk [vmem:[%s363 + $0x9] sm:$0xff] %vm557, %v464
        %560 = vst.msk [vmem:[%s363 + $0x19] sm:$0xff] %vm557, %v466
        %561 = vst.msk [vmem:[%s363 + $0x21] sm:$0xff] %vm557, %v468
        %562 = vst.msk [vmem:[%s363 + $0x31] sm:$0xff] %vm557, %v470
        %563 = vst.msk [vmem:[%s363 + $0x39] sm:$0xff] %vm557, %v472
        %564 = vst.msk [vmem:[%s363 + $0x49] sm:$0xff] %vm557, %v474
        %565 = vst.msk [vmem:[%s363 + $0x51] sm:$0xff] %vm557, %v476
        %566 = vst.msk [vmem:[%s363 + $0x61] sm:$0xff] %vm557, %v478
        %567 = vst.msk [vmem:[%s363 + $0x69] sm:$0xff] %vm557, %v480
        %568 = vst.msk [vmem:[%s363 + $0x79] sm:$0xff] %vm557, %v482
        %569 = vst.msk [vmem:[%s363 + $0x81] sm:$0xff] %vm557, %v484
        %570 = vst.msk [vmem:[%s363 + $0x91] sm:$0xff] %vm557, %v486
        %571 = vst.msk [vmem:[%s363 + $0x99] sm:$0xff] %vm557, %v488
        %572 = vst.msk [vmem:[%s363 + $0xa9] sm:$0xff] %vm557, %v490
        %573 = vst.msk [vmem:[%s363 + $0xb1] sm:$0xff] %vm557, %v492
        %574 = vst.msk [vmem:[%s363 + $0xc1] sm:$0xff] %vm557, %v494
        %575 = vst.msk [vmem:[%s363 + $0xc9] sm:$0xff] %vm557, %v496
        %576 = vst.msk [vmem:[%s363 + $0xd9] sm:$0xff] %vm557, %v498
        %577 = vst.msk [vmem:[%s363 + $0xe1] sm:$0xff] %vm557, %v500
        %578 = vst.msk [vmem:[%s363 + $0xf1] sm:$0xff] %vm557, %v502
        %579 = vst.msk [vmem:[%s363 + $0xf9] sm:$0xff] %vm557, %v504
        %580 = vst.msk [vmem:[%s363 + $0x109] sm:$0xff] %vm557, %v506
        %581 = vst.msk [vmem:[%s363 + $0x111] sm:$0xff] %vm557, %v508
        %582 = vst.msk [vmem:[%s363 + $0x121] sm:$0xff] %vm557, %v510
        %583 = vst.msk [vmem:[%s363 + $0x129] sm:$0xff] %vm557, %v512
        %584 = vst.msk [vmem:[%s363 + $0x139] sm:$0xff] %vm557, %v514
        %585 = vst.msk [vmem:[%s363 + $0x141] sm:$0xff] %vm557, %v516
        %586 = vst.msk [vmem:[%s363 + $0x151] sm:$0xff] %vm557, %v518
        %587 = vst.msk [vmem:[%s363 + $0x159] sm:$0xff] %vm557, %v520
        %588 = vst.msk [vmem:[%s363 + $0x169] sm:$0xff] %vm557, %v522
        %589 = vst.msk [vmem:[%s363 + $0x171] sm:$0xff] %vm557, %v524
        %v590 = vld [vmem:[#allocation2] sm:$0xff]
        %v591 = vld [vmem:[#allocation2 + $0x8] sm:$0xff]
        %v592 = vld [vmem:[#allocation2 + $0x18] sm:$0xff]
        %v593 = vld [vmem:[#allocation2 + $0x20] sm:$0xff]
        %v594 = vld [vmem:[#allocation2 + $0x30] sm:$0xff]
        %v595 = vld [vmem:[#allocation2 + $0x38] sm:$0xff]
        %v596 = vld [vmem:[#allocation2 + $0x48] sm:$0xff]
        %v597 = vld [vmem:[#allocation2 + $0x50] sm:$0xff]
        %v598 = vld [vmem:[#allocation2 + $0x60] sm:$0xff]
        %v599 = vld [vmem:[#allocation2 + $0x68] sm:$0xff]
        %v600 = vld [vmem:[#allocation2 + $0x78] sm:$0xff]
        %v601 = vld [vmem:[#allocation2 + $0x80] sm:$0xff]
        %v602 = vld [vmem:[#allocation2 + $0x90] sm:$0xff]
        %v603 = vld [vmem:[#allocation2 + $0x98] sm:$0xff]
        %v604 = vld [vmem:[#allocation2 + $0xa8] sm:$0xff]
        %v605 = vld [vmem:[#allocation2 + $0xb0] sm:$0xff]
        %v606 = vld [vmem:[#allocation2 + $0xc0] sm:$0xff]
        %v607 = vld [vmem:[#allocation2 + $0xc8] sm:$0xff]
        %v608 = vld [vmem:[#allocation2 + $0xd8] sm:$0xff]
        %v609 = vld [vmem:[#allocation2 + $0xe0] sm:$0xff]
        %v610 = vld [vmem:[#allocation2 + $0xf0] sm:$0xff]
        %v611 = vld [vmem:[#allocation2 + $0xf8] sm:$0xff]
        %v612 = vld [vmem:[#allocation2 + $0x108] sm:$0xff]
        %v613 = vld [vmem:[#allocation2 + $0x110] sm:$0xff]
        %v614 = vld [vmem:[#allocation2 + $0x120] sm:$0xff]
        %v615 = vld [vmem:[#allocation2 + $0x128] sm:$0xff]
        %v616 = vld [vmem:[#allocation2 + $0x138] sm:$0xff]
        %v617 = vld [vmem:[#allocation2 + $0x140] sm:$0xff]
        %v618 = vld [vmem:[#allocation2 + $0x150] sm:$0xff]
        %v619 = vld [vmem:[#allocation2 + $0x158] sm:$0xff]
        %v620 = vld [vmem:[#allocation2 + $0x168] sm:$0xff]
        %v621 = vld [vmem:[#allocation2 + $0x170] sm:$0xff]
        %622 = vst.msk [vmem:[#allocation3] sm:$0xff] %vm275, %v590
        %623 = vst.msk [vmem:[#allocation3 + $0x18] sm:$0xff] %vm275, %v591
        %624 = vst.msk [vmem:[#allocation3 + $0x30] sm:$0xff] %vm275, %v592
        %625 = vst.msk [vmem:[#allocation3 + $0x48] sm:$0xff] %vm275, %v593
        %626 = vst.msk [vmem:[#allocation3 + $0x60] sm:$0xff] %vm275, %v594
        %627 = vst.msk [vmem:[#allocation3 + $0x78] sm:$0xff] %vm275, %v595
        %628 = vst.msk [vmem:[#allocation3 + $0x90] sm:$0xff] %vm275, %v596
        %629 = vst.msk [vmem:[#allocation3 + $0xa8] sm:$0xff] %vm275, %v597
        %630 = vst.msk [vmem:[#allocation3 + $0xc0] sm:$0xff] %vm275, %v598
        %631 = vst.msk [vmem:[#allocation3 + $0xd8] sm:$0xff] %vm275, %v599
        %632 = vst.msk [vmem:[#allocation3 + $0xf0] sm:$0xff] %vm275, %v600
        %633 = vst.msk [vmem:[#allocation3 + $0x108] sm:$0xff] %vm275, %v601
        %634 = vst.msk [vmem:[#allocation3 + $0x120] sm:$0xff] %vm275, %v602
        %635 = vst.msk [vmem:[#allocation3 + $0x138] sm:$0xff] %vm275, %v603
        %636 = vst.msk [vmem:[#allocation3 + $0x150] sm:$0xff] %vm275, %v604
        %637 = vst.msk [vmem:[#allocation3 + $0x168] sm:$0xff] %vm275, %v605
        %638 = vst.msk [vmem:[#allocation3 + $0x180] sm:$0xff] %vm275, %v606
        %639 = vst.msk [vmem:[#allocation3 + $0x198] sm:$0xff] %vm275, %v607
        %640 = vst.msk [vmem:[#allocation3 + $0x1b0] sm:$0xff] %vm275, %v608
        %641 = vst.msk [vmem:[#allocation3 + $0x1c8] sm:$0xff] %vm275, %v609
        %642 = vst.msk [vmem:[#allocation3 + $0x1e0] sm:$0xff] %vm275, %v610
        %643 = vst.msk [vmem:[#allocation3 + $0x1f8] sm:$0xff] %vm275, %v611
        %644 = vst.msk [vmem:[#allocation3 + $0x210] sm:$0xff] %vm275, %v612
        %645 = vst.msk [vmem:[#allocation3 + $0x228] sm:$0xff] %vm275, %v613
        %646 = vst.msk [vmem:[#allocation3 + $0x240] sm:$0xff] %vm275, %v614
        %647 = vst.msk [vmem:[#allocation3 + $0x258] sm:$0xff] %vm275, %v615
        %648 = vst.msk [vmem:[#allocation3 + $0x270] sm:$0xff] %vm275, %v616
        %649 = vst.msk [vmem:[#allocation3 + $0x288] sm:$0xff] %vm275, %v617
        %650 = vst.msk [vmem:[#allocation3 + $0x2a0] sm:$0xff] %vm275, %v618
        %651 = vst.msk [vmem:[#allocation3 + $0x2b8] sm:$0xff] %vm275, %v619
        %652 = vst.msk [vmem:[#allocation3 + $0x2d0] sm:$0xff] %vm275, %v620
        %653 = vst.msk [vmem:[#allocation3 + $0x2e8] sm:$0xff] %vm275, %v621
        %v654 = vld [vmem:[#allocation2 + $0x1] sm:$0xff]
        %v655 = vld [vmem:[#allocation2 + $0x9] sm:$0xff]
        %v656 = vld [vmem:[#allocation2 + $0x19] sm:$0xff]
        %v657 = vld [vmem:[#allocation2 + $0x21] sm:$0xff]
        %v658 = vld [vmem:[#allocation2 + $0x31] sm:$0xff]
        %v659 = vld [vmem:[#allocation2 + $0x39] sm:$0xff]
        %v660 = vld [vmem:[#allocation2 + $0x49] sm:$0xff]
        %v661 = vld [vmem:[#allocation2 + $0x51] sm:$0xff]
        %v662 = vld [vmem:[#allocation2 + $0x61] sm:$0xff]
        %v663 = vld [vmem:[#allocation2 + $0x69] sm:$0xff]
        %v664 = vld [vmem:[#allocation2 + $0x79] sm:$0xff]
        %v665 = vld [vmem:[#allocation2 + $0x81] sm:$0xff]
        %v666 = vld [vmem:[#allocation2 + $0x91] sm:$0xff]
        %v667 = vld [vmem:[#allocation2 + $0x99] sm:$0xff]
        %v668 = vld [vmem:[#allocation2 + $0xa9] sm:$0xff]
        %v669 = vld [vmem:[#allocation2 + $0xb1] sm:$0xff]
        %v670 = vld [vmem:[#allocation2 + $0xc1] sm:$0xff]
        %v671 = vld [vmem:[#allocation2 + $0xc9] sm:$0xff]
        %v672 = vld [vmem:[#allocation2 + $0xd9] sm:$0xff]
        %v673 = vld [vmem:[#allocation2 + $0xe1] sm:$0xff]
        %v674 = vld [vmem:[#allocation2 + $0xf1] sm:$0xff]
        %v675 = vld [vmem:[#allocation2 + $0xf9] sm:$0xff]
        %v676 = vld [vmem:[#allocation2 + $0x109] sm:$0xff]
        %v677 = vld [vmem:[#allocation2 + $0x111] sm:$0xff]
        %v678 = vld [vmem:[#allocation2 + $0x121] sm:$0xff]
        %v679 = vld [vmem:[#allocation2 + $0x129] sm:$0xff]
        %v680 = vld [vmem:[#allocation2 + $0x139] sm:$0xff]
        %v681 = vld [vmem:[#allocation2 + $0x141] sm:$0xff]
        %v682 = vld [vmem:[#allocation2 + $0x151] sm:$0xff]
        %v683 = vld [vmem:[#allocation2 + $0x159] sm:$0xff]
        %v684 = vld [vmem:[#allocation2 + $0x169] sm:$0xff]
        %v685 = vld [vmem:[#allocation2 + $0x171] sm:$0xff]
        %718 = vrot.lane.b32.xlu0 %v654, 36
        %v719 = vpop.permute.xlu0 %718
        %720 = vrot.lane.b32.xlu0 %v655, 36
        %v721 = vpop.permute.xlu0 %720
        %722 = vrot.lane.b32.xlu0 %v656, 36
        %v723 = vpop.permute.xlu0 %722
        %724 = vrot.lane.b32.xlu0 %v657, 36
        %v725 = vpop.permute.xlu0 %724
        %726 = vrot.lane.b32.xlu0 %v658, 36
        %v727 = vpop.permute.xlu0 %726
        %728 = vrot.lane.b32.xlu0 %v659, 36
        %v729 = vpop.permute.xlu0 %728
        %730 = vrot.lane.b32.xlu0 %v660, 36
        %v731 = vpop.permute.xlu0 %730
        %732 = vrot.lane.b32.xlu0 %v661, 36
        %v733 = vpop.permute.xlu0 %732
        %734 = vrot.lane.b32.xlu0 %v662, 36
        %v735 = vpop.permute.xlu0 %734
        %736 = vrot.lane.b32.xlu0 %v663, 36
        %v737 = vpop.permute.xlu0 %736
        %738 = vrot.lane.b32.xlu0 %v664, 36
        %v739 = vpop.permute.xlu0 %738
        %740 = vrot.lane.b32.xlu0 %v665, 36
        %v741 = vpop.permute.xlu0 %740
        %742 = vrot.lane.b32.xlu0 %v666, 36
        %v743 = vpop.permute.xlu0 %742
        %744 = vrot.lane.b32.xlu0 %v667, 36
        %v745 = vpop.permute.xlu0 %744
        %746 = vrot.lane.b32.xlu0 %v668, 36
        %v747 = vpop.permute.xlu0 %746
        %748 = vrot.lane.b32.xlu0 %v669, 36
        %v749 = vpop.permute.xlu0 %748
        %750 = vrot.lane.b32.xlu0 %v670, 36
        %v751 = vpop.permute.xlu0 %750
        %752 = vrot.lane.b32.xlu0 %v671, 36
        %v753 = vpop.permute.xlu0 %752
        %754 = vrot.lane.b32.xlu0 %v672, 36
        %v755 = vpop.permute.xlu0 %754
        %756 = vrot.lane.b32.xlu0 %v673, 36
        %v757 = vpop.permute.xlu0 %756
        %758 = vrot.lane.b32.xlu0 %v674, 36
        %v759 = vpop.permute.xlu0 %758
        %760 = vrot.lane.b32.xlu0 %v675, 36
        %v761 = vpop.permute.xlu0 %760
        %762 = vrot.lane.b32.xlu0 %v676, 36
        %v763 = vpop.permute.xlu0 %762
        %764 = vrot.lane.b32.xlu0 %v677, 36
        %v765 = vpop.permute.xlu0 %764
        %766 = vrot.lane.b32.xlu0 %v678, 36
        %v767 = vpop.permute.xlu0 %766
        %768 = vrot.lane.b32.xlu0 %v679, 36
        %v769 = vpop.permute.xlu0 %768
        %770 = vrot.lane.b32.xlu0 %v680, 36
        %v771 = vpop.permute.xlu0 %770
        %772 = vrot.lane.b32.xlu0 %v681, 36
        %v773 = vpop.permute.xlu0 %772
        %774 = vrot.lane.b32.xlu0 %v682, 36
        %v775 = vpop.permute.xlu0 %774
        %776 = vrot.lane.b32.xlu0 %v683, 36
        %v777 = vpop.permute.xlu0 %776
        %778 = vrot.lane.b32.xlu0 %v684, 36
        %v779 = vpop.permute.xlu0 %778
        %780 = vrot.lane.b32.xlu0 %v685, 36
        %v781 = vpop.permute.xlu0 %780
        %vm814 = vcmask 589088
        %815 = vst.msk [vmem:[#allocation3] sm:$0xff] %vm814, %v719
        %816 = vst.msk [vmem:[#allocation3 + $0x18] sm:$0xff] %vm814, %v721
        %817 = vst.msk [vmem:[#allocation3 + $0x30] sm:$0xff] %vm814, %v723
        %818 = vst.msk [vmem:[#allocation3 + $0x48] sm:$0xff] %vm814, %v725
        %819 = vst.msk [vmem:[#allocation3 + $0x60] sm:$0xff] %vm814, %v727
        %820 = vst.msk [vmem:[#allocation3 + $0x78] sm:$0xff] %vm814, %v729
        %821 = vst.msk [vmem:[#allocation3 + $0x90] sm:$0xff] %vm814, %v731
        %822 = vst.msk [vmem:[#allocation3 + $0xa8] sm:$0xff] %vm814, %v733
        %823 = vst.msk [vmem:[#allocation3 + $0xc0] sm:$0xff] %vm814, %v735
        %824 = vst.msk [vmem:[#allocation3 + $0xd8] sm:$0xff] %vm814, %v737
        %825 = vst.msk [vmem:[#allocation3 + $0xf0] sm:$0xff] %vm814, %v739
        %826 = vst.msk [vmem:[#allocation3 + $0x108] sm:$0xff] %vm814, %v741
        %827 = vst.msk [vmem:[#allocation3 + $0x120] sm:$0xff] %vm814, %v743
        %828 = vst.msk [vmem:[#allocation3 + $0x138] sm:$0xff] %vm814, %v745
        %829 = vst.msk [vmem:[#allocation3 + $0x150] sm:$0xff] %vm814, %v747
        %830 = vst.msk [vmem:[#allocation3 + $0x168] sm:$0xff] %vm814, %v749
        %831 = vst.msk [vmem:[#allocation3 + $0x180] sm:$0xff] %vm814, %v751
        %832 = vst.msk [vmem:[#allocation3 + $0x198] sm:$0xff] %vm814, %v753
        %833 = vst.msk [vmem:[#allocation3 + $0x1b0] sm:$0xff] %vm814, %v755
        %834 = vst.msk [vmem:[#allocation3 + $0x1c8] sm:$0xff] %vm814, %v757
        %835 = vst.msk [vmem:[#allocation3 + $0x1e0] sm:$0xff] %vm814, %v759
        %836 = vst.msk [vmem:[#allocation3 + $0x1f8] sm:$0xff] %vm814, %v761
        %837 = vst.msk [vmem:[#allocation3 + $0x210] sm:$0xff] %vm814, %v763
        %838 = vst.msk [vmem:[#allocation3 + $0x228] sm:$0xff] %vm814, %v765
        %839 = vst.msk [vmem:[#allocation3 + $0x240] sm:$0xff] %vm814, %v767
        %840 = vst.msk [vmem:[#allocation3 + $0x258] sm:$0xff] %vm814, %v769
        %841 = vst.msk [vmem:[#allocation3 + $0x270] sm:$0xff] %vm814, %v771
        %842 = vst.msk [vmem:[#allocation3 + $0x288] sm:$0xff] %vm814, %v773
        %843 = vst.msk [vmem:[#allocation3 + $0x2a0] sm:$0xff] %vm814, %v775
        %844 = vst.msk [vmem:[#allocation3 + $0x2b8] sm:$0xff] %vm814, %v777
        %845 = vst.msk [vmem:[#allocation3 + $0x2d0] sm:$0xff] %vm814, %v779
        %846 = vst.msk [vmem:[#allocation3 + $0x2e8] sm:$0xff] %vm814, %v781
        %v847 = vld [vmem:[#allocation2 + $0x2] sm:$0xff]
        %v848 = vld [vmem:[#allocation2 + $0xa] sm:$0xff]
        %v849 = vld [vmem:[#allocation2 + $0x1a] sm:$0xff]
        %v850 = vld [vmem:[#allocation2 + $0x22] sm:$0xff]
        %v851 = vld [vmem:[#allocation2 + $0x32] sm:$0xff]
        %v852 = vld [vmem:[#allocation2 + $0x3a] sm:$0xff]
        %v853 = vld [vmem:[#allocation2 + $0x4a] sm:$0xff]
        %v854 = vld [vmem:[#allocation2 + $0x52] sm:$0xff]
        %v855 = vld [vmem:[#allocation2 + $0x62] sm:$0xff]
        %v856 = vld [vmem:[#allocation2 + $0x6a] sm:$0xff]
        %v857 = vld [vmem:[#allocation2 + $0x7a] sm:$0xff]
        %v858 = vld [vmem:[#allocation2 + $0x82] sm:$0xff]
        %v859 = vld [vmem:[#allocation2 + $0x92] sm:$0xff]
        %v860 = vld [vmem:[#allocation2 + $0x9a] sm:$0xff]
        %v861 = vld [vmem:[#allocation2 + $0xaa] sm:$0xff]
        %v862 = vld [vmem:[#allocation2 + $0xb2] sm:$0xff]
        %v863 = vld [vmem:[#allocation2 + $0xc2] sm:$0xff]
        %v864 = vld [vmem:[#allocation2 + $0xca] sm:$0xff]
        %v865 = vld [vmem:[#allocation2 + $0xda] sm:$0xff]
        %v866 = vld [vmem:[#allocation2 + $0xe2] sm:$0xff]
        %v867 = vld [vmem:[#allocation2 + $0xf2] sm:$0xff]
        %v868 = vld [vmem:[#allocation2 + $0xfa] sm:$0xff]
        %v869 = vld [vmem:[#allocation2 + $0x10a] sm:$0xff]
        %v870 = vld [vmem:[#allocation2 + $0x112] sm:$0xff]
        %v871 = vld [vmem:[#allocation2 + $0x122] sm:$0xff]
        %v872 = vld [vmem:[#allocation2 + $0x12a] sm:$0xff]
        %v873 = vld [vmem:[#allocation2 + $0x13a] sm:$0xff]
        %v874 = vld [vmem:[#allocation2 + $0x142] sm:$0xff]
        %v875 = vld [vmem:[#allocation2 + $0x152] sm:$0xff]
        %v876 = vld [vmem:[#allocation2 + $0x15a] sm:$0xff]
        %v877 = vld [vmem:[#allocation2 + $0x16a] sm:$0xff]
        %v878 = vld [vmem:[#allocation2 + $0x172] sm:$0xff]
        %911 = vrot.lane.b32.xlu0 %v847, 72
        %v912 = vpop.permute.xlu0 %911
        %913 = vrot.lane.b32.xlu0 %v848, 72
        %v914 = vpop.permute.xlu0 %913
        %915 = vrot.lane.b32.xlu0 %v849, 72
        %v916 = vpop.permute.xlu0 %915
        %917 = vrot.lane.b32.xlu0 %v850, 72
        %v918 = vpop.permute.xlu0 %917
        %919 = vrot.lane.b32.xlu0 %v851, 72
        %v920 = vpop.permute.xlu0 %919
        %921 = vrot.lane.b32.xlu0 %v852, 72
        %v922 = vpop.permute.xlu0 %921
        %923 = vrot.lane.b32.xlu0 %v853, 72
        %v924 = vpop.permute.xlu0 %923
        %925 = vrot.lane.b32.xlu0 %v854, 72
        %v926 = vpop.permute.xlu0 %925
        %927 = vrot.lane.b32.xlu0 %v855, 72
        %v928 = vpop.permute.xlu0 %927
        %929 = vrot.lane.b32.xlu0 %v856, 72
        %v930 = vpop.permute.xlu0 %929
        %931 = vrot.lane.b32.xlu0 %v857, 72
        %v932 = vpop.permute.xlu0 %931
        %933 = vrot.lane.b32.xlu0 %v858, 72
        %v934 = vpop.permute.xlu0 %933
        %935 = vrot.lane.b32.xlu0 %v859, 72
        %v936 = vpop.permute.xlu0 %935
        %937 = vrot.lane.b32.xlu0 %v860, 72
        %v938 = vpop.permute.xlu0 %937
        %939 = vrot.lane.b32.xlu0 %v861, 72
        %v940 = vpop.permute.xlu0 %939
        %941 = vrot.lane.b32.xlu0 %v862, 72
        %v942 = vpop.permute.xlu0 %941
        %943 = vrot.lane.b32.xlu0 %v863, 72
        %v944 = vpop.permute.xlu0 %943
        %945 = vrot.lane.b32.xlu0 %v864, 72
        %v946 = vpop.permute.xlu0 %945
        %947 = vrot.lane.b32.xlu0 %v865, 72
        %v948 = vpop.permute.xlu0 %947
        %949 = vrot.lane.b32.xlu0 %v866, 72
        %v950 = vpop.permute.xlu0 %949
        %951 = vrot.lane.b32.xlu0 %v867, 72
        %v952 = vpop.permute.xlu0 %951
        %953 = vrot.lane.b32.xlu0 %v868, 72
        %v954 = vpop.permute.xlu0 %953
        %955 = vrot.lane.b32.xlu0 %v869, 72
        %v956 = vpop.permute.xlu0 %955
        %957 = vrot.lane.b32.xlu0 %v870, 72
        %v958 = vpop.permute.xlu0 %957
        %959 = vrot.lane.b32.xlu0 %v871, 72
        %v960 = vpop.permute.xlu0 %959
        %961 = vrot.lane.b32.xlu0 %v872, 72
        %v962 = vpop.permute.xlu0 %961
        %963 = vrot.lane.b32.xlu0 %v873, 72
        %v964 = vpop.permute.xlu0 %963
        %965 = vrot.lane.b32.xlu0 %v874, 72
        %v966 = vpop.permute.xlu0 %965
        %967 = vrot.lane.b32.xlu0 %v875, 72
        %v968 = vpop.permute.xlu0 %967
        %969 = vrot.lane.b32.xlu0 %v876, 72
        %v970 = vpop.permute.xlu0 %969
        %971 = vrot.lane.b32.xlu0 %v877, 72
        %v972 = vpop.permute.xlu0 %971
        %973 = vrot.lane.b32.xlu0 %v878, 72
        %v974 = vpop.permute.xlu0 %973
        %vm1007 = vcmask 884288
        %1008 = vst.msk [vmem:[#allocation3] sm:$0xff] %vm1007, %v912
        %1009 = vst.msk [vmem:[#allocation3 + $0x18] sm:$0xff] %vm1007, %v914
        %1010 = vst.msk [vmem:[#allocation3 + $0x30] sm:$0xff] %vm1007, %v916
        %1011 = vst.msk [vmem:[#allocation3 + $0x48] sm:$0xff] %vm1007, %v918
        %1012 = vst.msk [vmem:[#allocation3 + $0x60] sm:$0xff] %vm1007, %v920
        %1013 = vst.msk [vmem:[#allocation3 + $0x78] sm:$0xff] %vm1007, %v922
        %1014 = vst.msk [vmem:[#allocation3 + $0x90] sm:$0xff] %vm1007, %v924
        %1015 = vst.msk [vmem:[#allocation3 + $0xa8] sm:$0xff] %vm1007, %v926
        %1016 = vst.msk [vmem:[#allocation3 + $0xc0] sm:$0xff] %vm1007, %v928
        %1017 = vst.msk [vmem:[#allocation3 + $0xd8] sm:$0xff] %vm1007, %v930
        %1018 = vst.msk [vmem:[#allocation3 + $0xf0] sm:$0xff] %vm1007, %v932
        %1019 = vst.msk [vmem:[#allocation3 + $0x108] sm:$0xff] %vm1007, %v934
        %1020 = vst.msk [vmem:[#allocation3 + $0x120] sm:$0xff] %vm1007, %v936
        %1021 = vst.msk [vmem:[#allocation3 + $0x138] sm:$0xff] %vm1007, %v938
        %1022 = vst.msk [vmem:[#allocation3 + $0x150] sm:$0xff] %vm1007, %v940
        %1023 = vst.msk [vmem:[#allocation3 + $0x168] sm:$0xff] %vm1007, %v942
        %1024 = vst.msk [vmem:[#allocation3 + $0x180] sm:$0xff] %vm1007, %v944
        %1025 = vst.msk [vmem:[#allocation3 + $0x198] sm:$0xff] %vm1007, %v946
        %1026 = vst.msk [vmem:[#allocation3 + $0x1b0] sm:$0xff] %vm1007, %v948
        %1027 = vst.msk [vmem:[#allocation3 + $0x1c8] sm:$0xff] %vm1007, %v950
        %1028 = vst.msk [vmem:[#allocation3 + $0x1e0] sm:$0xff] %vm1007, %v952
        %1029 = vst.msk [vmem:[#allocation3 + $0x1f8] sm:$0xff] %vm1007, %v954
        %1030 = vst.msk [vmem:[#allocation3 + $0x210] sm:$0xff] %vm1007, %v956
        %1031 = vst.msk [vmem:[#allocation3 + $0x228] sm:$0xff] %vm1007, %v958
        %1032 = vst.msk [vmem:[#allocation3 + $0x240] sm:$0xff] %vm1007, %v960
        %1033 = vst.msk [vmem:[#allocation3 + $0x258] sm:$0xff] %vm1007, %v962
        %1034 = vst.msk [vmem:[#allocation3 + $0x270] sm:$0xff] %vm1007, %v964
        %1035 = vst.msk [vmem:[#allocation3 + $0x288] sm:$0xff] %vm1007, %v966
        %1036 = vst.msk [vmem:[#allocation3 + $0x2a0] sm:$0xff] %vm1007, %v968
        %1037 = vst.msk [vmem:[#allocation3 + $0x2b8] sm:$0xff] %vm1007, %v970
        %1038 = vst.msk [vmem:[#allocation3 + $0x2d0] sm:$0xff] %vm1007, %v972
        %1039 = vst.msk [vmem:[#allocation3 + $0x2e8] sm:$0xff] %vm1007, %v974
        %v1040 = vld [vmem:[%s363] sm:$0xff]
        %v1041 = vld [vmem:[%s363 + $0x8] sm:$0xff]
        %v1042 = vld [vmem:[%s363 + $0x18] sm:$0xff]
        %v1043 = vld [vmem:[%s363 + $0x20] sm:$0xff]
        %v1044 = vld [vmem:[%s363 + $0x30] sm:$0xff]
        %v1045 = vld [vmem:[%s363 + $0x38] sm:$0xff]
        %v1046 = vld [vmem:[%s363 + $0x48] sm:$0xff]
        %v1047 = vld [vmem:[%s363 + $0x50] sm:$0xff]
        %v1048 = vld [vmem:[%s363 + $0x60] sm:$0xff]
        %v1049 = vld [vmem:[%s363 + $0x68] sm:$0xff]
        %v1050 = vld [vmem:[%s363 + $0x78] sm:$0xff]
        %v1051 = vld [vmem:[%s363 + $0x80] sm:$0xff]
        %v1052 = vld [vmem:[%s363 + $0x90] sm:$0xff]
        %v1053 = vld [vmem:[%s363 + $0x98] sm:$0xff]
        %v1054 = vld [vmem:[%s363 + $0xa8] sm:$0xff]
        %v1055 = vld [vmem:[%s363 + $0xb0] sm:$0xff]
        %v1056 = vld [vmem:[%s363 + $0xc0] sm:$0xff]
        %v1057 = vld [vmem:[%s363 + $0xc8] sm:$0xff]
        %v1058 = vld [vmem:[%s363 + $0xd8] sm:$0xff]
        %v1059 = vld [vmem:[%s363 + $0xe0] sm:$0xff]
        %v1060 = vld [vmem:[%s363 + $0xf0] sm:$0xff]
        %v1061 = vld [vmem:[%s363 + $0xf8] sm:$0xff]
        %v1062 = vld [vmem:[%s363 + $0x108] sm:$0xff]
        %v1063 = vld [vmem:[%s363 + $0x110] sm:$0xff]
        %v1064 = vld [vmem:[%s363 + $0x120] sm:$0xff]
        %v1065 = vld [vmem:[%s363 + $0x128] sm:$0xff]
        %v1066 = vld [vmem:[%s363 + $0x138] sm:$0xff]
        %v1067 = vld [vmem:[%s363 + $0x140] sm:$0xff]
        %v1068 = vld [vmem:[%s363 + $0x150] sm:$0xff]
        %v1069 = vld [vmem:[%s363 + $0x158] sm:$0xff]
        %v1070 = vld [vmem:[%s363 + $0x168] sm:$0xff]
        %v1071 = vld [vmem:[%s363 + $0x170] sm:$0xff]
        %1104 = vrot.lane.b32.xlu0 %v1040, 108
        %v1105 = vpop.permute.xlu0 %1104
        %1106 = vrot.lane.b32.xlu0 %v1041, 108
        %v1107 = vpop.permute.xlu0 %1106
        %1108 = vrot.lane.b32.xlu0 %v1042, 108
        %v1109 = vpop.permute.xlu0 %1108
        %1110 = vrot.lane.b32.xlu0 %v1043, 108
        %v1111 = vpop.permute.xlu0 %1110
        %1112 = vrot.lane.b32.xlu0 %v1044, 108
        %v1113 = vpop.permute.xlu0 %1112
        %1114 = vrot.lane.b32.xlu0 %v1045, 108
        %v1115 = vpop.permute.xlu0 %1114
        %1116 = vrot.lane.b32.xlu0 %v1046, 108
        %v1117 = vpop.permute.xlu0 %1116
        %1118 = vrot.lane.b32.xlu0 %v1047, 108
        %v1119 = vpop.permute.xlu0 %1118
        %1120 = vrot.lane.b32.xlu0 %v1048, 108
        %v1121 = vpop.permute.xlu0 %1120
        %1122 = vrot.lane.b32.xlu0 %v1049, 108
        %v1123 = vpop.permute.xlu0 %1122
        %1124 = vrot.lane.b32.xlu0 %v1050, 108
        %v1125 = vpop.permute.xlu0 %1124
        %1126 = vrot.lane.b32.xlu0 %v1051, 108
        %v1127 = vpop.permute.xlu0 %1126
        %1128 = vrot.lane.b32.xlu0 %v1052, 108
        %v1129 = vpop.permute.xlu0 %1128
        %1130 = vrot.lane.b32.xlu0 %v1053, 108
        %v1131 = vpop.permute.xlu0 %1130
        %1132 = vrot.lane.b32.xlu0 %v1054, 108
        %v1133 = vpop.permute.xlu0 %1132
        %1134 = vrot.lane.b32.xlu0 %v1055, 108
        %v1135 = vpop.permute.xlu0 %1134
        %1136 = vrot.lane.b32.xlu0 %v1056, 108
        %v1137 = vpop.permute.xlu0 %1136
        %1138 = vrot.lane.b32.xlu0 %v1057, 108
        %v1139 = vpop.permute.xlu0 %1138
        %1140 = vrot.lane.b32.xlu0 %v1058, 108
        %v1141 = vpop.permute.xlu0 %1140
        %1142 = vrot.lane.b32.xlu0 %v1059, 108
        %v1143 = vpop.permute.xlu0 %1142
        %1144 = vrot.lane.b32.xlu0 %v1060, 108
        %v1145 = vpop.permute.xlu0 %1144
        %1146 = vrot.lane.b32.xlu0 %v1061, 108
        %v1147 = vpop.permute.xlu0 %1146
        %1148 = vrot.lane.b32.xlu0 %v1062, 108
        %v1149 = vpop.permute.xlu0 %1148
        %1150 = vrot.lane.b32.xlu0 %v1063, 108
        %v1151 = vpop.permute.xlu0 %1150
        %1152 = vrot.lane.b32.xlu0 %v1064, 108
        %v1153 = vpop.permute.xlu0 %1152
        %1154 = vrot.lane.b32.xlu0 %v1065, 108
        %v1155 = vpop.permute.xlu0 %1154
        %1156 = vrot.lane.b32.xlu0 %v1066, 108
        %v1157 = vpop.permute.xlu0 %1156
        %1158 = vrot.lane.b32.xlu0 %v1067, 108
        %v1159 = vpop.permute.xlu0 %1158
        %1160 = vrot.lane.b32.xlu0 %v1068, 108
        %v1161 = vpop.permute.xlu0 %1160
        %1162 = vrot.lane.b32.xlu0 %v1069, 108
        %v1163 = vpop.permute.xlu0 %1162
        %1164 = vrot.lane.b32.xlu0 %v1070, 108
        %v1165 = vpop.permute.xlu0 %1164
        %1166 = vrot.lane.b32.xlu0 %v1071, 108
        %v1167 = vpop.permute.xlu0 %1166
        %vm1200 = vcmask 1048416
        %1201 = vst.msk [vmem:[#allocation3] sm:$0xff] %vm1200, %v1105
        %vm1202 = vcmask 130048
        %1203 = vst.msk [vmem:[#allocation3 + $0x8] sm:$0xff] %vm1202, %v1105
        %1204 = vst.msk [vmem:[#allocation3 + $0x18] sm:$0xff] %vm1200, %v1107
        %1205 = vst.msk [vmem:[#allocation3 + $0x20] sm:$0xff] %vm1202, %v1107
        %1206 = vst.msk [vmem:[#allocation3 + $0x30] sm:$0xff] %vm1200, %v1109
        %1207 = vst.msk [vmem:[#allocation3 + $0x38] sm:$0xff] %vm1202, %v1109
        %1208 = vst.msk [vmem:[#allocation3 + $0x48] sm:$0xff] %vm1200, %v1111
        %1209 = vst.msk [vmem:[#allocation3 + $0x50] sm:$0xff] %vm1202, %v1111
        %1210 = vst.msk [vmem:[#allocation3 + $0x60] sm:$0xff] %vm1200, %v1113
        %1211 = vst.msk [vmem:[#allocation3 + $0x68] sm:$0xff] %vm1202, %v1113
        %1212 = vst.msk [vmem:[#allocation3 + $0x78] sm:$0xff] %vm1200, %v1115
        %1213 = vst.msk [vmem:[#allocation3 + $0x80] sm:$0xff] %vm1202, %v1115
        %1214 = vst.msk [vmem:[#allocation3 + $0x90] sm:$0xff] %vm1200, %v1117
        %1215 = vst.msk [vmem:[#allocation3 + $0x98] sm:$0xff] %vm1202, %v1117
        %1216 = vst.msk [vmem:[#allocation3 + $0xa8] sm:$0xff] %vm1200, %v1119
        %1217 = vst.msk [vmem:[#allocation3 + $0xb0] sm:$0xff] %vm1202, %v1119
        %1218 = vst.msk [vmem:[#allocation3 + $0xc0] sm:$0xff] %vm1200, %v1121
        %1219 = vst.msk [vmem:[#allocation3 + $0xc8] sm:$0xff] %vm1202, %v1121
        %1220 = vst.msk [vmem:[#allocation3 + $0xd8] sm:$0xff] %vm1200, %v1123
        %1221 = vst.msk [vmem:[#allocation3 + $0xe0] sm:$0xff] %vm1202, %v1123
        %1222 = vst.msk [vmem:[#allocation3 + $0xf0] sm:$0xff] %vm1200, %v1125
        %1223 = vst.msk [vmem:[#allocation3 + $0xf8] sm:$0xff] %vm1202, %v1125
        %1224 = vst.msk [vmem:[#allocation3 + $0x108] sm:$0xff] %vm1200, %v1127
        %1225 = vst.msk [vmem:[#allocation3 + $0x110] sm:$0xff] %vm1202, %v1127
        %1226 = vst.msk [vmem:[#allocation3 + $0x120] sm:$0xff] %vm1200, %v1129
        %1227 = vst.msk [vmem:[#allocation3 + $0x128] sm:$0xff] %vm1202, %v1129
        %1228 = vst.msk [vmem:[#allocation3 + $0x138] sm:$0xff] %vm1200, %v1131
        %1229 = vst.msk [vmem:[#allocation3 + $0x140] sm:$0xff] %vm1202, %v1131
        %1230 = vst.msk [vmem:[#allocation3 + $0x150] sm:$0xff] %vm1200, %v1133
        %1231 = vst.msk [vmem:[#allocation3 + $0x158] sm:$0xff] %vm1202, %v1133
        %1232 = vst.msk [vmem:[#allocation3 + $0x168] sm:$0xff] %vm1200, %v1135
        %1233 = vst.msk [vmem:[#allocation3 + $0x170] sm:$0xff] %vm1202, %v1135
        %1234 = vst.msk [vmem:[#allocation3 + $0x180] sm:$0xff] %vm1200, %v1137
        %1235 = vst.msk [vmem:[#allocation3 + $0x188] sm:$0xff] %vm1202, %v1137
        %1236 = vst.msk [vmem:[#allocation3 + $0x198] sm:$0xff] %vm1200, %v1139
        %1237 = vst.msk [vmem:[#allocation3 + $0x1a0] sm:$0xff] %vm1202, %v1139
        %1238 = vst.msk [vmem:[#allocation3 + $0x1b0] sm:$0xff] %vm1200, %v1141
        %1239 = vst.msk [vmem:[#allocation3 + $0x1b8] sm:$0xff] %vm1202, %v1141
        %1240 = vst.msk [vmem:[#allocation3 + $0x1c8] sm:$0xff] %vm1200, %v1143
        %1241 = vst.msk [vmem:[#allocation3 + $0x1d0] sm:$0xff] %vm1202, %v1143
        %1242 = vst.msk [vmem:[#allocation3 + $0x1e0] sm:$0xff] %vm1200, %v1145
        %1243 = vst.msk [vmem:[#allocation3 + $0x1e8] sm:$0xff] %vm1202, %v1145
        %1244 = vst.msk [vmem:[#allocation3 + $0x1f8] sm:$0xff] %vm1200, %v1147
        %1245 = vst.msk [vmem:[#allocation3 + $0x200] sm:$0xff] %vm1202, %v1147
        %1246 = vst.msk [vmem:[#allocation3 + $0x210] sm:$0xff] %vm1200, %v1149
        %1247 = vst.msk [vmem:[#allocation3 + $0x218] sm:$0xff] %vm1202, %v1149
        %1248 = vst.msk [vmem:[#allocation3 + $0x228] sm:$0xff] %vm1200, %v1151
        %1249 = vst.msk [vmem:[#allocation3 + $0x230] sm:$0xff] %vm1202, %v1151
        %1250 = vst.msk [vmem:[#allocation3 + $0x240] sm:$0xff] %vm1200, %v1153
        %1251 = vst.msk [vmem:[#allocation3 + $0x248] sm:$0xff] %vm1202, %v1153
        %1252 = vst.msk [vmem:[#allocation3 + $0x258] sm:$0xff] %vm1200, %v1155
        %1253 = vst.msk [vmem:[#allocation3 + $0x260] sm:$0xff] %vm1202, %v1155
        %1254 = vst.msk [vmem:[#allocation3 + $0x270] sm:$0xff] %vm1200, %v1157
        %1255 = vst.msk [vmem:[#allocation3 + $0x278] sm:$0xff] %vm1202, %v1157
        %1256 = vst.msk [vmem:[#allocation3 + $0x288] sm:$0xff] %vm1200, %v1159
        %1257 = vst.msk [vmem:[#allocation3 + $0x290] sm:$0xff] %vm1202, %v1159
        %1258 = vst.msk [vmem:[#allocation3 + $0x2a0] sm:$0xff] %vm1200, %v1161
        %1259 = vst.msk [vmem:[#allocation3 + $0x2a8] sm:$0xff] %vm1202, %v1161
        %1260 = vst.msk [vmem:[#allocation3 + $0x2b8] sm:$0xff] %vm1200, %v1163
        %1261 = vst.msk [vmem:[#allocation3 + $0x2c0] sm:$0xff] %vm1202, %v1163
        %1262 = vst.msk [vmem:[#allocation3 + $0x2d0] sm:$0xff] %vm1200, %v1165
        %1263 = vst.msk [vmem:[#allocation3 + $0x2d8] sm:$0xff] %vm1202, %v1165
        %1264 = vst.msk [vmem:[#allocation3 + $0x2e8] sm:$0xff] %vm1200, %v1167
        %1265 = vst.msk [vmem:[#allocation3 + $0x2f0] sm:$0xff] %vm1202, %v1167
        %v1266 = vld [vmem:[%s363 + $0x1] sm:$0xff]
        %v1267 = vld [vmem:[%s363 + $0x9] sm:$0xff]
        %v1268 = vld [vmem:[%s363 + $0x19] sm:$0xff]
        %v1269 = vld [vmem:[%s363 + $0x21] sm:$0xff]
        %v1270 = vld [vmem:[%s363 + $0x31] sm:$0xff]
        %v1271 = vld [vmem:[%s363 + $0x39] sm:$0xff]
        %v1272 = vld [vmem:[%s363 + $0x49] sm:$0xff]
        %v1273 = vld [vmem:[%s363 + $0x51] sm:$0xff]
        %v1274 = vld [vmem:[%s363 + $0x61] sm:$0xff]
        %v1275 = vld [vmem:[%s363 + $0x69] sm:$0xff]
        %v1276 = vld [vmem:[%s363 + $0x79] sm:$0xff]
        %v1277 = vld [vmem:[%s363 + $0x81] sm:$0xff]
        %v1278 = vld [vmem:[%s363 + $0x91] sm:$0xff]
        %v1279 = vld [vmem:[%s363 + $0x99] sm:$0xff]
        %v1280 = vld [vmem:[%s363 + $0xa9] sm:$0xff]
        %v1281 = vld [vmem:[%s363 + $0xb1] sm:$0xff]
        %v1282 = vld [vmem:[%s363 + $0xc1] sm:$0xff]
        %v1283 = vld [vmem:[%s363 + $0xc9] sm:$0xff]
        %v1284 = vld [vmem:[%s363 + $0xd9] sm:$0xff]
        %v1285 = vld [vmem:[%s363 + $0xe1] sm:$0xff]
        %v1286 = vld [vmem:[%s363 + $0xf1] sm:$0xff]
        %v1287 = vld [vmem:[%s363 + $0xf9] sm:$0xff]
        %v1288 = vld [vmem:[%s363 + $0x109] sm:$0xff]
        %v1289 = vld [vmem:[%s363 + $0x111] sm:$0xff]
        %v1290 = vld [vmem:[%s363 + $0x121] sm:$0xff]
        %v1291 = vld [vmem:[%s363 + $0x129] sm:$0xff]
        %v1292 = vld [vmem:[%s363 + $0x139] sm:$0xff]
        %v1293 = vld [vmem:[%s363 + $0x141] sm:$0xff]
        %v1294 = vld [vmem:[%s363 + $0x151] sm:$0xff]
        %v1295 = vld [vmem:[%s363 + $0x159] sm:$0xff]
        %v1296 = vld [vmem:[%s363 + $0x169] sm:$0xff]
        %v1297 = vld [vmem:[%s363 + $0x171] sm:$0xff]
        %1330 = vrot.lane.b32.xlu0 %v1266, 16
        %v1331 = vpop.permute.xlu0 %1330
        %1332 = vrot.lane.b32.xlu0 %v1267, 16
        %v1333 = vpop.permute.xlu0 %1332
        %1334 = vrot.lane.b32.xlu0 %v1268, 16
        %v1335 = vpop.permute.xlu0 %1334
        %1336 = vrot.lane.b32.xlu0 %v1269, 16
        %v1337 = vpop.permute.xlu0 %1336
        %1338 = vrot.lane.b32.xlu0 %v1270, 16
        %v1339 = vpop.permute.xlu0 %1338
        %1340 = vrot.lane.b32.xlu0 %v1271, 16
        %v1341 = vpop.permute.xlu0 %1340
        %1342 = vrot.lane.b32.xlu0 %v1272, 16
        %v1343 = vpop.permute.xlu0 %1342
        %1344 = vrot.lane.b32.xlu0 %v1273, 16
        %v1345 = vpop.permute.xlu0 %1344
        %1346 = vrot.lane.b32.xlu0 %v1274, 16
        %v1347 = vpop.permute.xlu0 %1346
        %1348 = vrot.lane.b32.xlu0 %v1275, 16
        %v1349 = vpop.permute.xlu0 %1348
        %1350 = vrot.lane.b32.xlu0 %v1276, 16
        %v1351 = vpop.permute.xlu0 %1350
        %1352 = vrot.lane.b32.xlu0 %v1277, 16
        %v1353 = vpop.permute.xlu0 %1352
        %1354 = vrot.lane.b32.xlu0 %v1278, 16
        %v1355 = vpop.permute.xlu0 %1354
        %1356 = vrot.lane.b32.xlu0 %v1279, 16
        %v1357 = vpop.permute.xlu0 %1356
        %1358 = vrot.lane.b32.xlu0 %v1280, 16
        %v1359 = vpop.permute.xlu0 %1358
        %1360 = vrot.lane.b32.xlu0 %v1281, 16
        %v1361 = vpop.permute.xlu0 %1360
        %1362 = vrot.lane.b32.xlu0 %v1282, 16
        %v1363 = vpop.permute.xlu0 %1362
        %1364 = vrot.lane.b32.xlu0 %v1283, 16
        %v1365 = vpop.permute.xlu0 %1364
        %1366 = vrot.lane.b32.xlu0 %v1284, 16
        %v1367 = vpop.permute.xlu0 %1366
        %1368 = vrot.lane.b32.xlu0 %v1285, 16
        %v1369 = vpop.permute.xlu0 %1368
        %1370 = vrot.lane.b32.xlu0 %v1286, 16
        %v1371 = vpop.permute.xlu0 %1370
        %1372 = vrot.lane.b32.xlu0 %v1287, 16
        %v1373 = vpop.permute.xlu0 %1372
        %1374 = vrot.lane.b32.xlu0 %v1288, 16
        %v1375 = vpop.permute.xlu0 %1374
        %1376 = vrot.lane.b32.xlu0 %v1289, 16
        %v1377 = vpop.permute.xlu0 %1376
        %1378 = vrot.lane.b32.xlu0 %v1290, 16
        %v1379 = vpop.permute.xlu0 %1378
        %1380 = vrot.lane.b32.xlu0 %v1291, 16
        %v1381 = vpop.permute.xlu0 %1380
        %1382 = vrot.lane.b32.xlu0 %v1292, 16
        %v1383 = vpop.permute.xlu0 %1382
        %1384 = vrot.lane.b32.xlu0 %v1293, 16
        %v1385 = vpop.permute.xlu0 %1384
        %1386 = vrot.lane.b32.xlu0 %v1294, 16
        %v1387 = vpop.permute.xlu0 %1386
        %1388 = vrot.lane.b32.xlu0 %v1295, 16
        %v1389 = vpop.permute.xlu0 %1388
        %1390 = vrot.lane.b32.xlu0 %v1296, 16
        %v1391 = vpop.permute.xlu0 %1390
        %1392 = vrot.lane.b32.xlu0 %v1297, 16
        %v1393 = vpop.permute.xlu0 %1392
        %vm1426 = vcmask 425088
        %1427 = vst.msk [vmem:[#allocation3 + $0x8] sm:$0xff] %vm1426, %v1331
        %1428 = vst.msk [vmem:[#allocation3 + $0x20] sm:$0xff] %vm1426, %v1333
        %1429 = vst.msk [vmem:[#allocation3 + $0x38] sm:$0xff] %vm1426, %v1335
        %1430 = vst.msk [vmem:[#allocation3 + $0x50] sm:$0xff] %vm1426, %v1337
        %1431 = vst.msk [vmem:[#allocation3 + $0x68] sm:$0xff] %vm1426, %v1339
        %1432 = vst.msk [vmem:[#allocation3 + $0x80] sm:$0xff] %vm1426, %v1341
        %1433 = vst.msk [vmem:[#allocation3 + $0x98] sm:$0xff] %vm1426, %v1343
        %1434 = vst.msk [vmem:[#allocation3 + $0xb0] sm:$0xff] %vm1426, %v1345
        %1435 = vst.msk [vmem:[#allocation3 + $0xc8] sm:$0xff] %vm1426, %v1347
        %1436 = vst.msk [vmem:[#allocation3 + $0xe0] sm:$0xff] %vm1426, %v1349
        %1437 = vst.msk [vmem:[#allocation3 + $0xf8] sm:$0xff] %vm1426, %v1351
        %1438 = vst.msk [vmem:[#allocation3 + $0x110] sm:$0xff] %vm1426, %v1353
        %1439 = vst.msk [vmem:[#allocation3 + $0x128] sm:$0xff] %vm1426, %v1355
        %1440 = vst.msk [vmem:[#allocation3 + $0x140] sm:$0xff] %vm1426, %v1357
        %1441 = vst.msk [vmem:[#allocation3 + $0x158] sm:$0xff] %vm1426, %v1359
        %1442 = vst.msk [vmem:[#allocation3 + $0x170] sm:$0xff] %vm1426, %v1361
        %1443 = vst.msk [vmem:[#allocation3 + $0x188] sm:$0xff] %vm1426, %v1363
        %1444 = vst.msk [vmem:[#allocation3 + $0x1a0] sm:$0xff] %vm1426, %v1365
        %1445 = vst.msk [vmem:[#allocation3 + $0x1b8] sm:$0xff] %vm1426, %v1367
        %1446 = vst.msk [vmem:[#allocation3 + $0x1d0] sm:$0xff] %vm1426, %v1369
        %1447 = vst.msk [vmem:[#allocation3 + $0x1e8] sm:$0xff] %vm1426, %v1371
        %1448 = vst.msk [vmem:[#allocation3 + $0x200] sm:$0xff] %vm1426, %v1373
        %1449 = vst.msk [vmem:[#allocation3 + $0x218] sm:$0xff] %vm1426, %v1375
        %1450 = vst.msk [vmem:[#allocation3 + $0x230] sm:$0xff] %vm1426, %v1377
        %1451 = vst.msk [vmem:[#allocation3 + $0x248] sm:$0xff] %vm1426, %v1379
        %1452 = vst.msk [vmem:[#allocation3 + $0x260] sm:$0xff] %vm1426, %v1381
        %1453 = vst.msk [vmem:[#allocation3 + $0x278] sm:$0xff] %vm1426, %v1383
        %1454 = vst.msk [vmem:[#allocation3 + $0x290] sm:$0xff] %vm1426, %v1385
        %1455 = vst.msk [vmem:[#allocation3 + $0x2a8] sm:$0xff] %vm1426, %v1387
        %1456 = vst.msk [vmem:[#allocation3 + $0x2c0] sm:$0xff] %vm1426, %v1389
        %1457 = vst.msk [vmem:[#allocation3 + $0x2d8] sm:$0xff] %vm1426, %v1391
        %1458 = vst.msk [vmem:[#allocation3 + $0x2f0] sm:$0xff] %vm1426, %v1393
        %v1459 = vld [vmem:[%s363 + $0x2] sm:$0xff]
        %v1460 = vld [vmem:[%s363 + $0xa] sm:$0xff]
        %v1461 = vld [vmem:[%s363 + $0x1a] sm:$0xff]
        %v1462 = vld [vmem:[%s363 + $0x22] sm:$0xff]
        %v1463 = vld [vmem:[%s363 + $0x32] sm:$0xff]
        %v1464 = vld [vmem:[%s363 + $0x3a] sm:$0xff]
        %v1465 = vld [vmem:[%s363 + $0x4a] sm:$0xff]
        %v1466 = vld [vmem:[%s363 + $0x52] sm:$0xff]
        %v1467 = vld [vmem:[%s363 + $0x62] sm:$0xff]
        %v1468 = vld [vmem:[%s363 + $0x6a] sm:$0xff]
        %v1469 = vld [vmem:[%s363 + $0x7a] sm:$0xff]
        %v1470 = vld [vmem:[%s363 + $0x82] sm:$0xff]
        %v1471 = vld [vmem:[%s363 + $0x92] sm:$0xff]
        %v1472 = vld [vmem:[%s363 + $0x9a] sm:$0xff]
        %v1473 = vld [vmem:[%s363 + $0xaa] sm:$0xff]
        %v1474 = vld [vmem:[%s363 + $0xb2] sm:$0xff]
        %v1475 = vld [vmem:[%s363 + $0xc2] sm:$0xff]
        %v1476 = vld [vmem:[%s363 + $0xca] sm:$0xff]
        %v1477 = vld [vmem:[%s363 + $0xda] sm:$0xff]
        %v1478 = vld [vmem:[%s363 + $0xe2] sm:$0xff]
        %v1479 = vld [vmem:[%s363 + $0xf2] sm:$0xff]
        %v1480 = vld [vmem:[%s363 + $0xfa] sm:$0xff]
        %v1481 = vld [vmem:[%s363 + $0x10a] sm:$0xff]
        %v1482 = vld [vmem:[%s363 + $0x112] sm:$0xff]
        %v1483 = vld [vmem:[%s363 + $0x122] sm:$0xff]
        %v1484 = vld [vmem:[%s363 + $0x12a] sm:$0xff]
        %v1485 = vld [vmem:[%s363 + $0x13a] sm:$0xff]
        %v1486 = vld [vmem:[%s363 + $0x142] sm:$0xff]
        %v1487 = vld [vmem:[%s363 + $0x152] sm:$0xff]
        %v1488 = vld [vmem:[%s363 + $0x15a] sm:$0xff]
        %v1489 = vld [vmem:[%s363 + $0x16a] sm:$0xff]
        %v1490 = vld [vmem:[%s363 + $0x172] sm:$0xff]
        %1523 = vrot.lane.b32.xlu0 %v1459, 52
        %v1524 = vpop.permute.xlu0 %1523
        %1525 = vrot.lane.b32.xlu0 %v1460, 52
        %v1526 = vpop.permute.xlu0 %1525
        %1527 = vrot.lane.b32.xlu0 %v1461, 52
        %v1528 = vpop.permute.xlu0 %1527
        %1529 = vrot.lane.b32.xlu0 %v1462, 52
        %v1530 = vpop.permute.xlu0 %1529
        %1531 = vrot.lane.b32.xlu0 %v1463, 52
        %v1532 = vpop.permute.xlu0 %1531
        %1533 = vrot.lane.b32.xlu0 %v1464, 52
        %v1534 = vpop.permute.xlu0 %1533
        %1535 = vrot.lane.b32.xlu0 %v1465, 52
        %v1536 = vpop.permute.xlu0 %1535
        %1537 = vrot.lane.b32.xlu0 %v1466, 52
        %v1538 = vpop.permute.xlu0 %1537
        %1539 = vrot.lane.b32.xlu0 %v1467, 52
        %v1540 = vpop.permute.xlu0 %1539
        %1541 = vrot.lane.b32.xlu0 %v1468, 52
        %v1542 = vpop.permute.xlu0 %1541
        %1543 = vrot.lane.b32.xlu0 %v1469, 52
        %v1544 = vpop.permute.xlu0 %1543
        %1545 = vrot.lane.b32.xlu0 %v1470, 52
        %v1546 = vpop.permute.xlu0 %1545
        %1547 = vrot.lane.b32.xlu0 %v1471, 52
        %v1548 = vpop.permute.xlu0 %1547
        %1549 = vrot.lane.b32.xlu0 %v1472, 52
        %v1550 = vpop.permute.xlu0 %1549
        %1551 = vrot.lane.b32.xlu0 %v1473, 52
        %v1552 = vpop.permute.xlu0 %1551
        %1553 = vrot.lane.b32.xlu0 %v1474, 52
        %v1554 = vpop.permute.xlu0 %1553
        %1555 = vrot.lane.b32.xlu0 %v1475, 52
        %v1556 = vpop.permute.xlu0 %1555
        %1557 = vrot.lane.b32.xlu0 %v1476, 52
        %v1558 = vpop.permute.xlu0 %1557
        %1559 = vrot.lane.b32.xlu0 %v1477, 52
        %v1560 = vpop.permute.xlu0 %1559
        %1561 = vrot.lane.b32.xlu0 %v1478, 52
        %v1562 = vpop.permute.xlu0 %1561
        %1563 = vrot.lane.b32.xlu0 %v1479, 52
        %v1564 = vpop.permute.xlu0 %1563
        %1565 = vrot.lane.b32.xlu0 %v1480, 52
        %v1566 = vpop.permute.xlu0 %1565
        %1567 = vrot.lane.b32.xlu0 %v1481, 52
        %v1568 = vpop.permute.xlu0 %1567
        %1569 = vrot.lane.b32.xlu0 %v1482, 52
        %v1570 = vpop.permute.xlu0 %1569
        %1571 = vrot.lane.b32.xlu0 %v1483, 52
        %v1572 = vpop.permute.xlu0 %1571
        %1573 = vrot.lane.b32.xlu0 %v1484, 52
        %v1574 = vpop.permute.xlu0 %1573
        %1575 = vrot.lane.b32.xlu0 %v1485, 52
        %v1576 = vpop.permute.xlu0 %1575
        %1577 = vrot.lane.b32.xlu0 %v1486, 52
        %v1578 = vpop.permute.xlu0 %1577
        %1579 = vrot.lane.b32.xlu0 %v1487, 52
        %v1580 = vpop.permute.xlu0 %1579
        %1581 = vrot.lane.b32.xlu0 %v1488, 52
        %v1582 = vpop.permute.xlu0 %1581
        %1583 = vrot.lane.b32.xlu0 %v1489, 52
        %v1584 = vpop.permute.xlu0 %1583
        %1585 = vrot.lane.b32.xlu0 %v1490, 52
        %v1586 = vpop.permute.xlu0 %1585
        %vm1619 = vcmask 720288
        %1620 = vst.msk [vmem:[#allocation3 + $0x8] sm:$0xff] %vm1619, %v1524
        %1621 = vst.msk [vmem:[#allocation3 + $0x20] sm:$0xff] %vm1619, %v1526
        %1622 = vst.msk [vmem:[#allocation3 + $0x38] sm:$0xff] %vm1619, %v1528
        %1623 = vst.msk [vmem:[#allocation3 + $0x50] sm:$0xff] %vm1619, %v1530
        %1624 = vst.msk [vmem:[#allocation3 + $0x68] sm:$0xff] %vm1619, %v1532
        %1625 = vst.msk [vmem:[#allocation3 + $0x80] sm:$0xff] %vm1619, %v1534
        %1626 = vst.msk [vmem:[#allocation3 + $0x98] sm:$0xff] %vm1619, %v1536
        %1627 = vst.msk [vmem:[#allocation3 + $0xb0] sm:$0xff] %vm1619, %v1538
        %1628 = vst.msk [vmem:[#allocation3 + $0xc8] sm:$0xff] %vm1619, %v1540
        %1629 = vst.msk [vmem:[#allocation3 + $0xe0] sm:$0xff] %vm1619, %v1542
        %1630 = vst.msk [vmem:[#allocation3 + $0xf8] sm:$0xff] %vm1619, %v1544
        %1631 = vst.msk [vmem:[#allocation3 + $0x110] sm:$0xff] %vm1619, %v1546
        %1632 = vst.msk [vmem:[#allocation3 + $0x128] sm:$0xff] %vm1619, %v1548
        %1633 = vst.msk [vmem:[#allocation3 + $0x140] sm:$0xff] %vm1619, %v1550
        %1634 = vst.msk [vmem:[#allocation3 + $0x158] sm:$0xff] %vm1619, %v1552
        %1635 = vst.msk [vmem:[#allocation3 + $0x170] sm:$0xff] %vm1619, %v1554
        %1636 = vst.msk [vmem:[#allocation3 + $0x188] sm:$0xff] %vm1619, %v1556
        %1637 = vst.msk [vmem:[#allocation3 + $0x1a0] sm:$0xff] %vm1619, %v1558
        %1638 = vst.msk [vmem:[#allocation3 + $0x1b8] sm:$0xff] %vm1619, %v1560
        %1639 = vst.msk [vmem:[#allocation3 + $0x1d0] sm:$0xff] %vm1619, %v1562
        %1640 = vst.msk [vmem:[#allocation3 + $0x1e8] sm:$0xff] %vm1619, %v1564
        %1641 = vst.msk [vmem:[#allocation3 + $0x200] sm:$0xff] %vm1619, %v1566
        %1642 = vst.msk [vmem:[#allocation3 + $0x218] sm:$0xff] %vm1619, %v1568
        %1643 = vst.msk [vmem:[#allocation3 + $0x230] sm:$0xff] %vm1619, %v1570
        %1644 = vst.msk [vmem:[#allocation3 + $0x248] sm:$0xff] %vm1619, %v1572
        %1645 = vst.msk [vmem:[#allocation3 + $0x260] sm:$0xff] %vm1619, %v1574
        %1646 = vst.msk [vmem:[#allocation3 + $0x278] sm:$0xff] %vm1619, %v1576
        %1647 = vst.msk [vmem:[#allocation3 + $0x290] sm:$0xff] %vm1619, %v1578
        %1648 = vst.msk [vmem:[#allocation3 + $0x2a8] sm:$0xff] %vm1619, %v1580
        %1649 = vst.msk [vmem:[#allocation3 + $0x2c0] sm:$0xff] %vm1619, %v1582
        %1650 = vst.msk [vmem:[#allocation3 + $0x2d8] sm:$0xff] %vm1619, %v1584
        %1651 = vst.msk [vmem:[#allocation3 + $0x2f0] sm:$0xff] %vm1619, %v1586
        %s1652 = scalar_lea.vmem [#allocation2], 48
        %v1653 = vld [vmem:[%s1652] sm:$0xff]
        %v1654 = vld [vmem:[%s1652 + $0x8] sm:$0xff]
        %v1655 = vld [vmem:[%s1652 + $0x18] sm:$0xff]
        %v1656 = vld [vmem:[%s1652 + $0x20] sm:$0xff]
        %v1657 = vld [vmem:[%s1652 + $0x30] sm:$0xff]
        %v1658 = vld [vmem:[%s1652 + $0x38] sm:$0xff]
        %v1659 = vld [vmem:[%s1652 + $0x48] sm:$0xff]
        %v1660 = vld [vmem:[%s1652 + $0x50] sm:$0xff]
        %v1661 = vld [vmem:[%s1652 + $0x60] sm:$0xff]
        %v1662 = vld [vmem:[%s1652 + $0x68] sm:$0xff]
        %v1663 = vld [vmem:[%s1652 + $0x78] sm:$0xff]
        %v1664 = vld [vmem:[%s1652 + $0x80] sm:$0xff]
        %v1665 = vld [vmem:[%s1652 + $0x90] sm:$0xff]
        %v1666 = vld [vmem:[%s1652 + $0x98] sm:$0xff]
        %v1667 = vld [vmem:[%s1652 + $0xa8] sm:$0xff]
        %v1668 = vld [vmem:[%s1652 + $0xb0] sm:$0xff]
        %v1669 = vld [vmem:[%s1652 + $0xc0] sm:$0xff]
        %v1670 = vld [vmem:[%s1652 + $0xc8] sm:$0xff]
        %v1671 = vld [vmem:[%s1652 + $0xd8] sm:$0xff]
        %v1672 = vld [vmem:[%s1652 + $0xe0] sm:$0xff]
        %v1673 = vld [vmem:[%s1652 + $0xf0] sm:$0xff]
        %v1674 = vld [vmem:[%s1652 + $0xf8] sm:$0xff]
        %v1675 = vld [vmem:[%s1652 + $0x108] sm:$0xff]
        %v1676 = vld [vmem:[%s1652 + $0x110] sm:$0xff]
        %v1677 = vld [vmem:[%s1652 + $0x120] sm:$0xff]
        %v1678 = vld [vmem:[%s1652 + $0x128] sm:$0xff]
        %v1679 = vld [vmem:[%s1652 + $0x138] sm:$0xff]
        %v1680 = vld [vmem:[%s1652 + $0x140] sm:$0xff]
        %v1681 = vld [vmem:[%s1652 + $0x150] sm:$0xff]
        %v1682 = vld [vmem:[%s1652 + $0x158] sm:$0xff]
        %v1683 = vld [vmem:[%s1652 + $0x168] sm:$0xff]
        %v1684 = vld [vmem:[%s1652 + $0x170] sm:$0xff]
        %1717 = vrot.lane.b32.xlu0 %v1653, 88
        %v1718 = vpop.permute.xlu0 %1717
        %1719 = vrot.lane.b32.xlu0 %v1654, 88
        %v1720 = vpop.permute.xlu0 %1719
        %1721 = vrot.lane.b32.xlu0 %v1655, 88
        %v1722 = vpop.permute.xlu0 %1721
        %1723 = vrot.lane.b32.xlu0 %v1656, 88
        %v1724 = vpop.permute.xlu0 %1723
        %1725 = vrot.lane.b32.xlu0 %v1657, 88
        %v1726 = vpop.permute.xlu0 %1725
        %1727 = vrot.lane.b32.xlu0 %v1658, 88
        %v1728 = vpop.permute.xlu0 %1727
        %1729 = vrot.lane.b32.xlu0 %v1659, 88
        %v1730 = vpop.permute.xlu0 %1729
        %1731 = vrot.lane.b32.xlu0 %v1660, 88
        %v1732 = vpop.permute.xlu0 %1731
        %1733 = vrot.lane.b32.xlu0 %v1661, 88
        %v1734 = vpop.permute.xlu0 %1733
        %1735 = vrot.lane.b32.xlu0 %v1662, 88
        %v1736 = vpop.permute.xlu0 %1735
        %1737 = vrot.lane.b32.xlu0 %v1663, 88
        %v1738 = vpop.permute.xlu0 %1737
        %1739 = vrot.lane.b32.xlu0 %v1664, 88
        %v1740 = vpop.permute.xlu0 %1739
        %1741 = vrot.lane.b32.xlu0 %v1665, 88
        %v1742 = vpop.permute.xlu0 %1741
        %1743 = vrot.lane.b32.xlu0 %v1666, 88
        %v1744 = vpop.permute.xlu0 %1743
        %1745 = vrot.lane.b32.xlu0 %v1667, 88
        %v1746 = vpop.permute.xlu0 %1745
        %1747 = vrot.lane.b32.xlu0 %v1668, 88
        %v1748 = vpop.permute.xlu0 %1747
        %1749 = vrot.lane.b32.xlu0 %v1669, 88
        %v1750 = vpop.permute.xlu0 %1749
        %1751 = vrot.lane.b32.xlu0 %v1670, 88
        %v1752 = vpop.permute.xlu0 %1751
        %1753 = vrot.lane.b32.xlu0 %v1671, 88
        %v1754 = vpop.permute.xlu0 %1753
        %1755 = vrot.lane.b32.xlu0 %v1672, 88
        %v1756 = vpop.permute.xlu0 %1755
        %1757 = vrot.lane.b32.xlu0 %v1673, 88
        %v1758 = vpop.permute.xlu0 %1757
        %1759 = vrot.lane.b32.xlu0 %v1674, 88
        %v1760 = vpop.permute.xlu0 %1759
        %1761 = vrot.lane.b32.xlu0 %v1675, 88
        %v1762 = vpop.permute.xlu0 %1761
        %1763 = vrot.lane.b32.xlu0 %v1676, 88
        %v1764 = vpop.permute.xlu0 %1763
        %1765 = vrot.lane.b32.xlu0 %v1677, 88
        %v1766 = vpop.permute.xlu0 %1765
        %1767 = vrot.lane.b32.xlu0 %v1678, 88
        %v1768 = vpop.permute.xlu0 %1767
        %1769 = vrot.lane.b32.xlu0 %v1679, 88
        %v1770 = vpop.permute.xlu0 %1769
        %1771 = vrot.lane.b32.xlu0 %v1680, 88
        %v1772 = vpop.permute.xlu0 %1771
        %1773 = vrot.lane.b32.xlu0 %v1681, 88
        %v1774 = vpop.permute.xlu0 %1773
        %1775 = vrot.lane.b32.xlu0 %v1682, 88
        %v1776 = vpop.permute.xlu0 %1775
        %1777 = vrot.lane.b32.xlu0 %v1683, 88
        %v1778 = vpop.permute.xlu0 %1777
        %1779 = vrot.lane.b32.xlu0 %v1684, 88
        %v1780 = vpop.permute.xlu0 %1779
        %vm1813 = vcmask 1015488
        %1814 = vst.msk [vmem:[#allocation3 + $0x8] sm:$0xff] %vm1813, %v1718
        %1815 = vst.msk [vmem:[#allocation3 + $0x20] sm:$0xff] %vm1813, %v1720
        %1816 = vst.msk [vmem:[#allocation3 + $0x38] sm:$0xff] %vm1813, %v1722
        %1817 = vst.msk [vmem:[#allocation3 + $0x50] sm:$0xff] %vm1813, %v1724
        %1818 = vst.msk [vmem:[#allocation3 + $0x68] sm:$0xff] %vm1813, %v1726
        %1819 = vst.msk [vmem:[#allocation3 + $0x80] sm:$0xff] %vm1813, %v1728
        %1820 = vst.msk [vmem:[#allocation3 + $0x98] sm:$0xff] %vm1813, %v1730
        %1821 = vst.msk [vmem:[#allocation3 + $0xb0] sm:$0xff] %vm1813, %v1732
        %1822 = vst.msk [vmem:[#allocation3 + $0xc8] sm:$0xff] %vm1813, %v1734
        %1823 = vst.msk [vmem:[#allocation3 + $0xe0] sm:$0xff] %vm1813, %v1736
        %1824 = vst.msk [vmem:[#allocation3 + $0xf8] sm:$0xff] %vm1813, %v1738
        %1825 = vst.msk [vmem:[#allocation3 + $0x110] sm:$0xff] %vm1813, %v1740
        %1826 = vst.msk [vmem:[#allocation3 + $0x128] sm:$0xff] %vm1813, %v1742
        %1827 = vst.msk [vmem:[#allocation3 + $0x140] sm:$0xff] %vm1813, %v1744
        %1828 = vst.msk [vmem:[#allocation3 + $0x158] sm:$0xff] %vm1813, %v1746
        %1829 = vst.msk [vmem:[#allocation3 + $0x170] sm:$0xff] %vm1813, %v1748
        %1830 = vst.msk [vmem:[#allocation3 + $0x188] sm:$0xff] %vm1813, %v1750
        %1831 = vst.msk [vmem:[#allocation3 + $0x1a0] sm:$0xff] %vm1813, %v1752
        %1832 = vst.msk [vmem:[#allocation3 + $0x1b8] sm:$0xff] %vm1813, %v1754
        %1833 = vst.msk [vmem:[#allocation3 + $0x1d0] sm:$0xff] %vm1813, %v1756
        %1834 = vst.msk [vmem:[#allocation3 + $0x1e8] sm:$0xff] %vm1813, %v1758
        %1835 = vst.msk [vmem:[#allocation3 + $0x200] sm:$0xff] %vm1813, %v1760
        %1836 = vst.msk [vmem:[#allocation3 + $0x218] sm:$0xff] %vm1813, %v1762
        %1837 = vst.msk [vmem:[#allocation3 + $0x230] sm:$0xff] %vm1813, %v1764
        %1838 = vst.msk [vmem:[#allocation3 + $0x248] sm:$0xff] %vm1813, %v1766
        %1839 = vst.msk [vmem:[#allocation3 + $0x260] sm:$0xff] %vm1813, %v1768
        %1840 = vst.msk [vmem:[#allocation3 + $0x278] sm:$0xff] %vm1813, %v1770
        %1841 = vst.msk [vmem:[#allocation3 + $0x290] sm:$0xff] %vm1813, %v1772
        %1842 = vst.msk [vmem:[#allocation3 + $0x2a8] sm:$0xff] %vm1813, %v1774
        %1843 = vst.msk [vmem:[#allocation3 + $0x2c0] sm:$0xff] %vm1813, %v1776
        %1844 = vst.msk [vmem:[#allocation3 + $0x2d8] sm:$0xff] %vm1813, %v1778
        %1845 = vst.msk [vmem:[#allocation3 + $0x2f0] sm:$0xff] %vm1813, %v1780
        %v1846 = vld [vmem:[%s1652 + $0x1] sm:$0xff]
        %v1847 = vld [vmem:[%s1652 + $0x9] sm:$0xff]
        %v1848 = vld [vmem:[%s1652 + $0x19] sm:$0xff]
        %v1849 = vld [vmem:[%s1652 + $0x21] sm:$0xff]
        %v1850 = vld [vmem:[%s1652 + $0x31] sm:$0xff]
        %v1851 = vld [vmem:[%s1652 + $0x39] sm:$0xff]
        %v1852 = vld [vmem:[%s1652 + $0x49] sm:$0xff]
        %v1853 = vld [vmem:[%s1652 + $0x51] sm:$0xff]
        %v1854 = vld [vmem:[%s1652 + $0x61] sm:$0xff]
        %v1855 = vld [vmem:[%s1652 + $0x69] sm:$0xff]
        %v1856 = vld [vmem:[%s1652 + $0x79] sm:$0xff]
        %v1857 = vld [vmem:[%s1652 + $0x81] sm:$0xff]
        %v1858 = vld [vmem:[%s1652 + $0x91] sm:$0xff]
        %v1859 = vld [vmem:[%s1652 + $0x99] sm:$0xff]
        %v1860 = vld [vmem:[%s1652 + $0xa9] sm:$0xff]
        %v1861 = vld [vmem:[%s1652 + $0xb1] sm:$0xff]
        %v1862 = vld [vmem:[%s1652 + $0xc1] sm:$0xff]
        %v1863 = vld [vmem:[%s1652 + $0xc9] sm:$0xff]
        %v1864 = vld [vmem:[%s1652 + $0xd9] sm:$0xff]
        %v1865 = vld [vmem:[%s1652 + $0xe1] sm:$0xff]
        %v1866 = vld [vmem:[%s1652 + $0xf1] sm:$0xff]
        %v1867 = vld [vmem:[%s1652 + $0xf9] sm:$0xff]
        %v1868 = vld [vmem:[%s1652 + $0x109] sm:$0xff]
        %v1869 = vld [vmem:[%s1652 + $0x111] sm:$0xff]
        %v1870 = vld [vmem:[%s1652 + $0x121] sm:$0xff]
        %v1871 = vld [vmem:[%s1652 + $0x129] sm:$0xff]
        %v1872 = vld [vmem:[%s1652 + $0x139] sm:$0xff]
        %v1873 = vld [vmem:[%s1652 + $0x141] sm:$0xff]
        %v1874 = vld [vmem:[%s1652 + $0x151] sm:$0xff]
        %v1875 = vld [vmem:[%s1652 + $0x159] sm:$0xff]
        %v1876 = vld [vmem:[%s1652 + $0x169] sm:$0xff]
        %v1877 = vld [vmem:[%s1652 + $0x171] sm:$0xff]
        %1910 = vrot.lane.b32.xlu0 %v1846, 124
        %v1911 = vpop.permute.xlu0 %1910
        %1912 = vrot.lane.b32.xlu0 %v1847, 124
        %v1913 = vpop.permute.xlu0 %1912
        %1914 = vrot.lane.b32.xlu0 %v1848, 124
        %v1915 = vpop.permute.xlu0 %1914
        %1916 = vrot.lane.b32.xlu0 %v1849, 124
        %v1917 = vpop.permute.xlu0 %1916
        %1918 = vrot.lane.b32.xlu0 %v1850, 124
        %v1919 = vpop.permute.xlu0 %1918
        %1920 = vrot.lane.b32.xlu0 %v1851, 124
        %v1921 = vpop.permute.xlu0 %1920
        %1922 = vrot.lane.b32.xlu0 %v1852, 124
        %v1923 = vpop.permute.xlu0 %1922
        %1924 = vrot.lane.b32.xlu0 %v1853, 124
        %v1925 = vpop.permute.xlu0 %1924
        %1926 = vrot.lane.b32.xlu0 %v1854, 124
        %v1927 = vpop.permute.xlu0 %1926
        %1928 = vrot.lane.b32.xlu0 %v1855, 124
        %v1929 = vpop.permute.xlu0 %1928
        %1930 = vrot.lane.b32.xlu0 %v1856, 124
        %v1931 = vpop.permute.xlu0 %1930
        %1932 = vrot.lane.b32.xlu0 %v1857, 124
        %v1933 = vpop.permute.xlu0 %1932
        %1934 = vrot.lane.b32.xlu0 %v1858, 124
        %v1935 = vpop.permute.xlu0 %1934
        %1936 = vrot.lane.b32.xlu0 %v1859, 124
        %v1937 = vpop.permute.xlu0 %1936
        %1938 = vrot.lane.b32.xlu0 %v1860, 124
        %v1939 = vpop.permute.xlu0 %1938
        %1940 = vrot.lane.b32.xlu0 %v1861, 124
        %v1941 = vpop.permute.xlu0 %1940
        %1942 = vrot.lane.b32.xlu0 %v1862, 124
        %v1943 = vpop.permute.xlu0 %1942
        %1944 = vrot.lane.b32.xlu0 %v1863, 124
        %v1945 = vpop.permute.xlu0 %1944
        %1946 = vrot.lane.b32.xlu0 %v1864, 124
        %v1947 = vpop.permute.xlu0 %1946
        %1948 = vrot.lane.b32.xlu0 %v1865, 124
        %v1949 = vpop.permute.xlu0 %1948
        %1950 = vrot.lane.b32.xlu0 %v1866, 124
        %v1951 = vpop.permute.xlu0 %1950
        %1952 = vrot.lane.b32.xlu0 %v1867, 124
        %v1953 = vpop.permute.xlu0 %1952
        %1954 = vrot.lane.b32.xlu0 %v1868, 124
        %v1955 = vpop.permute.xlu0 %1954
        %1956 = vrot.lane.b32.xlu0 %v1869, 124
        %v1957 = vpop.permute.xlu0 %1956
        %1958 = vrot.lane.b32.xlu0 %v1870, 124
        %v1959 = vpop.permute.xlu0 %1958
        %1960 = vrot.lane.b32.xlu0 %v1871, 124
        %v1961 = vpop.permute.xlu0 %1960
        %1962 = vrot.lane.b32.xlu0 %v1872, 124
        %v1963 = vpop.permute.xlu0 %1962
        %1964 = vrot.lane.b32.xlu0 %v1873, 124
        %v1965 = vpop.permute.xlu0 %1964
        %1966 = vrot.lane.b32.xlu0 %v1874, 124
        %v1967 = vpop.permute.xlu0 %1966
        %1968 = vrot.lane.b32.xlu0 %v1875, 124
        %v1969 = vpop.permute.xlu0 %1968
        %1970 = vrot.lane.b32.xlu0 %v1876, 124
        %v1971 = vpop.permute.xlu0 %1970
        %1972 = vrot.lane.b32.xlu0 %v1877, 124
        %v1973 = vpop.permute.xlu0 %1972
        %vm2006 = vcmask 1048544
        %2007 = vst.msk [vmem:[#allocation3 + $0x8] sm:$0xff] %vm2006, %v1911
        %vm2008 = vcmask 261120
        %2009 = vst.msk [vmem:[#allocation3 + $0x10] sm:$0xff] %vm2008, %v1911
        %2010 = vst.msk [vmem:[#allocation3 + $0x20] sm:$0xff] %vm2006, %v1913
        %2011 = vst.msk [vmem:[#allocation3 + $0x28] sm:$0xff] %vm2008, %v1913
        %2012 = vst.msk [vmem:[#allocation3 + $0x38] sm:$0xff] %vm2006, %v1915
        %2013 = vst.msk [vmem:[#allocation3 + $0x40] sm:$0xff] %vm2008, %v1915
        %2014 = vst.msk [vmem:[#allocation3 + $0x50] sm:$0xff] %vm2006, %v1917
        %2015 = vst.msk [vmem:[#allocation3 + $0x58] sm:$0xff] %vm2008, %v1917
        %2016 = vst.msk [vmem:[#allocation3 + $0x68] sm:$0xff] %vm2006, %v1919
        %2017 = vst.msk [vmem:[#allocation3 + $0x70] sm:$0xff] %vm2008, %v1919
        %2018 = vst.msk [vmem:[#allocation3 + $0x80] sm:$0xff] %vm2006, %v1921
        %2019 = vst.msk [vmem:[#allocation3 + $0x88] sm:$0xff] %vm2008, %v1921
        %2020 = vst.msk [vmem:[#allocation3 + $0x98] sm:$0xff] %vm2006, %v1923
        %2021 = vst.msk [vmem:[#allocation3 + $0xa0] sm:$0xff] %vm2008, %v1923
        %2022 = vst.msk [vmem:[#allocation3 + $0xb0] sm:$0xff] %vm2006, %v1925
        %2023 = vst.msk [vmem:[#allocation3 + $0xb8] sm:$0xff] %vm2008, %v1925
        %2024 = vst.msk [vmem:[#allocation3 + $0xc8] sm:$0xff] %vm2006, %v1927
        %2025 = vst.msk [vmem:[#allocation3 + $0xd0] sm:$0xff] %vm2008, %v1927
        %2026 = vst.msk [vmem:[#allocation3 + $0xe0] sm:$0xff] %vm2006, %v1929
        %2027 = vst.msk [vmem:[#allocation3 + $0xe8] sm:$0xff] %vm2008, %v1929
        %2028 = vst.msk [vmem:[#allocation3 + $0xf8] sm:$0xff] %vm2006, %v1931
        %2029 = vst.msk [vmem:[#allocation3 + $0x100] sm:$0xff] %vm2008, %v1931
        %2030 = vst.msk [vmem:[#allocation3 + $0x110] sm:$0xff] %vm2006, %v1933
        %2031 = vst.msk [vmem:[#allocation3 + $0x118] sm:$0xff] %vm2008, %v1933
        %2032 = vst.msk [vmem:[#allocation3 + $0x128] sm:$0xff] %vm2006, %v1935
        %2033 = vst.msk [vmem:[#allocation3 + $0x130] sm:$0xff] %vm2008, %v1935
        %2034 = vst.msk [vmem:[#allocation3 + $0x140] sm:$0xff] %vm2006, %v1937
        %2035 = vst.msk [vmem:[#allocation3 + $0x148] sm:$0xff] %vm2008, %v1937
        %2036 = vst.msk [vmem:[#allocation3 + $0x158] sm:$0xff] %vm2006, %v1939
        %2037 = vst.msk [vmem:[#allocation3 + $0x160] sm:$0xff] %vm2008, %v1939
        %2038 = vst.msk [vmem:[#allocation3 + $0x170] sm:$0xff] %vm2006, %v1941
        %2039 = vst.msk [vmem:[#allocation3 + $0x178] sm:$0xff] %vm2008, %v1941
        %2040 = vst.msk [vmem:[#allocation3 + $0x188] sm:$0xff] %vm2006, %v1943
        %2041 = vst.msk [vmem:[#allocation3 + $0x190] sm:$0xff] %vm2008, %v1943
        %2042 = vst.msk [vmem:[#allocation3 + $0x1a0] sm:$0xff] %vm2006, %v1945
        %2043 = vst.msk [vmem:[#allocation3 + $0x1a8] sm:$0xff] %vm2008, %v1945
        %2044 = vst.msk [vmem:[#allocation3 + $0x1b8] sm:$0xff] %vm2006, %v1947
        %2045 = vst.msk [vmem:[#allocation3 + $0x1c0] sm:$0xff] %vm2008, %v1947
        %2046 = vst.msk [vmem:[#allocation3 + $0x1d0] sm:$0xff] %vm2006, %v1949
        %2047 = vst.msk [vmem:[#allocation3 + $0x1d8] sm:$0xff] %vm2008, %v1949
        %2048 = vst.msk [vmem:[#allocation3 + $0x1e8] sm:$0xff] %vm2006, %v1951
        %2049 = vst.msk [vmem:[#allocation3 + $0x1f0] sm:$0xff] %vm2008, %v1951
        %2050 = vst.msk [vmem:[#allocation3 + $0x200] sm:$0xff] %vm2006, %v1953
        %2051 = vst.msk [vmem:[#allocation3 + $0x208] sm:$0xff] %vm2008, %v1953
        %2052 = vst.msk [vmem:[#allocation3 + $0x218] sm:$0xff] %vm2006, %v1955
        %2053 = vst.msk [vmem:[#allocation3 + $0x220] sm:$0xff] %vm2008, %v1955
        %2054 = vst.msk [vmem:[#allocation3 + $0x230] sm:$0xff] %vm2006, %v1957
        %2055 = vst.msk [vmem:[#allocation3 + $0x238] sm:$0xff] %vm2008, %v1957
        %2056 = vst.msk [vmem:[#allocation3 + $0x248] sm:$0xff] %vm2006, %v1959
        %2057 = vst.msk [vmem:[#allocation3 + $0x250] sm:$0xff] %vm2008, %v1959
        %2058 = vst.msk [vmem:[#allocation3 + $0x260] sm:$0xff] %vm2006, %v1961
        %2059 = vst.msk [vmem:[#allocation3 + $0x268] sm:$0xff] %vm2008, %v1961
        %2060 = vst.msk [vmem:[#allocation3 + $0x278] sm:$0xff] %vm2006, %v1963
        %2061 = vst.msk [vmem:[#allocation3 + $0x280] sm:$0xff] %vm2008, %v1963
        %2062 = vst.msk [vmem:[#allocation3 + $0x290] sm:$0xff] %vm2006, %v1965
        %2063 = vst.msk [vmem:[#allocation3 + $0x298] sm:$0xff] %vm2008, %v1965
        %2064 = vst.msk [vmem:[#allocation3 + $0x2a8] sm:$0xff] %vm2006, %v1967
        %2065 = vst.msk [vmem:[#allocation3 + $0x2b0] sm:$0xff] %vm2008, %v1967
        %2066 = vst.msk [vmem:[#allocation3 + $0x2c0] sm:$0xff] %vm2006, %v1969
        %2067 = vst.msk [vmem:[#allocation3 + $0x2c8] sm:$0xff] %vm2008, %v1969
        %2068 = vst.msk [vmem:[#allocation3 + $0x2d8] sm:$0xff] %vm2006, %v1971
        %2069 = vst.msk [vmem:[#allocation3 + $0x2e0] sm:$0xff] %vm2008, %v1971
        %2070 = vst.msk [vmem:[#allocation3 + $0x2f0] sm:$0xff] %vm2006, %v1973
        %2071 = vst.msk [vmem:[#allocation3 + $0x2f8] sm:$0xff] %vm2008, %v1973
        %v2072 = vld [vmem:[%s1652 + $0x2] sm:$0xff]
        %v2073 = vld [vmem:[%s1652 + $0xa] sm:$0xff]
        %v2074 = vld [vmem:[%s1652 + $0x1a] sm:$0xff]
        %v2075 = vld [vmem:[%s1652 + $0x22] sm:$0xff]
        %v2076 = vld [vmem:[%s1652 + $0x32] sm:$0xff]
        %v2077 = vld [vmem:[%s1652 + $0x3a] sm:$0xff]
        %v2078 = vld [vmem:[%s1652 + $0x4a] sm:$0xff]
        %v2079 = vld [vmem:[%s1652 + $0x52] sm:$0xff]
        %v2080 = vld [vmem:[%s1652 + $0x62] sm:$0xff]
        %v2081 = vld [vmem:[%s1652 + $0x6a] sm:$0xff]
        %v2082 = vld [vmem:[%s1652 + $0x7a] sm:$0xff]
        %v2083 = vld [vmem:[%s1652 + $0x82] sm:$0xff]
        %v2084 = vld [vmem:[%s1652 + $0x92] sm:$0xff]
        %v2085 = vld [vmem:[%s1652 + $0x9a] sm:$0xff]
        %v2086 = vld [vmem:[%s1652 + $0xaa] sm:$0xff]
        %v2087 = vld [vmem:[%s1652 + $0xb2] sm:$0xff]
        %v2088 = vld [vmem:[%s1652 + $0xc2] sm:$0xff]
        %v2089 = vld [vmem:[%s1652 + $0xca] sm:$0xff]
        %v2090 = vld [vmem:[%s1652 + $0xda] sm:$0xff]
        %v2091 = vld [vmem:[%s1652 + $0xe2] sm:$0xff]
        %v2092 = vld [vmem:[%s1652 + $0xf2] sm:$0xff]
        %v2093 = vld [vmem:[%s1652 + $0xfa] sm:$0xff]
        %v2094 = vld [vmem:[%s1652 + $0x10a] sm:$0xff]
        %v2095 = vld [vmem:[%s1652 + $0x112] sm:$0xff]
        %v2096 = vld [vmem:[%s1652 + $0x122] sm:$0xff]
        %v2097 = vld [vmem:[%s1652 + $0x12a] sm:$0xff]
        %v2098 = vld [vmem:[%s1652 + $0x13a] sm:$0xff]
        %v2099 = vld [vmem:[%s1652 + $0x142] sm:$0xff]
        %v2100 = vld [vmem:[%s1652 + $0x152] sm:$0xff]
        %v2101 = vld [vmem:[%s1652 + $0x15a] sm:$0xff]
        %v2102 = vld [vmem:[%s1652 + $0x16a] sm:$0xff]
        %v2103 = vld [vmem:[%s1652 + $0x172] sm:$0xff]
        %2136 = vrot.lane.b32.xlu0 %v2072, 32
        %v2137 = vpop.permute.xlu0 %2136
        %2138 = vrot.lane.b32.xlu0 %v2073, 32
        %v2139 = vpop.permute.xlu0 %2138
        %2140 = vrot.lane.b32.xlu0 %v2074, 32
        %v2141 = vpop.permute.xlu0 %2140
        %2142 = vrot.lane.b32.xlu0 %v2075, 32
        %v2143 = vpop.permute.xlu0 %2142
        %2144 = vrot.lane.b32.xlu0 %v2076, 32
        %v2145 = vpop.permute.xlu0 %2144
        %2146 = vrot.lane.b32.xlu0 %v2077, 32
        %v2147 = vpop.permute.xlu0 %2146
        %2148 = vrot.lane.b32.xlu0 %v2078, 32
        %v2149 = vpop.permute.xlu0 %2148
        %2150 = vrot.lane.b32.xlu0 %v2079, 32
        %v2151 = vpop.permute.xlu0 %2150
        %2152 = vrot.lane.b32.xlu0 %v2080, 32
        %v2153 = vpop.permute.xlu0 %2152
        %2154 = vrot.lane.b32.xlu0 %v2081, 32
        %v2155 = vpop.permute.xlu0 %2154
        %2156 = vrot.lane.b32.xlu0 %v2082, 32
        %v2157 = vpop.permute.xlu0 %2156
        %2158 = vrot.lane.b32.xlu0 %v2083, 32
        %v2159 = vpop.permute.xlu0 %2158
        %2160 = vrot.lane.b32.xlu0 %v2084, 32
        %v2161 = vpop.permute.xlu0 %2160
        %2162 = vrot.lane.b32.xlu0 %v2085, 32
        %v2163 = vpop.permute.xlu0 %2162
        %2164 = vrot.lane.b32.xlu0 %v2086, 32
        %v2165 = vpop.permute.xlu0 %2164
        %2166 = vrot.lane.b32.xlu0 %v2087, 32
        %v2167 = vpop.permute.xlu0 %2166
        %2168 = vrot.lane.b32.xlu0 %v2088, 32
        %v2169 = vpop.permute.xlu0 %2168
        %2170 = vrot.lane.b32.xlu0 %v2089, 32
        %v2171 = vpop.permute.xlu0 %2170
        %2172 = vrot.lane.b32.xlu0 %v2090, 32
        %v2173 = vpop.permute.xlu0 %2172
        %2174 = vrot.lane.b32.xlu0 %v2091, 32
        %v2175 = vpop.permute.xlu0 %2174
        %2176 = vrot.lane.b32.xlu0 %v2092, 32
        %v2177 = vpop.permute.xlu0 %2176
        %2178 = vrot.lane.b32.xlu0 %v2093, 32
        %v2179 = vpop.permute.xlu0 %2178
        %2180 = vrot.lane.b32.xlu0 %v2094, 32
        %v2181 = vpop.permute.xlu0 %2180
        %2182 = vrot.lane.b32.xlu0 %v2095, 32
        %v2183 = vpop.permute.xlu0 %2182
        %2184 = vrot.lane.b32.xlu0 %v2096, 32
        %v2185 = vpop.permute.xlu0 %2184
        %2186 = vrot.lane.b32.xlu0 %v2097, 32
        %v2187 = vpop.permute.xlu0 %2186
        %2188 = vrot.lane.b32.xlu0 %v2098, 32
        %v2189 = vpop.permute.xlu0 %2188
        %2190 = vrot.lane.b32.xlu0 %v2099, 32
        %v2191 = vpop.permute.xlu0 %2190
        %2192 = vrot.lane.b32.xlu0 %v2100, 32
        %v2193 = vpop.permute.xlu0 %2192
        %2194 = vrot.lane.b32.xlu0 %v2101, 32
        %v2195 = vpop.permute.xlu0 %2194
        %2196 = vrot.lane.b32.xlu0 %v2102, 32
        %v2197 = vpop.permute.xlu0 %2196
        %2198 = vrot.lane.b32.xlu0 %v2103, 32
        %v2199 = vpop.permute.xlu0 %2198
        %vm2232 = vcmask 556288
        %2233 = vst.msk [vmem:[#allocation3 + $0x10] sm:$0xff] %vm2232, %v2137
        %2234 = vst.msk [vmem:[#allocation3 + $0x28] sm:$0xff] %vm2232, %v2139
        %2235 = vst.msk [vmem:[#allocation3 + $0x40] sm:$0xff] %vm2232, %v2141
        %2236 = vst.msk [vmem:[#allocation3 + $0x58] sm:$0xff] %vm2232, %v2143
        %2237 = vst.msk [vmem:[#allocation3 + $0x70] sm:$0xff] %vm2232, %v2145
        %2238 = vst.msk [vmem:[#allocation3 + $0x88] sm:$0xff] %vm2232, %v2147
        %2239 = vst.msk [vmem:[#allocation3 + $0xa0] sm:$0xff] %vm2232, %v2149
        %2240 = vst.msk [vmem:[#allocation3 + $0xb8] sm:$0xff] %vm2232, %v2151
        %2241 = vst.msk [vmem:[#allocation3 + $0xd0] sm:$0xff] %vm2232, %v2153
        %2242 = vst.msk [vmem:[#allocation3 + $0xe8] sm:$0xff] %vm2232, %v2155
        %2243 = vst.msk [vmem:[#allocation3 + $0x100] sm:$0xff] %vm2232, %v2157
        %2244 = vst.msk [vmem:[#allocation3 + $0x118] sm:$0xff] %vm2232, %v2159
        %2245 = vst.msk [vmem:[#allocation3 + $0x130] sm:$0xff] %vm2232, %v2161
        %2246 = vst.msk [vmem:[#allocation3 + $0x148] sm:$0xff] %vm2232, %v2163
        %2247 = vst.msk [vmem:[#allocation3 + $0x160] sm:$0xff] %vm2232, %v2165
        %2248 = vst.msk [vmem:[#allocation3 + $0x178] sm:$0xff] %vm2232, %v2167
        %2249 = vst.msk [vmem:[#allocation3 + $0x190] sm:$0xff] %vm2232, %v2169
        %2250 = vst.msk [vmem:[#allocation3 + $0x1a8] sm:$0xff] %vm2232, %v2171
        %2251 = vst.msk [vmem:[#allocation3 + $0x1c0] sm:$0xff] %vm2232, %v2173
        %2252 = vst.msk [vmem:[#allocation3 + $0x1d8] sm:$0xff] %vm2232, %v2175
        %2253 = vst.msk [vmem:[#allocation3 + $0x1f0] sm:$0xff] %vm2232, %v2177
        %2254 = vst.msk [vmem:[#allocation3 + $0x208] sm:$0xff] %vm2232, %v2179
        %2255 = vst.msk [vmem:[#allocation3 + $0x220] sm:$0xff] %vm2232, %v2181
        %2256 = vst.msk [vmem:[#allocation3 + $0x238] sm:$0xff] %vm2232, %v2183
        %2257 = vst.msk [vmem:[#allocation3 + $0x250] sm:$0xff] %vm2232, %v2185
        %2258 = vst.msk [vmem:[#allocation3 + $0x268] sm:$0xff] %vm2232, %v2187
        %2259 = vst.msk [vmem:[#allocation3 + $0x280] sm:$0xff] %vm2232, %v2189
        %2260 = vst.msk [vmem:[#allocation3 + $0x298] sm:$0xff] %vm2232, %v2191
        %2261 = vst.msk [vmem:[#allocation3 + $0x2b0] sm:$0xff] %vm2232, %v2193
        %2262 = vst.msk [vmem:[#allocation3 + $0x2c8] sm:$0xff] %vm2232, %v2195
        %2263 = vst.msk [vmem:[#allocation3 + $0x2e0] sm:$0xff] %vm2232, %v2197
        %2264 = vst.msk [vmem:[#allocation3 + $0x2f8] sm:$0xff] %vm2232, %v2199
        %v2265 = vld [vmem:[#allocation3] sm:$0xff]
        %v2266 = vld [vmem:[#allocation3 + $0x8] sm:$0xff]
        %v2267 = vld [vmem:[#allocation3 + $0x10] sm:$0xff]
        %v2268 = vld [vmem:[#allocation3 + $0x18] sm:$0xff]
        %v2269 = vld [vmem:[#allocation3 + $0x20] sm:$0xff]
        %v2270 = vld [vmem:[#allocation3 + $0x28] sm:$0xff]
        %v2271 = vld [vmem:[#allocation3 + $0x30] sm:$0xff]
        %v2272 = vld [vmem:[#allocation3 + $0x38] sm:$0xff]
        %v2273 = vld [vmem:[#allocation3 + $0x40] sm:$0xff]
        %v2274 = vld [vmem:[#allocation3 + $0x48] sm:$0xff]
        %v2275 = vld [vmem:[#allocation3 + $0x50] sm:$0xff]
        %v2276 = vld [vmem:[#allocation3 + $0x58] sm:$0xff]
        %v2277 = vld [vmem:[#allocation3 + $0x60] sm:$0xff]
        %v2278 = vld [vmem:[#allocation3 + $0x68] sm:$0xff]
        %v2279 = vld [vmem:[#allocation3 + $0x70] sm:$0xff]
        %v2280 = vld [vmem:[#allocation3 + $0x78] sm:$0xff]
        %v2281 = vld [vmem:[#allocation3 + $0x80] sm:$0xff]
        %v2282 = vld [vmem:[#allocation3 + $0x88] sm:$0xff]
        %v2283 = vld [vmem:[#allocation3 + $0x90] sm:$0xff]
        %v2284 = vld [vmem:[#allocation3 + $0x98] sm:$0xff]
        %v2285 = vld [vmem:[#allocation3 + $0xa0] sm:$0xff]
        %v2286 = vld [vmem:[#allocation3 + $0xa8] sm:$0xff]
        %v2287 = vld [vmem:[#allocation3 + $0xb0] sm:$0xff]
        %v2288 = vld [vmem:[#allocation3 + $0xb8] sm:$0xff]
        %v2289 = vld [vmem:[#allocation3 + $0xc0] sm:$0xff]
        %v2290 = vld [vmem:[#allocation3 + $0xc8] sm:$0xff]
        %v2291 = vld [vmem:[#allocation3 + $0xd0] sm:$0xff]
        %v2292 = vld [vmem:[#allocation3 + $0xd8] sm:$0xff]
        %v2293 = vld [vmem:[#allocation3 + $0xe0] sm:$0xff]
        %v2294 = vld [vmem:[#allocation3 + $0xe8] sm:$0xff]
        %v2295 = vld [vmem:[#allocation3 + $0xf0] sm:$0xff]
        %v2296 = vld [vmem:[#allocation3 + $0xf8] sm:$0xff]
        %v2297 = vld [vmem:[#allocation3 + $0x100] sm:$0xff]
        %v2298 = vld [vmem:[#allocation3 + $0x108] sm:$0xff]
        %v2299 = vld [vmem:[#allocation3 + $0x110] sm:$0xff]
        %v2300 = vld [vmem:[#allocation3 + $0x118] sm:$0xff]
        %v2301 = vld [vmem:[#allocation3 + $0x120] sm:$0xff]
        %v2302 = vld [vmem:[#allocation3 + $0x128] sm:$0xff]
        %v2303 = vld [vmem:[#allocation3 + $0x130] sm:$0xff]
        %v2304 = vld [vmem:[#allocation3 + $0x138] sm:$0xff]
        %v2305 = vld [vmem:[#allocation3 + $0x140] sm:$0xff]
        %v2306 = vld [vmem:[#allocation3 + $0x148] sm:$0xff]
        %v2307 = vld [vmem:[#allocation3 + $0x150] sm:$0xff]
        %v2308 = vld [vmem:[#allocation3 + $0x158] sm:$0xff]
        %v2309 = vld [vmem:[#allocation3 + $0x160] sm:$0xff]
        %v2310 = vld [vmem:[#allocation3 + $0x168] sm:$0xff]
        %v2311 = vld [vmem:[#allocation3 + $0x170] sm:$0xff]
        %v2312 = vld [vmem:[#allocation3 + $0x178] sm:$0xff]
        %v2313 = vld [vmem:[#allocation3 + $0x180] sm:$0xff]
        %v2314 = vld [vmem:[#allocation3 + $0x188] sm:$0xff]
        %v2315 = vld [vmem:[#allocation3 + $0x190] sm:$0xff]
        %v2316 = vld [vmem:[#allocation3 + $0x198] sm:$0xff]
        %v2317 = vld [vmem:[#allocation3 + $0x1a0] sm:$0xff]
        %v2318 = vld [vmem:[#allocation3 + $0x1a8] sm:$0xff]
        %v2319 = vld [vmem:[#allocation3 + $0x1b0] sm:$0xff]
        %v2320 = vld [vmem:[#allocation3 + $0x1b8] sm:$0xff]
        %v2321 = vld [vmem:[#allocation3 + $0x1c0] sm:$0xff]
        %v2322 = vld [vmem:[#allocation3 + $0x1c8] sm:$0xff]
        %v2323 = vld [vmem:[#allocation3 + $0x1d0] sm:$0xff]
        %v2324 = vld [vmem:[#allocation3 + $0x1d8] sm:$0xff]
        %v2325 = vld [vmem:[#allocation3 + $0x1e0] sm:$0xff]
        %v2326 = vld [vmem:[#allocation3 + $0x1e8] sm:$0xff]
        %v2327 = vld [vmem:[#allocation3 + $0x1f0] sm:$0xff]
        %v2328 = vld [vmem:[#allocation3 + $0x1f8] sm:$0xff]
        %v2329 = vld [vmem:[#allocation3 + $0x200] sm:$0xff]
        %v2330 = vld [vmem:[#allocation3 + $0x208] sm:$0xff]
        %v2331 = vld [vmem:[#allocation3 + $0x210] sm:$0xff]
        %v2332 = vld [vmem:[#allocation3 + $0x218] sm:$0xff]
        %v2333 = vld [vmem:[#allocation3 + $0x220] sm:$0xff]
        %v2334 = vld [vmem:[#allocation3 + $0x228] sm:$0xff]
        %v2335 = vld [vmem:[#allocation3 + $0x230] sm:$0xff]
        %v2336 = vld [vmem:[#allocation3 + $0x238] sm:$0xff]
        %v2337 = vld [vmem:[#allocation3 + $0x240] sm:$0xff]
        %v2338 = vld [vmem:[#allocation3 + $0x248] sm:$0xff]
        %v2339 = vld [vmem:[#allocation3 + $0x250] sm:$0xff]
        %v2340 = vld [vmem:[#allocation3 + $0x258] sm:$0xff]
        %v2341 = vld [vmem:[#allocation3 + $0x260] sm:$0xff]
        %v2342 = vld [vmem:[#allocation3 + $0x268] sm:$0xff]
        %v2343 = vld [vmem:[#allocation3 + $0x270] sm:$0xff]
        %v2344 = vld [vmem:[#allocation3 + $0x278] sm:$0xff]
        %v2345 = vld [vmem:[#allocation3 + $0x280] sm:$0xff]
        %v2346 = vld [vmem:[#allocation3 + $0x288] sm:$0xff]
        %v2347 = vld [vmem:[#allocation3 + $0x290] sm:$0xff]
        %v2348 = vld [vmem:[#allocation3 + $0x298] sm:$0xff]
        %v2349 = vld [vmem:[#allocation3 + $0x2a0] sm:$0xff]
        %v2350 = vld [vmem:[#allocation3 + $0x2a8] sm:$0xff]
        %v2351 = vld [vmem:[#allocation3 + $0x2b0] sm:$0xff]
        %v2352 = vld [vmem:[#allocation3 + $0x2b8] sm:$0xff]
        %v2353 = vld [vmem:[#allocation3 + $0x2c0] sm:$0xff]
        %v2354 = vld [vmem:[#allocation3 + $0x2c8] sm:$0xff]
        %v2355 = vld [vmem:[#allocation3 + $0x2d0] sm:$0xff]
        %v2356 = vld [vmem:[#allocation3 + $0x2d8] sm:$0xff]
        %v2357 = vld [vmem:[#allocation3 + $0x2e0] sm:$0xff]
        %v2358 = vld [vmem:[#allocation3 + $0x2e8] sm:$0xff]
        %v2359 = vld [vmem:[#allocation3 + $0x2f0] sm:$0xff]
        %v2360 = vld [vmem:[#allocation3 + $0x2f8] sm:$0xff]
        %v2361 = vpack.c.bf16 %v2268, %v2265
        %v2362 = vpack.c.bf16 %v2269, %v2266
        %v2363 = vpack.c.bf16 %v2270, %v2267
        %v2364 = vpack.c.bf16 %v2274, %v2271
        %v2365 = vpack.c.bf16 %v2275, %v2272
        %v2366 = vpack.c.bf16 %v2276, %v2273
        %v2367 = vpack.c.bf16 %v2280, %v2277
        %v2368 = vpack.c.bf16 %v2281, %v2278
        %v2369 = vpack.c.bf16 %v2282, %v2279
        %v2370 = vpack.c.bf16 %v2286, %v2283
        %v2371 = vpack.c.bf16 %v2287, %v2284
        %v2372 = vpack.c.bf16 %v2288, %v2285
        %v2373 = vpack.c.bf16 %v2292, %v2289
        %v2374 = vpack.c.bf16 %v2293, %v2290
        %v2375 = vpack.c.bf16 %v2294, %v2291
        %v2376 = vpack.c.bf16 %v2298, %v2295
        %v2377 = vpack.c.bf16 %v2299, %v2296
        %v2378 = vpack.c.bf16 %v2300, %v2297
        %v2379 = vpack.c.bf16 %v2304, %v2301
        %v2380 = vpack.c.bf16 %v2305, %v2302
        %v2381 = vpack.c.bf16 %v2306, %v2303
        %v2382 = vpack.c.bf16 %v2310, %v2307
        %v2383 = vpack.c.bf16 %v2311, %v2308
        %v2384 = vpack.c.bf16 %v2312, %v2309
        %v2385 = vpack.c.bf16 %v2316, %v2313
        %v2386 = vpack.c.bf16 %v2317, %v2314
        %v2387 = vpack.c.bf16 %v2318, %v2315
        %v2388 = vpack.c.bf16 %v2322, %v2319
        %v2389 = vpack.c.bf16 %v2323, %v2320
        %v2390 = vpack.c.bf16 %v2324, %v2321
        %v2391 = vpack.c.bf16 %v2328, %v2325
        %v2392 = vpack.c.bf16 %v2329, %v2326
        %v2393 = vpack.c.bf16 %v2330, %v2327
        %v2394 = vpack.c.bf16 %v2334, %v2331
        %v2395 = vpack.c.bf16 %v2335, %v2332
        %v2396 = vpack.c.bf16 %v2336, %v2333
        %v2397 = vpack.c.bf16 %v2340, %v2337
        %v2398 = vpack.c.bf16 %v2341, %v2338
        %v2399 = vpack.c.bf16 %v2342, %v2339
        %v2400 = vpack.c.bf16 %v2346, %v2343
        %v2401 = vpack.c.bf16 %v2347, %v2344
        %v2402 = vpack.c.bf16 %v2348, %v2345
        %v2403 = vpack.c.bf16 %v2352, %v2349
        %v2404 = vpack.c.bf16 %v2353, %v2350
        %v2405 = vpack.c.bf16 %v2354, %v2351
        %v2406 = vpack.c.bf16 %v2358, %v2355
        %v2407 = vpack.c.bf16 %v2359, %v2356
        %v2408 = vpack.c.bf16 %v2360, %v2357
        %v2409 = vld [vmem:[%s3] sm:$0xf]
        %v2410 = vld [vmem:[%s3 + $0x4] sm:$0xf]
        %v2411 = vld [vmem:[%s3 + $0x8] sm:$0xf]
        %v2412 = vld [vmem:[%s3 + $0xc] sm:$0xf]
        %v2413 = vld [vmem:[%s3 + $0x10] sm:$0xf]
        %v2414 = vld [vmem:[%s3 + $0x14] sm:$0xf]
        %v2415 = vld [vmem:[%s3 + $0x18] sm:$0xf]
        %v2416 = vld [vmem:[%s3 + $0x1c] sm:$0xf]
        %v2417 = vld [vmem:[%s3 + $0x20] sm:$0xf]
        %v2418 = vld [vmem:[%s3 + $0x24] sm:$0xf]
        %v2419 = vld [vmem:[%s3 + $0x28] sm:$0xf]
        %v2420 = vld [vmem:[%s3 + $0x2c] sm:$0xf]
        %v2421 = vld [vmem:[%s3 + $0x30] sm:$0xf]
        %v2422 = vld [vmem:[%s3 + $0x34] sm:$0xf]
        %v2423 = vld [vmem:[%s3 + $0x38] sm:$0xf]
        %v2424 = vld [vmem:[%s3 + $0x3c] sm:$0xf]
        %v2425 = vld [vmem:[%s3 + $0x40] sm:$0xf]
        %v2426 = vld [vmem:[%s3 + $0x44] sm:$0xf]
        %v2427 = vld [vmem:[%s3 + $0x48] sm:$0xf]
        %v2428 = vld [vmem:[%s3 + $0x4c] sm:$0xf]
        %v2429 = vld [vmem:[%s3 + $0x50] sm:$0xf]
        %v2430 = vld [vmem:[%s3 + $0x54] sm:$0xf]
        %v2431 = vld [vmem:[%s3 + $0x58] sm:$0xf]
        %v2432 = vld [vmem:[%s3 + $0x5c] sm:$0xf]
        %v2433 = vld [vmem:[%s3 + $0x60] sm:$0xf]
        %v2434 = vld [vmem:[%s3 + $0x64] sm:$0xf]
        %v2435 = vld [vmem:[%s3 + $0x68] sm:$0xf]
        %v2436 = vld [vmem:[%s3 + $0x6c] sm:$0xf]
        %v2437 = vld [vmem:[%s3 + $0x70] sm:$0xf]
        %v2438 = vld [vmem:[%s3 + $0x74] sm:$0xf]
        %v2439 = vld [vmem:[%s3 + $0x78] sm:$0xf]
        %v2440 = vld [vmem:[%s3 + $0x7c] sm:$0xf]
        %v2441 = vld [vmem:[%s3 + $0x80] sm:$0xf]
        %v2442 = vld [vmem:[%s3 + $0x84] sm:$0xf]
        %v2443 = vld [vmem:[%s3 + $0x88] sm:$0xf]
        %v2444 = vld [vmem:[%s3 + $0x8c] sm:$0xf]
        %v2445 = vld [vmem:[%s3 + $0x90] sm:$0xf]
        %v2446 = vld [vmem:[%s3 + $0x94] sm:$0xf]
        %v2447 = vld [vmem:[%s3 + $0x98] sm:$0xf]
        %v2448 = vld [vmem:[%s3 + $0x9c] sm:$0xf]
        %v2449 = vld [vmem:[%s3 + $0xa0] sm:$0x3]
        %v2491 = vunpack.c.l.b16 %v2409
        %v2492 = vunpack.c.l.b16 %v2410
        %v2493 = vunpack.c.l.b16 %v2411
        %v2494 = vunpack.c.l.b16 %v2412
        %v2495 = vunpack.c.l.b16 %v2413
        %v2496 = vunpack.c.l.b16 %v2414
        %v2497 = vunpack.c.l.b16 %v2415
        %v2498 = vunpack.c.l.b16 %v2416
        %v2499 = vunpack.c.l.b16 %v2417
        %v2500 = vunpack.c.l.b16 %v2418
        %v2501 = vunpack.c.l.b16 %v2419
        %v2502 = vunpack.c.l.b16 %v2420
        %v2503 = vunpack.c.l.b16 %v2421
        %v2504 = vunpack.c.l.b16 %v2422
        %v2505 = vunpack.c.l.b16 %v2423
        %v2506 = vunpack.c.l.b16 %v2424
        %v2507 = vunpack.c.l.b16 %v2425
        %v2508 = vunpack.c.l.b16 %v2426
        %v2509 = vunpack.c.l.b16 %v2427
        %v2510 = vunpack.c.l.b16 %v2428
        %v2511 = vunpack.c.l.b16 %v2429
        %v2512 = vunpack.c.l.b16 %v2430
        %v2513 = vunpack.c.l.b16 %v2431
        %v2514 = vunpack.c.l.b16 %v2432
        %v2515 = vunpack.c.l.b16 %v2433
        %v2516 = vunpack.c.l.b16 %v2434
        %v2517 = vunpack.c.l.b16 %v2435
        %v2518 = vunpack.c.l.b16 %v2436
        %v2519 = vunpack.c.l.b16 %v2437
        %v2520 = vunpack.c.l.b16 %v2438
        %v2521 = vunpack.c.l.b16 %v2439
        %v2522 = vunpack.c.l.b16 %v2440
        %v2523 = vunpack.c.l.b16 %v2441
        %v2524 = vunpack.c.l.b16 %v2442
        %v2525 = vunpack.c.l.b16 %v2443
        %v2526 = vunpack.c.l.b16 %v2444
        %v2527 = vunpack.c.l.b16 %v2445
        %v2528 = vunpack.c.l.b16 %v2446
        %v2529 = vunpack.c.l.b16 %v2447
        %v2530 = vunpack.c.l.b16 %v2448
        %v2531 = vunpack.c.l.b16 %v2449
        %v2532 = vpack.c.b16 %v2492, %v2491
        %v2533 = vpack.c.b16 %v2494, %v2493
        %v2534 = vpack.c.b16 %v2496, %v2495
        %v2535 = vpack.c.b16 %v2498, %v2497
        %v2536 = vpack.c.b16 %v2500, %v2499
        %v2537 = vpack.c.b16 %v2502, %v2501
        %v2538 = vpack.c.b16 %v2504, %v2503
        %v2539 = vpack.c.b16 %v2506, %v2505
        %v2540 = vpack.c.b16 %v2508, %v2507
        %v2541 = vpack.c.b16 %v2510, %v2509
        %v2542 = vpack.c.b16 %v2512, %v2511
        %v2543 = vpack.c.b16 %v2514, %v2513
        %v2544 = vpack.c.b16 %v2516, %v2515
        %v2545 = vpack.c.b16 %v2518, %v2517
        %v2546 = vpack.c.b16 %v2520, %v2519
        %v2547 = vpack.c.b16 %v2522, %v2521
        %v2548 = vpack.c.b16 %v2524, %v2523
        %v2549 = vpack.c.b16 %v2526, %v2525
        %v2550 = vpack.c.b16 %v2528, %v2527
        %v2551 = vpack.c.b16 %v2530, %v2529
        %v2552 = vpack.c.b16 %v2531, %v2531
        %vm2573 = vcmask 556032
        %v2575 = vsel %vm2573, %v2363, 0
        %v2578 = vsel %vm2573, %v2366, 0
        %v2581 = vsel %vm2573, %v2369, 0
        %v2584 = vsel %vm2573, %v2372, 0
        %v2587 = vsel %vm2573, %v2375, 0
        %v2590 = vsel %vm2573, %v2378, 0
        %v2593 = vsel %vm2573, %v2381, 0
        %v2596 = vsel %vm2573, %v2384, 0
        %v2599 = vsel %vm2573, %v2387, 0
        %v2602 = vsel %vm2573, %v2390, 0
        %v2605 = vsel %vm2573, %v2393, 0
        %v2608 = vsel %vm2573, %v2396, 0
        %v2611 = vsel %vm2573, %v2399, 0
        %v2614 = vsel %vm2573, %v2402, 0
        %v2617 = vsel %vm2573, %v2405, 0
        %v2620 = vsel %vm2573, %v2408, 0
        %vm2622 = vcmask 1041408
        %v2624 = vsel %vm2622, %v2552, 0
        %2626 = vmatprep.subr.bf16.mxu0 0
        %2627 = vmatpush1.bf16.msra.mxu0 %v2532
        %2628 = vmatprep.subr.bf16.mxu0 0
        %2629 = vmatpush1.bf16.msra.mxu0 %v2533
        %2630 = vmatprep.subr.bf16.mxu0 0
        %2631 = vmatpush1.bf16.msra.mxu0 %v2534
        %2632 = vmatprep.subr.bf16.mxu0 0
        %2633 = vmatpush1.bf16.msra.mxu0 %v2535
        %2634 = vmatprep.subr.bf16.mxu0 0
        %2635 = vmatpush1.bf16.msra.mxu0 %v2536
        %2636 = vmatprep.subr.bf16.mxu0 0
        %2637 = vmatpush1.bf16.msra.mxu0 %v2537
        %2638 = vmatprep.subr.bf16.mxu0 0
        %2639 = vmatpush1.bf16.msra.mxu0 %v2538
        %2640 = vmatprep.subr.bf16.mxu0 0
        %2641 = vmatpush1.bf16.msra.mxu0 %v2539
        %2642 = vmatprep.subr.bf16.mxu0 0
        %2643 = vmatpush1.bf16.msra.mxu0 %v2540
        %2644 = vmatprep.subr.bf16.mxu0 0
        %2645 = vmatpush1.bf16.msra.mxu0 %v2541
        %2646 = vmatprep.subr.bf16.mxu0 0
        %2647 = vmatpush1.bf16.msra.mxu0 %v2542
        %2648 = vmatprep.subr.bf16.mxu0 0
        %2649 = vmatpush1.bf16.msra.mxu0 %v2543
        %2650 = vmatprep.subr.bf16.mxu0 0
        %2651 = vmatpush1.bf16.msra.mxu0 %v2544
        %2652 = vmatprep.subr.bf16.mxu0 0
        %2653 = vmatpush1.bf16.msra.mxu0 %v2545
        %2654 = vmatprep.subr.bf16.mxu0 0
        %2655 = vmatpush1.bf16.msra.mxu0 %v2546
        %2656 = vmatprep.subr.bf16.mxu0 0
        %2657 = vmatpush1.bf16.msra.mxu0 %v2547
        %2658 = vmatprep.mubr.bf16.mxu0 %v2362
        %2659 = vmatmul.mubr.bf16.gmra.mrb[0].mxu0 %v2361
        %v2660 = vpop.f32.mrb[0].mxu0
        %v2661 = vadd.f32 0.0, %v2660
        %v2662 = vpop.f32.mrb[0].mxu0
        %v2663 = vpop.f32.mrb[0].mxu0
        %v2664 = vadd.f32 0.0, %v2663
        %v2665 = vpop.f32.mrb[0].mxu0
        %2666 = vmatprep.mubr.bf16.mxu0 %v2365
        %2667 = vmatmul.mubr.bf16.gmra.mrb[0].mxu0 %v2364
        %v2668 = vpop.f32.mrb[0].mxu0
        %v2669 = vadd.f32 0.0, %v2668
        %v2670 = vpop.f32.mrb[0].mxu0
        %v2671 = vpop.f32.mrb[0].mxu0
        %v2672 = vadd.f32 0.0, %v2671
        %v2673 = vpop.f32.mrb[0].mxu0
        %2674 = vmatprep.mubr.bf16.mxu0 %v2368
        %2675 = vmatmul.mubr.bf16.gmra.mrb[0].mxu0 %v2367
        %v2676 = vpop.f32.mrb[0].mxu0
        %v2677 = vadd.f32 0.0, %v2676
        %v2678 = vpop.f32.mrb[0].mxu0
        %v2679 = vpop.f32.mrb[0].mxu0
        %v2680 = vadd.f32 0.0, %v2679
        %v2681 = vpop.f32.mrb[0].mxu0
        %2682 = vmatprep.mubr.bf16.mxu0 %v2371
        %2683 = vmatmul.mubr.bf16.gmra.mrb[0].mxu0 %v2370
        %v2684 = vpop.f32.mrb[0].mxu0
        %v2685 = vadd.f32 0.0, %v2684
        %v2686 = vpop.f32.mrb[0].mxu0
        %v2687 = vpop.f32.mrb[0].mxu0
        %v2688 = vadd.f32 0.0, %v2687
        %v2689 = vpop.f32.mrb[0].mxu0
        %2690 = vmatprep.mubr.bf16.mxu0 %v2374
        %2691 = vmatmul.mubr.bf16.gmra.mrb[0].mxu0 %v2373
        %v2692 = vpop.f32.mrb[0].mxu0
        %v2693 = vadd.f32 0.0, %v2692
        %v2694 = vpop.f32.mrb[0].mxu0
        %v2695 = vpop.f32.mrb[0].mxu0
        %v2696 = vadd.f32 0.0, %v2695
        %v2697 = vpop.f32.mrb[0].mxu0
        %2698 = vmatprep.mubr.bf16.mxu0 %v2377
        %2699 = vmatmul.mubr.bf16.gmra.mrb[0].mxu0 %v2376
        %v2700 = vpop.f32.mrb[0].mxu0
        %v2701 = vadd.f32 0.0, %v2700
        %v2702 = vpop.f32.mrb[0].mxu0
        %v2703 = vpop.f32.mrb[0].mxu0
        %v2704 = vadd.f32 0.0, %v2703
        %v2705 = vpop.f32.mrb[0].mxu0
        %2706 = vmatprep.mubr.bf16.mxu0 %v2380
        %2707 = vmatmul.mubr.bf16.gmra.mrb[0].mxu0 %v2379
        %v2708 = vpop.f32.mrb[0].mxu0
        %v2709 = vadd.f32 0.0, %v2708
        %v2710 = vpop.f32.mrb[0].mxu0
        %v2711 = vpop.f32.mrb[0].mxu0
        %v2712 = vadd.f32 0.0, %v2711
        %v2713 = vpop.f32.mrb[0].mxu0
        %2714 = vmatprep.mubr.bf16.mxu0 %v2383
        %2715 = vmatmul.mubr.bf16.gmra.mrb[0].mxu0 %v2382
        %v2716 = vpop.f32.mrb[0].mxu0
        %v2717 = vadd.f32 0.0, %v2716
        %v2718 = vpop.f32.mrb[0].mxu0
        %v2719 = vpop.f32.mrb[0].mxu0
        %v2720 = vadd.f32 0.0, %v2719
        %v2721 = vpop.f32.mrb[0].mxu0
        %2722 = vmatprep.mubr.bf16.mxu0 %v2386
        %2723 = vmatmul.mubr.bf16.gmra.mrb[0].mxu0 %v2385
        %v2724 = vpop.f32.mrb[0].mxu0
        %v2725 = vadd.f32 0.0, %v2724
        %v2726 = vpop.f32.mrb[0].mxu0
        %v2727 = vpop.f32.mrb[0].mxu0
        %v2728 = vadd.f32 0.0, %v2727
        %v2729 = vpop.f32.mrb[0].mxu0
        %2730 = vmatprep.mubr.bf16.mxu0 %v2389
        %2731 = vmatmul.mubr.bf16.gmra.mrb[0].mxu0 %v2388
        %v2732 = vpop.f32.mrb[0].mxu0
        %v2733 = vadd.f32 0.0, %v2732
        %v2734 = vpop.f32.mrb[0].mxu0
        %v2735 = vpop.f32.mrb[0].mxu0
        %v2736 = vadd.f32 0.0, %v2735
        %v2737 = vpop.f32.mrb[0].mxu0
        %2738 = vmatprep.mubr.bf16.mxu0 %v2392
        %2739 = vmatmul.mubr.bf16.gmra.mrb[0].mxu0 %v2391
        %v2740 = vpop.f32.mrb[0].mxu0
        %v2741 = vadd.f32 0.0, %v2740
        %v2742 = vpop.f32.mrb[0].mxu0
        %v2743 = vpop.f32.mrb[0].mxu0
        %v2744 = vadd.f32 0.0, %v2743
        %v2745 = vpop.f32.mrb[0].mxu0
        %2746 = vmatprep.mubr.bf16.mxu0 %v2395
        %2747 = vmatmul.mubr.bf16.gmra.mrb[0].mxu0 %v2394
        %v2748 = vpop.f32.mrb[0].mxu0
        %v2749 = vadd.f32 0.0, %v2748
        %v2750 = vpop.f32.mrb[0].mxu0
        %v2751 = vpop.f32.mrb[0].mxu0
        %v2752 = vadd.f32 0.0, %v2751
        %v2753 = vpop.f32.mrb[0].mxu0
        %2754 = vmatprep.mubr.bf16.mxu0 %v2398
        %2755 = vmatmul.mubr.bf16.gmra.mrb[0].mxu0 %v2397
        %v2756 = vpop.f32.mrb[0].mxu0
        %v2757 = vadd.f32 0.0, %v2756
        %v2758 = vpop.f32.mrb[0].mxu0
        %v2759 = vpop.f32.mrb[0].mxu0
        %v2760 = vadd.f32 0.0, %v2759
        %v2761 = vpop.f32.mrb[0].mxu0
        %2762 = vmatprep.mubr.bf16.mxu0 %v2401
        %2763 = vmatmul.mubr.bf16.gmra.mrb[0].mxu0 %v2400
        %v2764 = vpop.f32.mrb[0].mxu0
        %v2765 = vadd.f32 0.0, %v2764
        %v2766 = vpop.f32.mrb[0].mxu0
        %v2767 = vpop.f32.mrb[0].mxu0
        %v2768 = vadd.f32 0.0, %v2767
        %v2769 = vpop.f32.mrb[0].mxu0
        %2770 = vmatprep.mubr.bf16.mxu0 %v2404
        %2771 = vmatmul.mubr.bf16.gmra.mrb[0].mxu0 %v2403
        %v2772 = vpop.f32.mrb[0].mxu0
        %v2773 = vadd.f32 0.0, %v2772
        %v2774 = vpop.f32.mrb[0].mxu0
        %v2775 = vpop.f32.mrb[0].mxu0
        %v2776 = vadd.f32 0.0, %v2775
        %v2777 = vpop.f32.mrb[0].mxu0
        %2778 = vmatprep.mubr.bf16.mxu0 %v2407
        %2779 = vmatmul.mubr.bf16.gmra.mrb[0].mxu0 %v2406
        %v2780 = vpop.f32.mrb[0].mxu0
        %v2781 = vadd.f32 0.0, %v2780
        %v2782 = vpop.f32.mrb[0].mxu0
        %v2783 = vpop.f32.mrb[0].mxu0
        %v2784 = vadd.f32 0.0, %v2783
        %v2785 = vpop.f32.mrb[0].mxu0
        %2786 = vdwg.mxu0
        %2787 = vmatprep.subr.bf16.mxu0 0
        %2788 = vmatpush1.bf16.msra.mxu0 %v2548
        %2789 = vmatprep.subr.bf16.mxu0 0
        %2790 = vmatpush1.bf16.msra.mxu0 %v2549
        %2791 = vmatprep.subr.bf16.mxu0 0
        %2792 = vmatpush1.bf16.msra.mxu0 %v2550
        %2793 = vmatprep.subr.bf16.mxu0 0
        %2794 = vmatpush1.bf16.msra.mxu0 %v2551
        %2795 = vmatprep.subr.bf16.mxu0 0
        %2796 = vmatpush1.bf16.msra.mxu0 %v2624
        %2797 = vmatprep.subr.bf16.mxu0 0
        %2798 = vmatpush1.bf16.msra.mxu0 0
        %2799 = vmatprep.subr.bf16.mxu0 0
        %2800 = vmatpush1.bf16.msra.mxu0 0
        %2801 = vmatprep.subr.bf16.mxu0 0
        %2802 = vmatpush1.bf16.msra.mxu0 0
        %2803 = vmatprep.subr.bf16.mxu0 0
        %2804 = vmatpush1.bf16.msra.mxu0 0
        %2805 = vmatprep.subr.bf16.mxu0 0
        %2806 = vmatpush1.bf16.msra.mxu0 0
        %2807 = vmatprep.subr.bf16.mxu0 0
        %2808 = vmatpush1.bf16.msra.mxu0 0
        %2809 = vmatprep.subr.bf16.mxu0 0
        %2810 = vmatpush1.bf16.msra.mxu0 0
        %2811 = vmatprep.subr.bf16.mxu0 0
        %2812 = vmatpush1.bf16.msra.mxu0 0
        %2813 = vmatprep.subr.bf16.mxu0 0
        %2814 = vmatpush1.bf16.msra.mxu0 0
        %2815 = vmatprep.subr.bf16.mxu0 0
        %2816 = vmatpush1.bf16.msra.mxu0 0
        %2817 = vmatprep.subr.bf16.mxu0 0
        %2818 = vmatpush1.bf16.msra.mxu0 0
        %2819 = vmatprep.mubr.bf16.mxu0 0
        %2820 = vmatmul.mubr.bf16.gmra.mrb[0].mxu0 %v2575
        %v2821 = vpop.f32.mrb[0].mxu0
        %v2822 = vadd.f32 %v2661, %v2821
        %v2823 = vpop.f32.mrb[0].mxu0
        %v2824 = vpop.f32.mrb[0].mxu0
        %v2825 = vadd.f32 %v2664, %v2824
        %v2826 = vpop.f32.mrb[0].mxu0
        %2827 = vmatprep.mubr.bf16.mxu0 0
        %2828 = vmatmul.mubr.bf16.gmra.mrb[0].mxu0 %v2578
        %v2829 = vpop.f32.mrb[0].mxu0
        %v2830 = vadd.f32 %v2669, %v2829
        %v2831 = vpop.f32.mrb[0].mxu0
        %v2832 = vpop.f32.mrb[0].mxu0
        %v2833 = vadd.f32 %v2672, %v2832
        %v2834 = vpop.f32.mrb[0].mxu0
        %2835 = vmatprep.mubr.bf16.mxu0 0
        %2836 = vmatmul.mubr.bf16.gmra.mrb[0].mxu0 %v2581
        %v2837 = vpop.f32.mrb[0].mxu0
        %v2838 = vadd.f32 %v2677, %v2837
        %v2839 = vpop.f32.mrb[0].mxu0
        %v2840 = vpop.f32.mrb[0].mxu0
        %v2841 = vadd.f32 %v2680, %v2840
        %v2842 = vpop.f32.mrb[0].mxu0
        %2843 = vmatprep.mubr.bf16.mxu0 0
        %2844 = vmatmul.mubr.bf16.gmra.mrb[0].mxu0 %v2584
        %v2845 = vpop.f32.mrb[0].mxu0
        %v2846 = vadd.f32 %v2685, %v2845
        %v2847 = vpop.f32.mrb[0].mxu0
        %v2848 = vpop.f32.mrb[0].mxu0
        %v2849 = vadd.f32 %v2688, %v2848
        %v2850 = vpop.f32.mrb[0].mxu0
        %2851 = vmatprep.mubr.bf16.mxu0 0
        %2852 = vmatmul.mubr.bf16.gmra.mrb[0].mxu0 %v2587
        %v2853 = vpop.f32.mrb[0].mxu0
        %v2854 = vadd.f32 %v2693, %v2853
        %v2855 = vpop.f32.mrb[0].mxu0
        %v2856 = vpop.f32.mrb[0].mxu0
        %v2857 = vadd.f32 %v2696, %v2856
        %v2858 = vpop.f32.mrb[0].mxu0
        %2859 = vmatprep.mubr.bf16.mxu0 0
        %2860 = vmatmul.mubr.bf16.gmra.mrb[0].mxu0 %v2590
        %v2861 = vpop.f32.mrb[0].mxu0
        %v2862 = vadd.f32 %v2701, %v2861
        %v2863 = vpop.f32.mrb[0].mxu0
        %v2864 = vpop.f32.mrb[0].mxu0
        %v2865 = vadd.f32 %v2704, %v2864
        %v2866 = vpop.f32.mrb[0].mxu0
        %2867 = vmatprep.mubr.bf16.mxu0 0
        %2868 = vmatmul.mubr.bf16.gmra.mrb[0].mxu0 %v2593
        %v2869 = vpop.f32.mrb[0].mxu0
        %v2870 = vadd.f32 %v2709, %v2869
        %v2871 = vpop.f32.mrb[0].mxu0
        %v2872 = vpop.f32.mrb[0].mxu0
        %v2873 = vadd.f32 %v2712, %v2872
        %v2874 = vpop.f32.mrb[0].mxu0
        %2875 = vmatprep.mubr.bf16.mxu0 0
        %2876 = vmatmul.mubr.bf16.gmra.mrb[0].mxu0 %v2596
        %v2877 = vpop.f32.mrb[0].mxu0
        %v2878 = vadd.f32 %v2717, %v2877
        %v2879 = vpop.f32.mrb[0].mxu0
        %v2880 = vpop.f32.mrb[0].mxu0
        %v2881 = vadd.f32 %v2720, %v2880
        %v2882 = vpop.f32.mrb[0].mxu0
        %2883 = vmatprep.mubr.bf16.mxu0 0
        %2884 = vmatmul.mubr.bf16.gmra.mrb[0].mxu0 %v2599
        %v2885 = vpop.f32.mrb[0].mxu0
        %v2886 = vadd.f32 %v2725, %v2885
        %v2887 = vpop.f32.mrb[0].mxu0
        %v2888 = vpop.f32.mrb[0].mxu0
        %v2889 = vadd.f32 %v2728, %v2888
        %v2890 = vpop.f32.mrb[0].mxu0
        %2891 = vmatprep.mubr.bf16.mxu0 0
        %2892 = vmatmul.mubr.bf16.gmra.mrb[0].mxu0 %v2602
        %v2893 = vpop.f32.mrb[0].mxu0
        %v2894 = vadd.f32 %v2733, %v2893
        %v2895 = vpop.f32.mrb[0].mxu0
        %v2896 = vpop.f32.mrb[0].mxu0
        %v2897 = vadd.f32 %v2736, %v2896
        %v2898 = vpop.f32.mrb[0].mxu0
        %2899 = vmatprep.mubr.bf16.mxu0 0
        %2900 = vmatmul.mubr.bf16.gmra.mrb[0].mxu0 %v2605
        %v2901 = vpop.f32.mrb[0].mxu0
        %v2902 = vadd.f32 %v2741, %v2901
        %v2903 = vpop.f32.mrb[0].mxu0
        %v2904 = vpop.f32.mrb[0].mxu0
        %v2905 = vadd.f32 %v2744, %v2904
        %v2906 = vpop.f32.mrb[0].mxu0
        %2907 = vmatprep.mubr.bf16.mxu0 0
        %2908 = vmatmul.mubr.bf16.gmra.mrb[0].mxu0 %v2608
        %v2909 = vpop.f32.mrb[0].mxu0
        %v2910 = vadd.f32 %v2749, %v2909
        %v2911 = vpop.f32.mrb[0].mxu0
        %v2912 = vpop.f32.mrb[0].mxu0
        %v2913 = vadd.f32 %v2752, %v2912
        %v2914 = vpop.f32.mrb[0].mxu0
        %2915 = vmatprep.mubr.bf16.mxu0 0
        %2916 = vmatmul.mubr.bf16.gmra.mrb[0].mxu0 %v2611
        %v2917 = vpop.f32.mrb[0].mxu0
        %v2918 = vadd.f32 %v2757, %v2917
        %v2919 = vpop.f32.mrb[0].mxu0
        %v2920 = vpop.f32.mrb[0].mxu0
        %v2921 = vadd.f32 %v2760, %v2920
        %v2922 = vpop.f32.mrb[0].mxu0
        %2923 = vmatprep.mubr.bf16.mxu0 0
        %2924 = vmatmul.mubr.bf16.gmra.mrb[0].mxu0 %v2614
        %v2925 = vpop.f32.mrb[0].mxu0
        %v2926 = vadd.f32 %v2765, %v2925
        %v2927 = vpop.f32.mrb[0].mxu0
        %v2928 = vpop.f32.mrb[0].mxu0
        %v2929 = vadd.f32 %v2768, %v2928
        %v2930 = vpop.f32.mrb[0].mxu0
        %2931 = vmatprep.mubr.bf16.mxu0 0
        %2932 = vmatmul.mubr.bf16.gmra.mrb[0].mxu0 %v2617
        %v2933 = vpop.f32.mrb[0].mxu0
        %v2934 = vadd.f32 %v2773, %v2933
        %v2935 = vpop.f32.mrb[0].mxu0
        %v2936 = vpop.f32.mrb[0].mxu0
        %v2937 = vadd.f32 %v2776, %v2936
        %v2938 = vpop.f32.mrb[0].mxu0
        %2939 = vmatprep.mubr.bf16.mxu0 0
        %2940 = vmatmul.mubr.bf16.gmra.mrb[0].mxu0 %v2620
        %v2941 = vpop.f32.mrb[0].mxu0
        %v2942 = vadd.f32 %v2781, %v2941
        %v2943 = vpop.f32.mrb[0].mxu0
        %v2944 = vpop.f32.mrb[0].mxu0
        %v2945 = vadd.f32 %v2784, %v2944
        %v2946 = vpop.f32.mrb[0].mxu0
        %2947 = vdwg.mxu0
        %v2948 = vxor.u32 %v2822, 2147483648
        %v2949 = vxor.u32 %v2825, 2147483648
        %v2950 = vxor.u32 %v2830, 2147483648
        %v2951 = vxor.u32 %v2833, 2147483648
        %v2952 = vxor.u32 %v2838, 2147483648
        %v2953 = vxor.u32 %v2841, 2147483648
        %v2954 = vxor.u32 %v2846, 2147483648
        %v2955 = vxor.u32 %v2849, 2147483648
        %v2956 = vxor.u32 %v2854, 2147483648
        %v2957 = vxor.u32 %v2857, 2147483648
        %v2958 = vxor.u32 %v2862, 2147483648
        %v2959 = vxor.u32 %v2865, 2147483648
        %v2960 = vxor.u32 %v2870, 2147483648
        %v2961 = vxor.u32 %v2873, 2147483648
        %v2962 = vxor.u32 %v2878, 2147483648
        %v2963 = vxor.u32 %v2881, 2147483648
        %v2964 = vxor.u32 %v2886, 2147483648
        %v2965 = vxor.u32 %v2889, 2147483648
        %v2966 = vxor.u32 %v2894, 2147483648
        %v2967 = vxor.u32 %v2897, 2147483648
        %v2968 = vxor.u32 %v2902, 2147483648
        %v2969 = vxor.u32 %v2905, 2147483648
        %v2970 = vxor.u32 %v2910, 2147483648
        %v2971 = vxor.u32 %v2913, 2147483648
        %v2972 = vxor.u32 %v2918, 2147483648
        %v2973 = vxor.u32 %v2921, 2147483648
        %v2974 = vxor.u32 %v2926, 2147483648
        %v2975 = vxor.u32 %v2929, 2147483648
        %v2976 = vxor.u32 %v2934, 2147483648
        %v2977 = vxor.u32 %v2937, 2147483648
        %v2978 = vxor.u32 %v2942, 2147483648
        %v2979 = vxor.u32 %v2945, 2147483648
        %v2980 = vmul.f32 %v2948, 1.442695
        %v2981 = vpow.pop %v2980
        %v2982 = vmul.f32 %v2949, 1.442695
        %v2983 = vpow.pop %v2982
        %v2984 = vmul.f32 %v2950, 1.442695
        %v2985 = vpow.pop %v2984
        %v2986 = vmul.f32 %v2951, 1.442695
        %v2987 = vpow.pop %v2986
        %v2988 = vmul.f32 %v2952, 1.442695
        %v2989 = vpow.pop %v2988
        %v2990 = vmul.f32 %v2953, 1.442695
        %v2991 = vpow.pop %v2990
        %v2992 = vmul.f32 %v2954, 1.442695
        %v2993 = vpow.pop %v2992
        %v2994 = vmul.f32 %v2955, 1.442695
        %v2995 = vpow.pop %v2994
        %v2996 = vmul.f32 %v2956, 1.442695
        %v2997 = vpow.pop %v2996
        %v2998 = vmul.f32 %v2957, 1.442695
        %v2999 = vpow.pop %v2998
        %v3000 = vmul.f32 %v2958, 1.442695
        %v3001 = vpow.pop %v3000
        %v3002 = vmul.f32 %v2959, 1.442695
        %v3003 = vpow.pop %v3002
        %v3004 = vmul.f32 %v2960, 1.442695
        %v3005 = vpow.pop %v3004
        %v3006 = vmul.f32 %v2961, 1.442695
        %v3007 = vpow.pop %v3006
        %v3008 = vmul.f32 %v2962, 1.442695
        %v3009 = vpow.pop %v3008
        %v3010 = vmul.f32 %v2963, 1.442695
        %v3011 = vpow.pop %v3010
        %v3012 = vmul.f32 %v2964, 1.442695
        %v3013 = vpow.pop %v3012
        %v3014 = vmul.f32 %v2965, 1.442695
        %v3015 = vpow.pop %v3014
        %v3016 = vmul.f32 %v2966, 1.442695
        %v3017 = vpow.pop %v3016
        %v3018 = vmul.f32 %v2967, 1.442695
        %v3019 = vpow.pop %v3018
        %v3020 = vmul.f32 %v2968, 1.442695
        %v3021 = vpow.pop %v3020
        %v3022 = vmul.f32 %v2969, 1.442695
        %v3023 = vpow.pop %v3022
        %v3024 = vmul.f32 %v2970, 1.442695
        %v3025 = vpow.pop %v3024
        %v3026 = vmul.f32 %v2971, 1.442695
        %v3027 = vpow.pop %v3026
        %v3028 = vmul.f32 %v2972, 1.442695
        %v3029 = vpow.pop %v3028
        %v3030 = vmul.f32 %v2973, 1.442695
        %v3031 = vpow.pop %v3030
        %v3032 = vmul.f32 %v2974, 1.442695
        %v3033 = vpow.pop %v3032
        %v3034 = vmul.f32 %v2975, 1.442695
        %v3035 = vpow.pop %v3034
        %v3036 = vmul.f32 %v2976, 1.442695
        %v3037 = vpow.pop %v3036
        %v3038 = vmul.f32 %v2977, 1.442695
        %v3039 = vpow.pop %v3038
        %v3040 = vmul.f32 %v2978, 1.442695
        %v3041 = vpow.pop %v3040
        %v3042 = vmul.f32 %v2979, 1.442695
        %v3043 = vpow.pop %v3042
        %v3044 = vadd.f32 %v2981, 1.0
        %v3045 = vadd.f32 %v2983, 1.0
        %v3046 = vadd.f32 %v2985, 1.0
        %v3047 = vadd.f32 %v2987, 1.0
        %v3048 = vadd.f32 %v2989, 1.0
        %v3049 = vadd.f32 %v2991, 1.0
        %v3050 = vadd.f32 %v2993, 1.0
        %v3051 = vadd.f32 %v2995, 1.0
        %v3052 = vadd.f32 %v2997, 1.0
        %v3053 = vadd.f32 %v2999, 1.0
        %v3054 = vadd.f32 %v3001, 1.0
        %v3055 = vadd.f32 %v3003, 1.0
        %v3056 = vadd.f32 %v3005, 1.0
        %v3057 = vadd.f32 %v3007, 1.0
        %v3058 = vadd.f32 %v3009, 1.0
        %v3059 = vadd.f32 %v3011, 1.0
        %v3060 = vadd.f32 %v3013, 1.0
        %v3061 = vadd.f32 %v3015, 1.0
        %v3062 = vadd.f32 %v3017, 1.0
        %v3063 = vadd.f32 %v3019, 1.0
        %v3064 = vadd.f32 %v3021, 1.0
        %v3065 = vadd.f32 %v3023, 1.0
        %v3066 = vadd.f32 %v3025, 1.0
        %v3067 = vadd.f32 %v3027, 1.0
        %v3068 = vadd.f32 %v3029, 1.0
        %v3069 = vadd.f32 %v3031, 1.0
        %v3070 = vadd.f32 %v3033, 1.0
        %v3071 = vadd.f32 %v3035, 1.0
        %v3072 = vadd.f32 %v3037, 1.0
        %v3073 = vadd.f32 %v3039, 1.0
        %v3074 = vadd.f32 %v3041, 1.0
        %v3075 = vadd.f32 %v3043, 1.0
        %v3076 = vrcp.pop %v3044
        %v3077 = vmul.f32 1.0, %v3076
        %v3078 = vrcp.pop %v3045
        %v3079 = vmul.f32 1.0, %v3078
        %v3080 = vrcp.pop %v3046
        %v3081 = vmul.f32 1.0, %v3080
        %v3082 = vrcp.pop %v3047
        %v3083 = vmul.f32 1.0, %v3082
        %v3084 = vrcp.pop %v3048
        %v3085 = vmul.f32 1.0, %v3084
        %v3086 = vrcp.pop %v3049
        %v3087 = vmul.f32 1.0, %v3086
        %v3088 = vrcp.pop %v3050
        %v3089 = vmul.f32 1.0, %v3088
        %v3090 = vrcp.pop %v3051
        %v3091 = vmul.f32 1.0, %v3090
        %v3092 = vrcp.pop %v3052
        %v3093 = vmul.f32 1.0, %v3092
        %v3094 = vrcp.pop %v3053
        %v3095 = vmul.f32 1.0, %v3094
        %v3096 = vrcp.pop %v3054
        %v3097 = vmul.f32 1.0, %v3096
        %v3098 = vrcp.pop %v3055
        %v3099 = vmul.f32 1.0, %v3098
        %v3100 = vrcp.pop %v3056
        %v3101 = vmul.f32 1.0, %v3100
        %v3102 = vrcp.pop %v3057
        %v3103 = vmul.f32 1.0, %v3102
        %v3104 = vrcp.pop %v3058
        %v3105 = vmul.f32 1.0, %v3104
        %v3106 = vrcp.pop %v3059
        %v3107 = vmul.f32 1.0, %v3106
        %v3108 = vrcp.pop %v3060
        %v3109 = vmul.f32 1.0, %v3108
        %v3110 = vrcp.pop %v3061
        %v3111 = vmul.f32 1.0, %v3110
        %v3112 = vrcp.pop %v3062
        %v3113 = vmul.f32 1.0, %v3112
        %v3114 = vrcp.pop %v3063
        %v3115 = vmul.f32 1.0, %v3114
        %v3116 = vrcp.pop %v3064
        %v3117 = vmul.f32 1.0, %v3116
        %v3118 = vrcp.pop %v3065
        %v3119 = vmul.f32 1.0, %v3118
        %v3120 = vrcp.pop %v3066
        %v3121 = vmul.f32 1.0, %v3120
        %v3122 = vrcp.pop %v3067
        %v3123 = vmul.f32 1.0, %v3122
        %v3124 = vrcp.pop %v3068
        %v3125 = vmul.f32 1.0, %v3124
        %v3126 = vrcp.pop %v3069
        %v3127 = vmul.f32 1.0, %v3126
        %v3128 = vrcp.pop %v3070
        %v3129 = vmul.f32 1.0, %v3128
        %v3130 = vrcp.pop %v3071
        %v3131 = vmul.f32 1.0, %v3130
        %v3132 = vrcp.pop %v3072
        %v3133 = vmul.f32 1.0, %v3132
        %v3134 = vrcp.pop %v3073
        %v3135 = vmul.f32 1.0, %v3134
        %v3136 = vrcp.pop %v3074
        %v3137 = vmul.f32 1.0, %v3136
        %v3138 = vrcp.pop %v3075
        %v3139 = vmul.f32 1.0, %v3138
        %v3140 = vtanh.pop %v2822
        %v3141 = vtanh.pop %v2825
        %v3142 = vtanh.pop %v2830
        %v3143 = vtanh.pop %v2833
        %v3144 = vtanh.pop %v2838
        %v3145 = vtanh.pop %v2841
        %v3146 = vtanh.pop %v2846
        %v3147 = vtanh.pop %v2849
        %v3148 = vtanh.pop %v2854
        %v3149 = vtanh.pop %v2857
        %v3150 = vtanh.pop %v2862
        %v3151 = vtanh.pop %v2865
        %v3152 = vtanh.pop %v2870
        %v3153 = vtanh.pop %v2873
        %v3154 = vtanh.pop %v2878
        %v3155 = vtanh.pop %v2881
        %v3156 = vtanh.pop %v2886
        %v3157 = vtanh.pop %v2889
        %v3158 = vtanh.pop %v2894
        %v3159 = vtanh.pop %v2897
        %v3160 = vtanh.pop %v2902
        %v3161 = vtanh.pop %v2905
        %v3162 = vtanh.pop %v2910
        %v3163 = vtanh.pop %v2913
        %v3164 = vtanh.pop %v2918
        %v3165 = vtanh.pop %v2921
        %v3166 = vtanh.pop %v2926
        %v3167 = vtanh.pop %v2929
        %v3168 = vtanh.pop %v2934
        %v3169 = vtanh.pop %v2937
        %v3170 = vtanh.pop %v2942
        %v3171 = vtanh.pop %v2945
        %v3172 = vld [vmem:[%s273] sm:$0xff]
        %v3173 = vld [vmem:[%s273 + $0x8] sm:$0xff]
        %v3174 = vld [vmem:[%s273 + $0x10] sm:$0xff]
        %v3175 = vld [vmem:[%s273 + $0x18] sm:$0xff]
        %v3176 = vld [vmem:[%s273 + $0x20] sm:$0xff]
        %v3177 = vld [vmem:[%s273 + $0x28] sm:$0xff]
        %v3178 = vld [vmem:[%s273 + $0x30] sm:$0xff]
        %v3179 = vld [vmem:[%s273 + $0x38] sm:$0xff]
        %v3180 = vld [vmem:[%s273 + $0x40] sm:$0xff]
        %v3181 = vld [vmem:[%s273 + $0x48] sm:$0xff]
        %v3182 = vld [vmem:[%s273 + $0x50] sm:$0xff]
        %v3183 = vld [vmem:[%s273 + $0x58] sm:$0xff]
        %v3184 = vld [vmem:[%s273 + $0x60] sm:$0xff]
        %v3185 = vld [vmem:[%s273 + $0x68] sm:$0xff]
        %v3186 = vld [vmem:[%s273 + $0x70] sm:$0xff]
        %v3187 = vld [vmem:[%s273 + $0x78] sm:$0xff]
        %v3188 = vld [vmem:[%s273 + $0x80] sm:$0xff]
        %v3189 = vld [vmem:[%s273 + $0x88] sm:$0xff]
        %v3190 = vld [vmem:[%s273 + $0x90] sm:$0xff]
        %v3191 = vld [vmem:[%s273 + $0x98] sm:$0xff]
        %v3192 = vld [vmem:[%s273 + $0xa0] sm:$0xff]
        %v3193 = vld [vmem:[%s273 + $0xa8] sm:$0xff]
        %v3194 = vld [vmem:[%s273 + $0xb0] sm:$0xff]
        %v3195 = vld [vmem:[%s273 + $0xb8] sm:$0xff]
        %v3196 = vld [vmem:[%s273 + $0xc0] sm:$0xff]
        %v3197 = vld [vmem:[%s273 + $0xc8] sm:$0xff]
        %v3198 = vld [vmem:[%s273 + $0xd0] sm:$0xff]
        %v3199 = vld [vmem:[%s273 + $0xd8] sm:$0xff]
        %v3200 = vld [vmem:[%s273 + $0xe0] sm:$0xff]
        %v3201 = vld [vmem:[%s273 + $0xe8] sm:$0xff]
        %v3202 = vld [vmem:[%s273 + $0xf0] sm:$0xff]
        %v3203 = vld [vmem:[%s273 + $0xf8] sm:$0xff]
        %3236 = vrot.lane.b32.xlu0 %v3172, 32
        %v3237 = vpop.permute.xlu0 %3236
        %3238 = vrot.lane.b32.xlu0 %v3173, 32
        %v3239 = vpop.permute.xlu0 %3238
        %3240 = vrot.lane.b32.xlu0 %v3174, 32
        %v3241 = vpop.permute.xlu0 %3240
        %3242 = vrot.lane.b32.xlu0 %v3175, 32
        %v3243 = vpop.permute.xlu0 %3242
        %3244 = vrot.lane.b32.xlu0 %v3176, 32
        %v3245 = vpop.permute.xlu0 %3244
        %3246 = vrot.lane.b32.xlu0 %v3177, 32
        %v3247 = vpop.permute.xlu0 %3246
        %3248 = vrot.lane.b32.xlu0 %v3178, 32
        %v3249 = vpop.permute.xlu0 %3248
        %3250 = vrot.lane.b32.xlu0 %v3179, 32
        %v3251 = vpop.permute.xlu0 %3250
        %3252 = vrot.lane.b32.xlu0 %v3180, 32
        %v3253 = vpop.permute.xlu0 %3252
        %3254 = vrot.lane.b32.xlu0 %v3181, 32
        %v3255 = vpop.permute.xlu0 %3254
        %3256 = vrot.lane.b32.xlu0 %v3182, 32
        %v3257 = vpop.permute.xlu0 %3256
        %3258 = vrot.lane.b32.xlu0 %v3183, 32
        %v3259 = vpop.permute.xlu0 %3258
        %3260 = vrot.lane.b32.xlu0 %v3184, 32
        %v3261 = vpop.permute.xlu0 %3260
        %3262 = vrot.lane.b32.xlu0 %v3185, 32
        %v3263 = vpop.permute.xlu0 %3262
        %3264 = vrot.lane.b32.xlu0 %v3186, 32
        %v3265 = vpop.permute.xlu0 %3264
        %3266 = vrot.lane.b32.xlu0 %v3187, 32
        %v3267 = vpop.permute.xlu0 %3266
        %3268 = vrot.lane.b32.xlu0 %v3188, 32
        %v3269 = vpop.permute.xlu0 %3268
        %3270 = vrot.lane.b32.xlu0 %v3189, 32
        %v3271 = vpop.permute.xlu0 %3270
        %3272 = vrot.lane.b32.xlu0 %v3190, 32
        %v3273 = vpop.permute.xlu0 %3272
        %3274 = vrot.lane.b32.xlu0 %v3191, 32
        %v3275 = vpop.permute.xlu0 %3274
        %3276 = vrot.lane.b32.xlu0 %v3192, 32
        %v3277 = vpop.permute.xlu0 %3276
        %3278 = vrot.lane.b32.xlu0 %v3193, 32
        %v3279 = vpop.permute.xlu0 %3278
        %3280 = vrot.lane.b32.xlu0 %v3194, 32
        %v3281 = vpop.permute.xlu0 %3280
        %3282 = vrot.lane.b32.xlu0 %v3195, 32
        %v3283 = vpop.permute.xlu0 %3282
        %3284 = vrot.lane.b32.xlu0 %v3196, 32
        %v3285 = vpop.permute.xlu0 %3284
        %3286 = vrot.lane.b32.xlu0 %v3197, 32
        %v3287 = vpop.permute.xlu0 %3286
        %3288 = vrot.lane.b32.xlu0 %v3198, 32
        %v3289 = vpop.permute.xlu0 %3288
        %3290 = vrot.lane.b32.xlu0 %v3199, 32
        %v3291 = vpop.permute.xlu0 %3290
        %3292 = vrot.lane.b32.xlu0 %v3200, 32
        %v3293 = vpop.permute.xlu0 %3292
        %3294 = vrot.lane.b32.xlu0 %v3201, 32
        %v3295 = vpop.permute.xlu0 %3294
        %3296 = vrot.lane.b32.xlu0 %v3202, 32
        %v3297 = vpop.permute.xlu0 %3296
        %3298 = vrot.lane.b32.xlu0 %v3203, 32
        %v3299 = vpop.permute.xlu0 %3298
        %v3332 = vmul.f32 %v3077, %v3237
        %v3333 = vmul.f32 %v3079, %v3239
        %v3334 = vmul.f32 %v3081, %v3241
        %v3335 = vmul.f32 %v3083, %v3243
        %v3336 = vmul.f32 %v3085, %v3245
        %v3337 = vmul.f32 %v3087, %v3247
        %v3338 = vmul.f32 %v3089, %v3249
        %v3339 = vmul.f32 %v3091, %v3251
        %v3340 = vmul.f32 %v3093, %v3253
        %v3341 = vmul.f32 %v3095, %v3255
        %v3342 = vmul.f32 %v3097, %v3257
        %v3343 = vmul.f32 %v3099, %v3259
        %v3344 = vmul.f32 %v3101, %v3261
        %v3345 = vmul.f32 %v3103, %v3263
        %v3346 = vmul.f32 %v3105, %v3265
        %v3347 = vmul.f32 %v3107, %v3267
        %v3348 = vmul.f32 %v3109, %v3269
        %v3349 = vmul.f32 %v3111, %v3271
        %v3350 = vmul.f32 %v3113, %v3273
        %v3351 = vmul.f32 %v3115, %v3275
        %v3352 = vmul.f32 %v3117, %v3277
        %v3353 = vmul.f32 %v3119, %v3279
        %v3354 = vmul.f32 %v3121, %v3281
        %v3355 = vmul.f32 %v3123, %v3283
        %v3356 = vmul.f32 %v3125, %v3285
        %v3357 = vmul.f32 %v3127, %v3287
        %v3358 = vmul.f32 %v3129, %v3289
        %v3359 = vmul.f32 %v3131, %v3291
        %v3360 = vmul.f32 %v3133, %v3293
        %v3361 = vmul.f32 %v3135, %v3295
        %v3362 = vmul.f32 %v3137, %v3297
        %v3363 = vmul.f32 %v3139, %v3299
        %3396 = vrot.lane.b32.xlu0 %v3140, 32
        %v3397 = vpop.permute.xlu0 %3396
        %3398 = vrot.lane.b32.xlu0 %v3141, 32
        %v3399 = vpop.permute.xlu0 %3398
        %3400 = vrot.lane.b32.xlu0 %v3142, 32
        %v3401 = vpop.permute.xlu0 %3400
        %3402 = vrot.lane.b32.xlu0 %v3143, 32
        %v3403 = vpop.permute.xlu0 %3402
        %3404 = vrot.lane.b32.xlu0 %v3144, 32
        %v3405 = vpop.permute.xlu0 %3404
        %3406 = vrot.lane.b32.xlu0 %v3145, 32
        %v3407 = vpop.permute.xlu0 %3406
        %3408 = vrot.lane.b32.xlu0 %v3146, 32
        %v3409 = vpop.permute.xlu0 %3408
        %3410 = vrot.lane.b32.xlu0 %v3147, 32
        %v3411 = vpop.permute.xlu0 %3410
        %3412 = vrot.lane.b32.xlu0 %v3148, 32
        %v3413 = vpop.permute.xlu0 %3412
        %3414 = vrot.lane.b32.xlu0 %v3149, 32
        %v3415 = vpop.permute.xlu0 %3414
        %3416 = vrot.lane.b32.xlu0 %v3150, 32
        %v3417 = vpop.permute.xlu0 %3416
        %3418 = vrot.lane.b32.xlu0 %v3151, 32
        %v3419 = vpop.permute.xlu0 %3418
        %3420 = vrot.lane.b32.xlu0 %v3152, 32
        %v3421 = vpop.permute.xlu0 %3420
        %3422 = vrot.lane.b32.xlu0 %v3153, 32
        %v3423 = vpop.permute.xlu0 %3422
        %3424 = vrot.lane.b32.xlu0 %v3154, 32
        %v3425 = vpop.permute.xlu0 %3424
        %3426 = vrot.lane.b32.xlu0 %v3155, 32
        %v3427 = vpop.permute.xlu0 %3426
        %3428 = vrot.lane.b32.xlu0 %v3156, 32
        %v3429 = vpop.permute.xlu0 %3428
        %3430 = vrot.lane.b32.xlu0 %v3157, 32
        %v3431 = vpop.permute.xlu0 %3430
        %3432 = vrot.lane.b32.xlu0 %v3158, 32
        %v3433 = vpop.permute.xlu0 %3432
        %3434 = vrot.lane.b32.xlu0 %v3159, 32
        %v3435 = vpop.permute.xlu0 %3434
        %3436 = vrot.lane.b32.xlu0 %v3160, 32
        %v3437 = vpop.permute.xlu0 %3436
        %3438 = vrot.lane.b32.xlu0 %v3161, 32
        %v3439 = vpop.permute.xlu0 %3438
        %3440 = vrot.lane.b32.xlu0 %v3162, 32
        %v3441 = vpop.permute.xlu0 %3440
        %3442 = vrot.lane.b32.xlu0 %v3163, 32
        %v3443 = vpop.permute.xlu0 %3442
        %3444 = vrot.lane.b32.xlu0 %v3164, 32
        %v3445 = vpop.permute.xlu0 %3444
        %3446 = vrot.lane.b32.xlu0 %v3165, 32
        %v3447 = vpop.permute.xlu0 %3446
        %3448 = vrot.lane.b32.xlu0 %v3166, 32
        %v3449 = vpop.permute.xlu0 %3448
        %3450 = vrot.lane.b32.xlu0 %v3167, 32
        %v3451 = vpop.permute.xlu0 %3450
        %3452 = vrot.lane.b32.xlu0 %v3168, 32
        %v3453 = vpop.permute.xlu0 %3452
        %3454 = vrot.lane.b32.xlu0 %v3169, 32
        %v3455 = vpop.permute.xlu0 %3454
        %3456 = vrot.lane.b32.xlu0 %v3170, 32
        %v3457 = vpop.permute.xlu0 %3456
        %3458 = vrot.lane.b32.xlu0 %v3171, 32
        %v3459 = vpop.permute.xlu0 %3458
        %v3492 = vmul.f32 %v3077, %v3397
        %v3493 = vmul.f32 %v3079, %v3399
        %v3494 = vmul.f32 %v3081, %v3401
        %v3495 = vmul.f32 %v3083, %v3403
        %v3496 = vmul.f32 %v3085, %v3405
        %v3497 = vmul.f32 %v3087, %v3407
        %v3498 = vmul.f32 %v3089, %v3409
        %v3499 = vmul.f32 %v3091, %v3411
        %v3500 = vmul.f32 %v3093, %v3413
        %v3501 = vmul.f32 %v3095, %v3415
        %v3502 = vmul.f32 %v3097, %v3417
        %v3503 = vmul.f32 %v3099, %v3419
        %v3504 = vmul.f32 %v3101, %v3421
        %v3505 = vmul.f32 %v3103, %v3423
        %v3506 = vmul.f32 %v3105, %v3425
        %v3507 = vmul.f32 %v3107, %v3427
        %v3508 = vmul.f32 %v3109, %v3429
        %v3509 = vmul.f32 %v3111, %v3431
        %v3510 = vmul.f32 %v3113, %v3433
        %v3511 = vmul.f32 %v3115, %v3435
        %v3512 = vmul.f32 %v3117, %v3437
        %v3513 = vmul.f32 %v3119, %v3439
        %v3514 = vmul.f32 %v3121, %v3441
        %v3515 = vmul.f32 %v3123, %v3443
        %v3516 = vmul.f32 %v3125, %v3445
        %v3517 = vmul.f32 %v3127, %v3447
        %v3518 = vmul.f32 %v3129, %v3449
        %v3519 = vmul.f32 %v3131, %v3451
        %v3520 = vmul.f32 %v3133, %v3453
        %v3521 = vmul.f32 %v3135, %v3455
        %v3522 = vmul.f32 %v3137, %v3457
        %v3523 = vmul.f32 %v3139, %v3459
        %3556 = vrot.lane.b32.xlu0 %v3492, 32
        %v3557 = vpop.permute.xlu0 %3556
        %3558 = vrot.lane.b32.xlu0 %v3493, 32
        %v3559 = vpop.permute.xlu0 %3558
        %3560 = vrot.lane.b32.xlu0 %v3494, 32
        %v3561 = vpop.permute.xlu0 %3560
        %3562 = vrot.lane.b32.xlu0 %v3495, 32
        %v3563 = vpop.permute.xlu0 %3562
        %3564 = vrot.lane.b32.xlu0 %v3496, 32
        %v3565 = vpop.permute.xlu0 %3564
        %3566 = vrot.lane.b32.xlu0 %v3497, 32
        %v3567 = vpop.permute.xlu0 %3566
        %3568 = vrot.lane.b32.xlu0 %v3498, 32
        %v3569 = vpop.permute.xlu0 %3568
        %3570 = vrot.lane.b32.xlu0 %v3499, 32
        %v3571 = vpop.permute.xlu0 %3570
        %3572 = vrot.lane.b32.xlu0 %v3500, 32
        %v3573 = vpop.permute.xlu0 %3572
        %3574 = vrot.lane.b32.xlu0 %v3501, 32
        %v3575 = vpop.permute.xlu0 %3574
        %3576 = vrot.lane.b32.xlu0 %v3502, 32
        %v3577 = vpop.permute.xlu0 %3576
        %3578 = vrot.lane.b32.xlu0 %v3503, 32
        %v3579 = vpop.permute.xlu0 %3578
        %3580 = vrot.lane.b32.xlu0 %v3504, 32
        %v3581 = vpop.permute.xlu0 %3580
        %3582 = vrot.lane.b32.xlu0 %v3505, 32
        %v3583 = vpop.permute.xlu0 %3582
        %3584 = vrot.lane.b32.xlu0 %v3506, 32
        %v3585 = vpop.permute.xlu0 %3584
        %3586 = vrot.lane.b32.xlu0 %v3507, 32
        %v3587 = vpop.permute.xlu0 %3586
        %3588 = vrot.lane.b32.xlu0 %v3508, 32
        %v3589 = vpop.permute.xlu0 %3588
        %3590 = vrot.lane.b32.xlu0 %v3509, 32
        %v3591 = vpop.permute.xlu0 %3590
        %3592 = vrot.lane.b32.xlu0 %v3510, 32
        %v3593 = vpop.permute.xlu0 %3592
        %3594 = vrot.lane.b32.xlu0 %v3511, 32
        %v3595 = vpop.permute.xlu0 %3594
        %3596 = vrot.lane.b32.xlu0 %v3512, 32
        %v3597 = vpop.permute.xlu0 %3596
        %3598 = vrot.lane.b32.xlu0 %v3513, 32
        %v3599 = vpop.permute.xlu0 %3598
        %3600 = vrot.lane.b32.xlu0 %v3514, 32
        %v3601 = vpop.permute.xlu0 %3600
        %3602 = vrot.lane.b32.xlu0 %v3515, 32
        %v3603 = vpop.permute.xlu0 %3602
        %3604 = vrot.lane.b32.xlu0 %v3516, 32
        %v3605 = vpop.permute.xlu0 %3604
        %3606 = vrot.lane.b32.xlu0 %v3517, 32
        %v3607 = vpop.permute.xlu0 %3606
        %3608 = vrot.lane.b32.xlu0 %v3518, 32
        %v3609 = vpop.permute.xlu0 %3608
        %3610 = vrot.lane.b32.xlu0 %v3519, 32
        %v3611 = vpop.permute.xlu0 %3610
        %3612 = vrot.lane.b32.xlu0 %v3520, 32
        %v3613 = vpop.permute.xlu0 %3612
        %3614 = vrot.lane.b32.xlu0 %v3521, 32
        %v3615 = vpop.permute.xlu0 %3614
        %3616 = vrot.lane.b32.xlu0 %v3522, 32
        %v3617 = vpop.permute.xlu0 %3616
        %3618 = vrot.lane.b32.xlu0 %v3523, 32
        %v3619 = vpop.permute.xlu0 %3618
        %v3652 = vadd.f32 %v3332, %v3557
        %v3653 = vadd.f32 %v3333, %v3559
        %v3654 = vadd.f32 %v3334, %v3561
        %v3655 = vadd.f32 %v3335, %v3563
        %v3656 = vadd.f32 %v3336, %v3565
        %v3657 = vadd.f32 %v3337, %v3567
        %v3658 = vadd.f32 %v3338, %v3569
        %v3659 = vadd.f32 %v3339, %v3571
        %v3660 = vadd.f32 %v3340, %v3573
        %v3661 = vadd.f32 %v3341, %v3575
        %v3662 = vadd.f32 %v3342, %v3577
        %v3663 = vadd.f32 %v3343, %v3579
        %v3664 = vadd.f32 %v3344, %v3581
        %v3665 = vadd.f32 %v3345, %v3583
        %v3666 = vadd.f32 %v3346, %v3585
        %v3667 = vadd.f32 %v3347, %v3587
        %v3668 = vadd.f32 %v3348, %v3589
        %v3669 = vadd.f32 %v3349, %v3591
        %v3670 = vadd.f32 %v3350, %v3593
        %v3671 = vadd.f32 %v3351, %v3595
        %v3672 = vadd.f32 %v3352, %v3597
        %v3673 = vadd.f32 %v3353, %v3599
        %v3674 = vadd.f32 %v3354, %v3601
        %v3675 = vadd.f32 %v3355, %v3603
        %v3676 = vadd.f32 %v3356, %v3605
        %v3677 = vadd.f32 %v3357, %v3607
        %v3678 = vadd.f32 %v3358, %v3609
        %v3679 = vadd.f32 %v3359, %v3611
        %v3680 = vadd.f32 %v3360, %v3613
        %v3681 = vadd.f32 %v3361, %v3615
        %v3682 = vadd.f32 %v3362, %v3617
        %v3683 = vadd.f32 %v3363, %v3619
        %v3684 = vtanh.pop %v3652
        %v3685 = vtanh.pop %v3653
        %v3686 = vtanh.pop %v3654
        %v3687 = vtanh.pop %v3655
        %v3688 = vtanh.pop %v3656
        %v3689 = vtanh.pop %v3657
        %v3690 = vtanh.pop %v3658
        %v3691 = vtanh.pop %v3659
        %v3692 = vtanh.pop %v3660
        %v3693 = vtanh.pop %v3661
        %v3694 = vtanh.pop %v3662
        %v3695 = vtanh.pop %v3663
        %v3696 = vtanh.pop %v3664
        %v3697 = vtanh.pop %v3665
        %v3698 = vtanh.pop %v3666
        %v3699 = vtanh.pop %v3667
        %v3700 = vtanh.pop %v3668
        %v3701 = vtanh.pop %v3669
        %v3702 = vtanh.pop %v3670
        %v3703 = vtanh.pop %v3671
        %v3704 = vtanh.pop %v3672
        %v3705 = vtanh.pop %v3673
        %v3706 = vtanh.pop %v3674
        %v3707 = vtanh.pop %v3675
        %v3708 = vtanh.pop %v3676
        %v3709 = vtanh.pop %v3677
        %v3710 = vtanh.pop %v3678
        %v3711 = vtanh.pop %v3679
        %v3712 = vtanh.pop %v3680
        %v3713 = vtanh.pop %v3681
        %v3714 = vtanh.pop %v3682
        %v3715 = vtanh.pop %v3683
        %3748 = vrot.lane.b32.xlu0 %v3684, 32
        %v3749 = vpop.permute.xlu0 %3748
        %3750 = vrot.lane.b32.xlu0 %v3685, 32
        %v3751 = vpop.permute.xlu0 %3750
        %3752 = vrot.lane.b32.xlu0 %v3686, 32
        %v3753 = vpop.permute.xlu0 %3752
        %3754 = vrot.lane.b32.xlu0 %v3687, 32
        %v3755 = vpop.permute.xlu0 %3754
        %3756 = vrot.lane.b32.xlu0 %v3688, 32
        %v3757 = vpop.permute.xlu0 %3756
        %3758 = vrot.lane.b32.xlu0 %v3689, 32
        %v3759 = vpop.permute.xlu0 %3758
        %3760 = vrot.lane.b32.xlu0 %v3690, 32
        %v3761 = vpop.permute.xlu0 %3760
        %3762 = vrot.lane.b32.xlu0 %v3691, 32
        %v3763 = vpop.permute.xlu0 %3762
        %3764 = vrot.lane.b32.xlu0 %v3692, 32
        %v3765 = vpop.permute.xlu0 %3764
        %3766 = vrot.lane.b32.xlu0 %v3693, 32
        %v3767 = vpop.permute.xlu0 %3766
        %3768 = vrot.lane.b32.xlu0 %v3694, 32
        %v3769 = vpop.permute.xlu0 %3768
        %3770 = vrot.lane.b32.xlu0 %v3695, 32
        %v3771 = vpop.permute.xlu0 %3770
        %3772 = vrot.lane.b32.xlu0 %v3696, 32
        %v3773 = vpop.permute.xlu0 %3772
        %3774 = vrot.lane.b32.xlu0 %v3697, 32
        %v3775 = vpop.permute.xlu0 %3774
        %3776 = vrot.lane.b32.xlu0 %v3698, 32
        %v3777 = vpop.permute.xlu0 %3776
        %3778 = vrot.lane.b32.xlu0 %v3699, 32
        %v3779 = vpop.permute.xlu0 %3778
        %3780 = vrot.lane.b32.xlu0 %v3700, 32
        %v3781 = vpop.permute.xlu0 %3780
        %3782 = vrot.lane.b32.xlu0 %v3701, 32
        %v3783 = vpop.permute.xlu0 %3782
        %3784 = vrot.lane.b32.xlu0 %v3702, 32
        %v3785 = vpop.permute.xlu0 %3784
        %3786 = vrot.lane.b32.xlu0 %v3703, 32
        %v3787 = vpop.permute.xlu0 %3786
        %3788 = vrot.lane.b32.xlu0 %v3704, 32
        %v3789 = vpop.permute.xlu0 %3788
        %3790 = vrot.lane.b32.xlu0 %v3705, 32
        %v3791 = vpop.permute.xlu0 %3790
        %3792 = vrot.lane.b32.xlu0 %v3706, 32
        %v3793 = vpop.permute.xlu0 %3792
        %3794 = vrot.lane.b32.xlu0 %v3707, 32
        %v3795 = vpop.permute.xlu0 %3794
        %3796 = vrot.lane.b32.xlu0 %v3708, 32
        %v3797 = vpop.permute.xlu0 %3796
        %3798 = vrot.lane.b32.xlu0 %v3709, 32
        %v3799 = vpop.permute.xlu0 %3798
        %3800 = vrot.lane.b32.xlu0 %v3710, 32
        %v3801 = vpop.permute.xlu0 %3800
        %3802 = vrot.lane.b32.xlu0 %v3711, 32
        %v3803 = vpop.permute.xlu0 %3802
        %3804 = vrot.lane.b32.xlu0 %v3712, 32
        %v3805 = vpop.permute.xlu0 %3804
        %3806 = vrot.lane.b32.xlu0 %v3713, 32
        %v3807 = vpop.permute.xlu0 %3806
        %3808 = vrot.lane.b32.xlu0 %v3714, 32
        %v3809 = vpop.permute.xlu0 %3808
        %3810 = vrot.lane.b32.xlu0 %v3715, 32
        %v3811 = vpop.permute.xlu0 %3810
        %v3844 = vmul.f32 %v3077, %v3749
        %v3845 = vmul.f32 %v3079, %v3751
        %v3846 = vmul.f32 %v3081, %v3753
        %v3847 = vmul.f32 %v3083, %v3755
        %v3848 = vmul.f32 %v3085, %v3757
        %v3849 = vmul.f32 %v3087, %v3759
        %v3850 = vmul.f32 %v3089, %v3761
        %v3851 = vmul.f32 %v3091, %v3763
        %v3852 = vmul.f32 %v3093, %v3765
        %v3853 = vmul.f32 %v3095, %v3767
        %v3854 = vmul.f32 %v3097, %v3769
        %v3855 = vmul.f32 %v3099, %v3771
        %v3856 = vmul.f32 %v3101, %v3773
        %v3857 = vmul.f32 %v3103, %v3775
        %v3858 = vmul.f32 %v3105, %v3777
        %v3859 = vmul.f32 %v3107, %v3779
        %v3860 = vmul.f32 %v3109, %v3781
        %v3861 = vmul.f32 %v3111, %v3783
        %v3862 = vmul.f32 %v3113, %v3785
        %v3863 = vmul.f32 %v3115, %v3787
        %v3864 = vmul.f32 %v3117, %v3789
        %v3865 = vmul.f32 %v3119, %v3791
        %v3866 = vmul.f32 %v3121, %v3793
        %v3867 = vmul.f32 %v3123, %v3795
        %v3868 = vmul.f32 %v3125, %v3797
        %v3869 = vmul.f32 %v3127, %v3799
        %v3870 = vmul.f32 %v3129, %v3801
        %v3871 = vmul.f32 %v3131, %v3803
        %v3872 = vmul.f32 %v3133, %v3805
        %v3873 = vmul.f32 %v3135, %v3807
        %v3874 = vmul.f32 %v3137, %v3809
        %v3875 = vmul.f32 %v3139, %v3811
        %3908 = vrot.lane.b32.xlu0 %v3652, 96
        %v3909 = vpop.permute.xlu0 %3908
        %3910 = vrot.lane.b32.xlu0 %v3653, 96
        %v3911 = vpop.permute.xlu0 %3910
        %3912 = vrot.lane.b32.xlu0 %v3654, 96
        %v3913 = vpop.permute.xlu0 %3912
        %3914 = vrot.lane.b32.xlu0 %v3655, 96
        %v3915 = vpop.permute.xlu0 %3914
        %3916 = vrot.lane.b32.xlu0 %v3656, 96
        %v3917 = vpop.permute.xlu0 %3916
        %3918 = vrot.lane.b32.xlu0 %v3657, 96
        %v3919 = vpop.permute.xlu0 %3918
        %3920 = vrot.lane.b32.xlu0 %v3658, 96
        %v3921 = vpop.permute.xlu0 %3920
        %3922 = vrot.lane.b32.xlu0 %v3659, 96
        %v3923 = vpop.permute.xlu0 %3922
        %3924 = vrot.lane.b32.xlu0 %v3660, 96
        %v3925 = vpop.permute.xlu0 %3924
        %3926 = vrot.lane.b32.xlu0 %v3661, 96
        %v3927 = vpop.permute.xlu0 %3926
        %3928 = vrot.lane.b32.xlu0 %v3662, 96
        %v3929 = vpop.permute.xlu0 %3928
        %3930 = vrot.lane.b32.xlu0 %v3663, 96
        %v3931 = vpop.permute.xlu0 %3930
        %3932 = vrot.lane.b32.xlu0 %v3664, 96
        %v3933 = vpop.permute.xlu0 %3932
        %3934 = vrot.lane.b32.xlu0 %v3665, 96
        %v3935 = vpop.permute.xlu0 %3934
        %3936 = vrot.lane.b32.xlu0 %v3666, 96
        %v3937 = vpop.permute.xlu0 %3936
        %3938 = vrot.lane.b32.xlu0 %v3667, 96
        %v3939 = vpop.permute.xlu0 %3938
        %3940 = vrot.lane.b32.xlu0 %v3668, 96
        %v3941 = vpop.permute.xlu0 %3940
        %3942 = vrot.lane.b32.xlu0 %v3669, 96
        %v3943 = vpop.permute.xlu0 %3942
        %3944 = vrot.lane.b32.xlu0 %v3670, 96
        %v3945 = vpop.permute.xlu0 %3944
        %3946 = vrot.lane.b32.xlu0 %v3671, 96
        %v3947 = vpop.permute.xlu0 %3946
        %3948 = vrot.lane.b32.xlu0 %v3672, 96
        %v3949 = vpop.permute.xlu0 %3948
        %3950 = vrot.lane.b32.xlu0 %v3673, 96
        %v3951 = vpop.permute.xlu0 %3950
        %3952 = vrot.lane.b32.xlu0 %v3674, 96
        %v3953 = vpop.permute.xlu0 %3952
        %3954 = vrot.lane.b32.xlu0 %v3675, 96
        %v3955 = vpop.permute.xlu0 %3954
        %3956 = vrot.lane.b32.xlu0 %v3676, 96
        %v3957 = vpop.permute.xlu0 %3956
        %3958 = vrot.lane.b32.xlu0 %v3677, 96
        %v3959 = vpop.permute.xlu0 %3958
        %3960 = vrot.lane.b32.xlu0 %v3678, 96
        %v3961 = vpop.permute.xlu0 %3960
        %3962 = vrot.lane.b32.xlu0 %v3679, 96
        %v3963 = vpop.permute.xlu0 %3962
        %3964 = vrot.lane.b32.xlu0 %v3680, 96
        %v3965 = vpop.permute.xlu0 %3964
        %3966 = vrot.lane.b32.xlu0 %v3681, 96
        %v3967 = vpop.permute.xlu0 %3966
        %3968 = vrot.lane.b32.xlu0 %v3682, 96
        %v3969 = vpop.permute.xlu0 %3968
        %3970 = vrot.lane.b32.xlu0 %v3683, 96
        %v3971 = vpop.permute.xlu0 %3970
        %4004 = vst.msk [vmem:[%s258] sm:$0xff] %vm2008, %v3909
        %4005 = vst.msk [vmem:[%s258 + $0x8] sm:$0xff] %vm2008, %v3911
        %4006 = vst.msk [vmem:[%s258 + $0x10] sm:$0xff] %vm2008, %v3913
        %4007 = vst.msk [vmem:[%s258 + $0x18] sm:$0xff] %vm2008, %v3915
        %4008 = vst.msk [vmem:[%s258 + $0x20] sm:$0xff] %vm2008, %v3917
        %4009 = vst.msk [vmem:[%s258 + $0x28] sm:$0xff] %vm2008, %v3919
        %4010 = vst.msk [vmem:[%s258 + $0x30] sm:$0xff] %vm2008, %v3921
        %4011 = vst.msk [vmem:[%s258 + $0x38] sm:$0xff] %vm2008, %v3923
        %4012 = vst.msk [vmem:[%s258 + $0x40] sm:$0xff] %vm2008, %v3925
        %4013 = vst.msk [vmem:[%s258 + $0x48] sm:$0xff] %vm2008, %v3927
        %4014 = vst.msk [vmem:[%s258 + $0x50] sm:$0xff] %vm2008, %v3929
        %4015 = vst.msk [vmem:[%s258 + $0x58] sm:$0xff] %vm2008, %v3931
        %4016 = vst.msk [vmem:[%s258 + $0x60] sm:$0xff] %vm2008, %v3933
        %4017 = vst.msk [vmem:[%s258 + $0x68] sm:$0xff] %vm2008, %v3935
        %4018 = vst.msk [vmem:[%s258 + $0x70] sm:$0xff] %vm2008, %v3937
        %4019 = vst.msk [vmem:[%s258 + $0x78] sm:$0xff] %vm2008, %v3939
        %4020 = vst.msk [vmem:[%s258 + $0x80] sm:$0xff] %vm2008, %v3941
        %4021 = vst.msk [vmem:[%s258 + $0x88] sm:$0xff] %vm2008, %v3943
        %4022 = vst.msk [vmem:[%s258 + $0x90] sm:$0xff] %vm2008, %v3945
        %4023 = vst.msk [vmem:[%s258 + $0x98] sm:$0xff] %vm2008, %v3947
        %4024 = vst.msk [vmem:[%s258 + $0xa0] sm:$0xff] %vm2008, %v3949
        %4025 = vst.msk [vmem:[%s258 + $0xa8] sm:$0xff] %vm2008, %v3951
        %4026 = vst.msk [vmem:[%s258 + $0xb0] sm:$0xff] %vm2008, %v3953
        %4027 = vst.msk [vmem:[%s258 + $0xb8] sm:$0xff] %vm2008, %v3955
        %4028 = vst.msk [vmem:[%s258 + $0xc0] sm:$0xff] %vm2008, %v3957
        %4029 = vst.msk [vmem:[%s258 + $0xc8] sm:$0xff] %vm2008, %v3959
        %4030 = vst.msk [vmem:[%s258 + $0xd0] sm:$0xff] %vm2008, %v3961
        %4031 = vst.msk [vmem:[%s258 + $0xd8] sm:$0xff] %vm2008, %v3963
        %4032 = vst.msk [vmem:[%s258 + $0xe0] sm:$0xff] %vm2008, %v3965
        %4033 = vst.msk [vmem:[%s258 + $0xe8] sm:$0xff] %vm2008, %v3967
        %4034 = vst.msk [vmem:[%s258 + $0xf0] sm:$0xff] %vm2008, %v3969
        %4035 = vst.msk [vmem:[%s258 + $0xf8] sm:$0xff] %vm2008, %v3971
        %4068 = vrot.lane.b32.xlu0 %v3844, 64
        %v4069 = vpop.permute.xlu0 %4068
        %4070 = vrot.lane.b32.xlu0 %v3845, 64
        %v4071 = vpop.permute.xlu0 %4070
        %4072 = vrot.lane.b32.xlu0 %v3846, 64
        %v4073 = vpop.permute.xlu0 %4072
        %4074 = vrot.lane.b32.xlu0 %v3847, 64
        %v4075 = vpop.permute.xlu0 %4074
        %4076 = vrot.lane.b32.xlu0 %v3848, 64
        %v4077 = vpop.permute.xlu0 %4076
        %4078 = vrot.lane.b32.xlu0 %v3849, 64
        %v4079 = vpop.permute.xlu0 %4078
        %4080 = vrot.lane.b32.xlu0 %v3850, 64
        %v4081 = vpop.permute.xlu0 %4080
        %4082 = vrot.lane.b32.xlu0 %v3851, 64
        %v4083 = vpop.permute.xlu0 %4082
        %4084 = vrot.lane.b32.xlu0 %v3852, 64
        %v4085 = vpop.permute.xlu0 %4084
        %4086 = vrot.lane.b32.xlu0 %v3853, 64
        %v4087 = vpop.permute.xlu0 %4086
        %4088 = vrot.lane.b32.xlu0 %v3854, 64
        %v4089 = vpop.permute.xlu0 %4088
        %4090 = vrot.lane.b32.xlu0 %v3855, 64
        %v4091 = vpop.permute.xlu0 %4090
        %4092 = vrot.lane.b32.xlu0 %v3856, 64
        %v4093 = vpop.permute.xlu0 %4092
        %4094 = vrot.lane.b32.xlu0 %v3857, 64
        %v4095 = vpop.permute.xlu0 %4094
        %4096 = vrot.lane.b32.xlu0 %v3858, 64
        %v4097 = vpop.permute.xlu0 %4096
        %4098 = vrot.lane.b32.xlu0 %v3859, 64
        %v4099 = vpop.permute.xlu0 %4098
        %4100 = vrot.lane.b32.xlu0 %v3860, 64
        %v4101 = vpop.permute.xlu0 %4100
        %4102 = vrot.lane.b32.xlu0 %v3861, 64
        %v4103 = vpop.permute.xlu0 %4102
        %4104 = vrot.lane.b32.xlu0 %v3862, 64
        %v4105 = vpop.permute.xlu0 %4104
        %4106 = vrot.lane.b32.xlu0 %v3863, 64
        %v4107 = vpop.permute.xlu0 %4106
        %4108 = vrot.lane.b32.xlu0 %v3864, 64
        %v4109 = vpop.permute.xlu0 %4108
        %4110 = vrot.lane.b32.xlu0 %v3865, 64
        %v4111 = vpop.permute.xlu0 %4110
        %4112 = vrot.lane.b32.xlu0 %v3866, 64
        %v4113 = vpop.permute.xlu0 %4112
        %4114 = vrot.lane.b32.xlu0 %v3867, 64
        %v4115 = vpop.permute.xlu0 %4114
        %4116 = vrot.lane.b32.xlu0 %v3868, 64
        %v4117 = vpop.permute.xlu0 %4116
        %4118 = vrot.lane.b32.xlu0 %v3869, 64
        %v4119 = vpop.permute.xlu0 %4118
        %4120 = vrot.lane.b32.xlu0 %v3870, 64
        %v4121 = vpop.permute.xlu0 %4120
        %4122 = vrot.lane.b32.xlu0 %v3871, 64
        %v4123 = vpop.permute.xlu0 %4122
        %4124 = vrot.lane.b32.xlu0 %v3872, 64
        %v4125 = vpop.permute.xlu0 %4124
        %4126 = vrot.lane.b32.xlu0 %v3873, 64
        %v4127 = vpop.permute.xlu0 %4126
        %4128 = vrot.lane.b32.xlu0 %v3874, 64
        %v4129 = vpop.permute.xlu0 %4128
        %4130 = vrot.lane.b32.xlu0 %v3875, 64
        %v4131 = vpop.permute.xlu0 %4130
        %4164 = vst.msk [vmem:[%s251] sm:$0xff] %vm2008, %v4069
        %4165 = vst.msk [vmem:[%s251 + $0x8] sm:$0xff] %vm2008, %v4071
        %4166 = vst.msk [vmem:[%s251 + $0x10] sm:$0xff] %vm2008, %v4073
        %4167 = vst.msk [vmem:[%s251 + $0x18] sm:$0xff] %vm2008, %v4075
        %4168 = vst.msk [vmem:[%s251 + $0x20] sm:$0xff] %vm2008, %v4077
        %4169 = vst.msk [vmem:[%s251 + $0x28] sm:$0xff] %vm2008, %v4079
        %4170 = vst.msk [vmem:[%s251 + $0x30] sm:$0xff] %vm2008, %v4081
        %4171 = vst.msk [vmem:[%s251 + $0x38] sm:$0xff] %vm2008, %v4083
        %4172 = vst.msk [vmem:[%s251 + $0x40] sm:$0xff] %vm2008, %v4085
        %4173 = vst.msk [vmem:[%s251 + $0x48] sm:$0xff] %vm2008, %v4087
        %4174 = vst.msk [vmem:[%s251 + $0x50] sm:$0xff] %vm2008, %v4089
        %4175 = vst.msk [vmem:[%s251 + $0x58] sm:$0xff] %vm2008, %v4091
        %4176 = vst.msk [vmem:[%s251 + $0x60] sm:$0xff] %vm2008, %v4093
        %4177 = vst.msk [vmem:[%s251 + $0x68] sm:$0xff] %vm2008, %v4095
        %4178 = vst.msk [vmem:[%s251 + $0x70] sm:$0xff] %vm2008, %v4097
        %4179 = vst.msk [vmem:[%s251 + $0x78] sm:$0xff] %vm2008, %v4099
        %4180 = vst.msk [vmem:[%s251 + $0x80] sm:$0xff] %vm2008, %v4101
        %4181 = vst.msk [vmem:[%s251 + $0x88] sm:$0xff] %vm2008, %v4103
        %4182 = vst.msk [vmem:[%s251 + $0x90] sm:$0xff] %vm2008, %v4105
        %4183 = vst.msk [vmem:[%s251 + $0x98] sm:$0xff] %vm2008, %v4107
        %4184 = vst.msk [vmem:[%s251 + $0xa0] sm:$0xff] %vm2008, %v4109
        %4185 = vst.msk [vmem:[%s251 + $0xa8] sm:$0xff] %vm2008, %v4111
        %4186 = vst.msk [vmem:[%s251 + $0xb0] sm:$0xff] %vm2008, %v4113
        %4187 = vst.msk [vmem:[%s251 + $0xb8] sm:$0xff] %vm2008, %v4115
        %4188 = vst.msk [vmem:[%s251 + $0xc0] sm:$0xff] %vm2008, %v4117
        %4189 = vst.msk [vmem:[%s251 + $0xc8] sm:$0xff] %vm2008, %v4119
        %4190 = vst.msk [vmem:[%s251 + $0xd0] sm:$0xff] %vm2008, %v4121
        %4191 = vst.msk [vmem:[%s251 + $0xd8] sm:$0xff] %vm2008, %v4123
        %4192 = vst.msk [vmem:[%s251 + $0xe0] sm:$0xff] %vm2008, %v4125
        %4193 = vst.msk [vmem:[%s251 + $0xe8] sm:$0xff] %vm2008, %v4127
        %4194 = vst.msk [vmem:[%s251 + $0xf0] sm:$0xff] %vm2008, %v4129
        %4195 = vst.msk [vmem:[%s251 + $0xf8] sm:$0xff] %vm2008, %v4131
        %s4196 = sand.u32 %s130, 1
        %s4197 = scalar_lea.sflag [#allocation5], %s4196
        %s4198 = sand.u32 %s130, 1
        %s4199 = smul.addr %s4198, 256
        %s4200 = scalar_lea.vmem [#allocation4], %s4199
        %s4201 = sand.u32 %s156, 1
        %s4202 = scalar_lea.sflag [#allocation7], %s4201
        %s4203 = sand.u32 %s156, 1
        %s4204 = smul.addr %s4203, 256
        %s4205 = scalar_lea.vmem [#allocation6], %s4204
        // Predicated region
        $region37: #{conv_lstm_cell_pallas.1} parent=35 // pred_check
          %p4206 = pneg %p140
        $region38: #{conv_lstm_cell_pallas.1} parent=35 // pred_check_branch
          %4208 = sbr.rel (%p4206) target = $region40
        $region39: #{conv_lstm_cell_pallas.1} parent=35 // pred_region
          %s4210 = ssub.s32 4096, 4096
          %4211 = vsyncadd %s4197, %s4210
          %s4212 = smul.addr %s23, 32
          %s4213 = smul.addr %s4212, 128
          %s4214 = scalar_lea.hbm %s4, %s4213
          %s4215 = sshll.u32 %s4200, 4
          %s4216 = int_to_ptr.vmem [resolvable:$true] %s4215
          %4221 = dma.vmem_to_hbm [thread:$0]  %s4216, 4096, %s4214, %s4197, 128, 128, 8
        $region40: #{conv_lstm_cell_pallas.1} parent=35 // pred_fallthru
          _
        // Predicated region
        $region41: #{conv_lstm_cell_pallas.1} parent=35 // pred_check
          %p4222 = pneg %p166
        $region42: #{conv_lstm_cell_pallas.1} parent=35 // pred_check_branch
          %4224 = sbr.rel (%p4222) target = $region44
        $region43: #{conv_lstm_cell_pallas.1} parent=35 // pred_region
          %s4226 = ssub.s32 4096, 4096
          %4227 = vsyncadd %s4202, %s4226
          %s4228 = smul.addr %s23, 32
          %s4229 = smul.addr %s4228, 128
          %s4230 = scalar_lea.hbm %s5, %s4229
          %s4231 = sshll.u32 %s4205, 4
          %s4232 = int_to_ptr.vmem [resolvable:$true] %s4231
          %4237 = dma.vmem_to_hbm [thread:$0]  %s4232, 4096, %s4230, %s4202, 128, 128, 8
        $region44: #{conv_lstm_cell_pallas.1} parent=35 // pred_fallthru
          _
      $region36: #{conv_lstm_cell_pallas.1} parent=5 // pred_fallthru
        _
      %p4238 = scmp.le.s32.totalorder 2, %s18
      // Predicated region
      $region45: #{conv_lstm_cell_pallas.1} parent=5 // pred_check
        %p4239 = pneg %p4238
      $region46: #{conv_lstm_cell_pallas.1} parent=5 // pred_check_branch
        %4241 = sbr.rel (%p4239) target = $region48
      $region47: #{conv_lstm_cell_pallas.1} parent=5 // pred_region
        %s4242 = ssub.s32 %s18, 2
        // Predicated region
        $region49: #{conv_lstm_cell_pallas.1} parent=47 // pred_check
          %p4243 = pneg %p146
        $region50: #{conv_lstm_cell_pallas.1} parent=47 // pred_check_branch
          %4245 = sbr.rel (%p4243) target = $region52
        $region51: #{conv_lstm_cell_pallas.1} parent=47 // pred_region
          %s4246 = sand.u32 %s131, 1
          %s4247 = scalar_lea.sflag [#allocation5], %s4246
          %s4248 = sand.u32 %s131, 1
          %s4249 = smul.addr %s4248, 256
          %s4250 = scalar_lea.vmem [#allocation4], %s4249
          %4251 = dma.done %s4247, 4096
        $region52: #{conv_lstm_cell_pallas.1} parent=47 // pred_fallthru
          _
        // Predicated region
        $region53: #{conv_lstm_cell_pallas.1} parent=47 // pred_check
          %p4252 = pneg %p172
        $region54: #{conv_lstm_cell_pallas.1} parent=47 // pred_check_branch
          %4254 = sbr.rel (%p4252) target = $region56
        $region55: #{conv_lstm_cell_pallas.1} parent=47 // pred_region
          %s4255 = sand.u32 %s157, 1
          %s4256 = scalar_lea.sflag [#allocation7], %s4255
          %s4257 = sand.u32 %s157, 1
          %s4258 = smul.addr %s4257, 256
          %s4259 = scalar_lea.vmem [#allocation6], %s4258
          %4260 = dma.done %s4256, 4096
        $region56: #{conv_lstm_cell_pallas.1} parent=47 // pred_fallthru
          _
      $region48: #{conv_lstm_cell_pallas.1} parent=5 // pred_fallthru
        _
    $region6: #{conv_lstm_cell_pallas.1} parent=1 // loop_footer
      %s22 = sadd.s32 1, %s18
    $region7: #{conv_lstm_cell_pallas.1} parent=1 // loop_footer_branch
      %17 = sbr.rel target = $region3
    $region8: #{conv_lstm_cell_pallas.1} parent=1 // loop_exit
      _
    %4261 = vsyncpa [#allocation5], 1
    %s4262 = scalar_lea.sflag [#allocation5], 1
    %4263 = vsyncpa %s4262, 1
    %4264 = vsyncpa [#allocation7], 1
    %s4265 = scalar_lea.sflag [#allocation7], 1
    %4266 = vsyncpa %s4265, 1

</llo_original>
